<compile_context>
chip_gen: v7x
topology: tpu7x:2x2x1
jax: 0.10.0
libtpu: 0.0.40
codegen_flags: <defaults>
</compile_context>

<pallas_src>
import jax
import jax.numpy as jnp
from jax import lax
from jax.experimental import pallas as pl
from jax.experimental.pallas import tpu as pltpu


def _round_up(x, m):
    return (x + m - 1) // m * m


def _detect_v5():
    try:
        return "v5" in jax.devices()[0].device_kind.lower()
    except Exception:
        return False


_IS_V5 = _detect_v5()
_VMEM_LIMIT = 32 * 1024 * 1024   # well under v7x's 64 MiB physical VMEM


def _pick_tiles(m_pad, n_pad):
    """TM 512 (256 for tiny problems so several 'parallel' M tiles exist to feed
    both v7x TensorCores); TN 256 on v6e/v7x when Cout_pad allows, 128 on v5e."""
    tm = 512 if m_pad >= 2048 else 256
    tn = 128 if (_IS_V5 or n_pad % 256 != 0) else 256
    return tm, tn


# ----------------------------------------------------------------------------
# Pallas kernels / pallas_call wrappers
# ----------------------------------------------------------------------------
def _conv_matmul_stats(patches, w_mat, scale_k=None, shift_k=None, m_real=0):
    """Conv-as-matmul with fused per-tile BatchNorm statistics.

    patches: (M_pad, K_pad) bf16, w_mat: (K_pad, N_pad) bf16 (zero padded).
    If scale_k/shift_k (1, K_pad) f32 are given, the previous layer's BN affine
    + ReLU is applied to the patch tile in-kernel before the MXU matmul.

    Returns y (M_pad, N_pad) bf16 and stats (nM*8, N_pad) f32 where, per M tile,
    row 0 = sum(y_f32) and row 1 = sum(y_f32^2) over the tile's rows.
    """
    m_pad, k_pad = patches.shape
    _, n_pad = w_mat.shape
    tm, tn = _pick_tiles(m_pad, n_pad)
    nm, nn = m_pad // tm, n_pad // tn
    fused = scale_k is not None

    def kernel(*refs):
        if fused:
            p_ref, w_ref, sc_ref, sh_ref, y_ref, st_ref = refs
            # Previous layer's BN + ReLU fused into the patch load (f32 math,
            # bf16 MXU operand).
            p = jnp.maximum(p_ref[...].astype(jnp.float32) * sc_ref[...]
                            + sh_ref[...], 0.0).astype(jnp.bfloat16)
        else:
            p_ref, w_ref, y_ref, st_ref = refs
            p = p_ref[...]
        acc = jnp.dot(p, w_ref[...], preferred_element_type=jnp.float32)
        if fused:
            # Padded voxel rows must not pollute this layer's BN statistics
            # (the fused ReLU(shift) makes them non-zero otherwise).
            row = (pl.program_id(1) * tm
                   + lax.broadcasted_iota(jnp.int32, acc.shape, 0))
            acc = jnp.where(row < m_real, acc, 0.0)
        y_ref[...] = acc.astype(y_ref.dtype)
        st_ref[0:1, :] = jnp.sum(acc, axis=0, keepdims=True)
        st_ref[1:2, :] = jnp.sum(acc * acc, axis=0, keepdims=True)

    # Grid (nN, nM) with the M axis innermost: the (K_pad, TN) weight block keeps
    # a constant block index across consecutive steps -> stays VMEM-resident.
    in_specs = [
        pl.BlockSpec((tm, k_pad), lambda j, i: (i, 0)),
        pl.BlockSpec((k_pad, tn), lambda j, i: (0, j)),
    ]
    args = [patches, w_mat]
    if fused:
        in_specs += [pl.BlockSpec((1, k_pad), lambda j, i: (0, 0))] * 2
        args += [scale_k, shift_k]

    flops = 2 * m_pad * k_pad * n_pad
    bytes_accessed = (patches.size * 2 + w_mat.size * 2
                      + m_pad * n_pad * 2 + nm * 8 * n_pad * 4)

    y, stats = pl.pallas_call(
        kernel,
        grid=(nn, nm),
        in_specs=in_specs,
        out_specs=[
            pl.BlockSpec((tm, tn), lambda j, i: (i, j)),
            pl.BlockSpec((8, tn), lambda j, i: (i, j)),
        ],
        out_shape=[
            jax.ShapeDtypeStruct((m_pad, n_pad), jnp.bfloat16),
            jax.ShapeDtypeStruct((nm * 8, n_pad), jnp.float32),
        ],
        compiler_params=pltpu.CompilerParams(
            dimension_semantics=("parallel", "parallel"),
            vmem_limit_bytes=_VMEM_LIMIT,
        ),
        cost_estimate=pl.CostEstimate(flops=flops, transcendentals=0,
                                      bytes_accessed=bytes_accessed),
    )(*args)
    return y, stats


def _skip_bn_relu_kernel(y0_ref, yn_ref, s0_ref, b0_ref, sn_ref, bn_ref, o_ref):
    a0 = jnp.maximum(y0_ref[...].astype(jnp.float32) * s0_ref[...] + b0_ref[...], 0.0)
    an = jnp.maximum(yn_ref[...].astype(jnp.float32) * sn_ref[...] + bn_ref[...], 0.0)
    o_ref[...] = jnp.maximum(a0 + an, 0.0).astype(o_ref.dtype)


def _skip_bn_relu(y0, s0, b0, yn, sn, bn):
    """Final epilogue: ReLU( BNReLU(y0) + BNReLU(y_last) ), f32 output."""
    m_pad, n_pad = y0.shape
    rt = 1024 if (m_pad % 1024 == 0 and m_pad >= 4096) else 512
    row = pl.BlockSpec((rt, n_pad), lambda i: (i, 0))
    vec = pl.BlockSpec((1, n_pad), lambda i: (0, 0))
    return pl.pallas_call(
        _skip_bn_relu_kernel,
        grid=(m_pad // rt,),
        in_specs=[row, row, vec, vec, vec, vec],
        out_specs=row,
        out_shape=jax.ShapeDtypeStruct((m_pad, n_pad), jnp.float32),
        compiler_params=pltpu.CompilerParams(
            dimension_semantics=("parallel",),
            vmem_limit_bytes=_VMEM_LIMIT),
    )(y0, yn, s0, b0, sn, bn)


# ----------------------------------------------------------------------------
# Glue: patch extraction, BN folding, layer composition
# ----------------------------------------------------------------------------
def _space_to_depth_patches(x):
    """Non-overlapping 2x2x2 stride-2 im2col == pure space-to-depth permutation."""
    N, D, H, W, C = x.shape
    x = x.reshape(N, D // 2, 2, H // 2, 2, W // 2, 2, C)
    x = jnp.transpose(x, (0, 1, 3, 5, 2, 4, 6, 7))          # N,D2,H2,W2,kd,kh,kw,C
    return (x.reshape(N * (D // 2) * (H // 2) * (W // 2), 8 * C),
            (N, D // 2, H // 2, W // 2))


def _extract_patches(xp, ksize, stride):
    """xp: already spatially padded NDHWC -> (M, kd*kh*kw*C), offset-major, C fastest.

    TODO(synk): still materialized by XLA in HBM (~27x activation read blowup for
    the 3x3x3 convs); an in-kernel halo'd-window DMA conv would remove it.
    """
    N, D, H, W, C = xp.shape
    kd, kh, kw = ksize
    sd, sh, sw = stride
    Do = (D - kd) // sd + 1
    Ho = (H - kh) // sh + 1
    Wo = (W - kw) // sw + 1
    cols = []
    for i in range(kd):
        for j in range(kh):
            for k in range(kw):
                cols.append(xp[:, i:i + (Do - 1) * sd + 1:sd,
                                  j:j + (Ho - 1) * sh + 1:sh,
                                  k:k + (Wo - 1) * sw + 1:sw, :])
    patches = jnp.concatenate(cols, axis=-1)
    return patches.reshape(N * Do * Ho * Wo, kd * kh * kw * C), (N, Do, Ho, Wo)


def _pad_channel_const(y, v, pad):
    """Spatial zero-padding *in activation space*: pad the pre-BN tensor y with the
    per-channel value v_c = -shift_c/scale_c so ReLU(scale*v+shift) == 0 in-kernel."""
    N, D, H, W, C = y.shape
    big = jnp.broadcast_to(v.astype(y.dtype).reshape(1, 1, 1, 1, C),
                           (N, D + 2 * pad, H + 2 * pad, W + 2 * pad, C))
    return lax.dynamic_update_slice(big, y, (0, pad, pad, pad, 0))


def _fold_bn(stats, m_real, gamma, beta, n_pad, eps=1e-5):
    """Fold training-mode BatchNorm (batch mean, biased var) into scale/shift."""
    s = jnp.sum(stats[0::8, :], axis=0, keepdims=True)
    q = jnp.sum(stats[1::8, :], axis=0, keepdims=True)
    mean = s / m_real
    # TODO(synk): one-pass E[y^2]-E[y]^2 in f32 can cancel when |mean| >> std;
    # switch to shifted per-tile sums if tighter accuracy is ever required.
    var = jnp.maximum(q / m_real - mean * mean, 0.0)
    c = gamma.shape[0]
    gamma_p = jnp.pad(gamma.astype(jnp.float32), (0, n_pad - c),
                      constant_values=1.0).reshape(1, n_pad)
    beta_p = jnp.pad(beta.astype(jnp.float32), (0, n_pad - c)).reshape(1, n_pad)
    scale = gamma_p * lax.rsqrt(var + eps)
    shift = beta_p - mean * scale
    return scale, shift


def _conv_bn_layer(patches, w, gamma, beta, prev_act=None, eps=1e-5):
    """One Conv3d (+implicit bias cancellation) with fused batch-stat collection.

    patches: (M, K) bf16 unpadded; w: PyTorch layout [Cout, Cin, kd, kh, kw].
    prev_act: optional (scale, shift) of the *previous* layer, applied per input
    channel (+ReLU) to the patches inside the matmul kernel.
    Returns padded y (bf16), this layer's folded BN (scale, shift), and M.
    """
    M, K = patches.shape
    Cout, Cin = w.shape[0], w.shape[1]
    kvol = K // Cin
    m_pad = _round_up(M, 512)
    k_pad = _round_up(K, 128)
    n_pad = _round_up(Cout, 128)

    patches_p = jnp.pad(patches, ((0, m_pad - M), (0, k_pad - K)))
    # [Cout, Cin, kd, kh, kw] -> [kd, kh, kw, Cin, Cout] -> [K, Cout]
    w_mat = jnp.transpose(w, (2, 3, 4, 1, 0)).reshape(K, Cout).astype(jnp.bfloat16)
    w_mat = jnp.pad(w_mat, ((0, k_pad - K), (0, n_pad - Cout)))

    if prev_act is not None:
        sc_prev, sh_prev = prev_act
        # Patch K axis is (tap, channel) with channel fastest -> tile per-channel
        # BN scale/shift kvol times.  Padded K columns get (scale=1, shift=0) so
        # their fused activation stays exactly zero.
        sc_k = jnp.pad(jnp.tile(sc_prev[0, :Cin], kvol), (0, k_pad - K),
                       constant_values=1.0).reshape(1, k_pad)
        sh_k = jnp.pad(jnp.tile(sh_prev[0, :Cin], kvol),
                       (0, k_pad - K)).reshape(1, k_pad)
        y, stats = _conv_matmul_stats(patches_p, w_mat, sc_k, sh_k, m_real=M)
    else:
        y, stats = _conv_matmul_stats(patches_p, w_mat)

    scale, shift = _fold_bn(stats, M, gamma, beta, n_pad, eps)
    return y, scale, shift


@jax.jit
def down_block_forward(x_ncdhw, params):
    # NCDHW in/out (PyTorch convention); NDHWC + bf16 inside the kernels.
    x = jnp.transpose(x_ncdhw, (0, 2, 3, 4, 1)).astype(jnp.bfloat16)

    # ---- down conv (2x2x2, stride 2, pad 0): space-to-depth im2col.
    w, _b, g, be = params["down"]            # conv bias cancels exactly through BN
    p_down, (N, Do, Ho, Wo) = _space_to_depth_patches(x)
    y0, s0, b0 = _conv_bn_layer(p_down, w, g, be, prev_act=None)
    Cout = w.shape[0]
    m_real = N * Do * Ho * Wo

    # ---- residual block: num_convs x [Conv3x3x3 -> BN -> ReLU], ReLU(skip+out).
    # The previous layer's BN+ReLU is folded into the next conv's patch load, so
    # no intermediate activation tensor is ever materialized in HBM.
    y_prev, s_prev, b_prev = y0, s0, b0
    for (w, _b, g, be) in params["rblock"]:
        ndhwc = y_prev[:m_real, :Cout].reshape(N, Do, Ho, Wo, Cout)
        # Per-channel sentinel so the spatial padding is zero in activation space
        # (scale = gamma*rsqrt(var+eps) is non-zero for any non-degenerate gamma).
        v = -b_prev[0, :Cout] / s_prev[0, :Cout]
        padded = _pad_channel_const(ndhwc, v, 1)
        patches, _ = _extract_patches(padded, (3, 3, 3), (1, 1, 1))
        y_prev, s_prev, b_prev = _conv_bn_layer(
            patches, w, g, be, prev_act=(s_prev, b_prev))

    # ---- fused epilogue: ReLU( BNReLU(down) + BNReLU(last conv) ), f32 out.
    out = _skip_bn_relu(y0, s0, b0, y_prev, s_prev, b_prev)
    out = out[:m_real, :Cout].reshape(N, Do, Ho, Wo, Cout)
    return jnp.transpose(out, (0, 4, 1, 2, 3))


# ----------------------------------------------------------------------------
# Deterministic parameter init (shapes from DownBlock.__init__)
# ----------------------------------------------------------------------------
def init_down_block_params(key, in_channels, num_convs):
    out_c = in_channels * 2
    keys = jax.random.split(key, 1 + num_convs)

    def conv_bn_init(k, cin, cout, ks):
        kw, kb, kg, kbe = jax.random.split(k, 4)
        fan_in = cin * ks * ks * ks
        bound = 1.0 / float(fan_in) ** 0.5
        w = jax.random.uniform(kw, (cout, cin, ks, ks, ks), jnp.float32, -bound, bound)
        b = jax.random.uniform(kb, (cout,), jnp.float32, -bound, bound)
        gamma = 1.0 + 0.1 * jax.random.uniform(kg, (cout,), jnp.float32, -1.0, 1.0)
        beta = 0.1 * jax.random.uniform(kbe, (cout,), jnp.float32, -1.0, 1.0)
        return (w, b, gamma, beta)

    return {
        "down": conv_bn_init(keys[0], in_channels, out_c, 2),
        "rblock": [conv_bn_init(keys[1 + i], out_c, out_c, 3) for i in range(num_convs)],
    }


# ----------------------------------------------------------------------------
# Pure-JAX f32 reference (mirrors the PyTorch forward, including conv bias)
# ----------------------------------------------------------------------------
def _ref_conv3d(x, w, b, stride, padding):
    out = lax.conv_general_dilated(
        x, w, window_strides=stride, padding=[(padding, padding)] * 3,
        dimension_numbers=("NCDHW", "OIDHW", "NCDHW"))
    return out + b.reshape(1, -1, 1, 1, 1)


def _ref_bn_relu(x, gamma, beta, eps=1e-5):
    mean = x.mean(axis=(0, 2, 3, 4), keepdims=True)
    var = x.var(axis=(0, 2, 3, 4), keepdims=True)      # biased, as BN normalizes with
    y = (x - mean) / jnp.sqrt(var + eps)
    y = y * gamma.reshape(1, -1, 1, 1, 1) + beta.reshape(1, -1, 1, 1, 1)
    return jnp.maximum(y, 0.0)


def ref_forward(x, params):
    w, b, g, be = params["down"]
    y = _ref_bn_relu(_ref_conv3d(x, w, b, (2, 2, 2), 0), g, be)
    skip = y
    for (w, b, g, be) in params["rblock"]:
        y = _ref_bn_relu(_ref_conv3d(y, w, b, (1, 1, 1), 1), g, be)
    return jnp.maximum(skip + y, 0.0)


if __name__ == "__main__":
    key = jax.random.PRNGKey(0)
    k_in, k_param = jax.random.split(key)

    in_channels, num_convs = 4, 2
    x = jax.random.normal(k_in, (2, in_channels, 16, 16, 16), jnp.float32)
    params = init_down_block_params(k_param, in_channels, num_convs)

    out = jax.block_until_ready(down_block_forward(x, params))
    ref = jax.block_until_ready(ref_forward(x, params))

    assert out.shape == (2, 2 * in_channels, 8, 8, 8), out.shape
    # bf16 MXU operands + bf16 intermediate activations -> relaxed tolerance
    # relative to the all-f32 PyTorch module (intentional, per the perf review).
    if not jnp.allclose(out, ref, rtol=1e-1, atol=1e-1):
        err = float(jnp.max(jnp.abs(out - ref)))
        raise AssertionError(f"Pallas DownBlock mismatch vs JAX reference (max abs err {err})")
    print("KERNEL_OK")
</pallas_src>

<mosaic_0001>
module attributes {stable_mosaic.version = 11 : i64} {
  func.func @kernel(%arg0: i32, %arg1: i32, %arg2: memref<256x128xbf16, #tpu.memory_space<vmem>>, %arg3: memref<128x128xbf16, #tpu.memory_space<vmem>>, %arg4: memref<256x128xbf16, #tpu.memory_space<vmem>>, %arg5: memref<8x128xf32, #tpu.memory_space<vmem>>) attributes {dimension_semantics = [#tpu.dimension_semantics<parallel>, #tpu.dimension_semantics<parallel>], iteration_bounds = array<i64: 1, 4>, scalar_prefetch = 0 : i64, scratch_operands = 0 : i64, tpu.core_type = #tpu.core_type<tc>, window_params = [{transform_indices = @transform_0, window_bounds = array<i64: 256, 128>}, {transform_indices = @transform_1, window_bounds = array<i64: 128, 128>}, {transform_indices = @transform_2, window_bounds = array<i64: 256, 128>}, {transform_indices = @transform_3, window_bounds = array<i64: 8, 128>}]} {
    %c0 = arith.constant 0 : index
    %c0_0 = arith.constant 0 : index
    %0 = vector.load %arg2[%c0, %c0_0] : memref<256x128xbf16, #tpu.memory_space<vmem>>, vector<256x128xbf16>
    %c0_1 = arith.constant 0 : index
    %c0_2 = arith.constant 0 : index
    %1 = vector.load %arg3[%c0_1, %c0_2] : memref<128x128xbf16, #tpu.memory_space<vmem>>, vector<128x128xbf16>
    %cst = arith.constant dense<0.000000e+00> : vector<256x128xf32>
    %2 = tpu.matmul %0, %1, %cst {dimension_numbers = #tpu.dot_dimension_numbers<[1], [0], [0], [1], [0, 0, 1, 1], [], []>} : vector<256x128xbf16>, vector<128x128xbf16>, vector<256x128xf32> -> vector<256x128xf32>
    %3 = arith.truncf %2 : vector<256x128xf32> to vector<256x128xbf16>
    %c0_3 = arith.constant 0 : index
    %c0_4 = arith.constant 0 : index
    %4 = vector.load %arg4[%c0_3, %c0_4] : memref<256x128xbf16, #tpu.memory_space<vmem>>, vector<256x128xbf16>
    tpu.vector_store %arg4[%c0_3, %c0_4], %3 {strides = array<i32>} : memref<256x128xbf16, #tpu.memory_space<vmem>>, vector<256x128xbf16>,
    %cst_5 = arith.constant dense<0.000000e+00> : vector<128xf32>
    %5 = vector.multi_reduction <add>, %2, %cst_5 [0] : vector<256x128xf32> to vector<128xf32>
    %6 = vector.shape_cast %5 : vector<128xf32> to vector<1x128xf32>
    %c0_6 = arith.constant 0 : index
    %c0_7 = arith.constant 0 : index
    %7 = vector.load %arg5[%c0_6, %c0_7] : memref<8x128xf32, #tpu.memory_space<vmem>>, vector<1x128xf32>
    tpu.vector_store %arg5[%c0_6, %c0_7], %6 {strides = array<i32>} : memref<8x128xf32, #tpu.memory_space<vmem>>, vector<1x128xf32>,
    %8 = arith.mulf %2, %2 : vector<256x128xf32>
    %cst_8 = arith.constant dense<0.000000e+00> : vector<128xf32>
    %9 = vector.multi_reduction <add>, %8, %cst_8 [0] : vector<256x128xf32> to vector<128xf32>
    %10 = vector.shape_cast %9 : vector<128xf32> to vector<1x128xf32>
    %c1 = arith.constant 1 : index
    %c0_9 = arith.constant 0 : index
    %11 = vector.load %arg5[%c1, %c0_9] : memref<8x128xf32, #tpu.memory_space<vmem>>, vector<1x128xf32>
    tpu.vector_store %arg5[%c1, %c0_9], %10 {strides = array<i32>} : memref<8x128xf32, #tpu.memory_space<vmem>>, vector<1x128xf32>,
    return
  }
  func.func @transform_0(%arg0: i32, %arg1: i32) -> (i32, i32) {
    %c0_i32 = arith.constant 0 : i32
    %c0_i32_0 = arith.constant 0 : i32
    return %arg1, %c0_i32 : i32, i32
  }
  func.func @transform_1(%arg0: i32, %arg1: i32) -> (i32, i32) {
    %c0_i32 = arith.constant 0 : i32
    %c0_i32_0 = arith.constant 0 : i32
    return %c0_i32, %arg0 : i32, i32
  }
  func.func @transform_2(%arg0: i32, %arg1: i32) -> (i32, i32) {
    %c0_i32 = arith.constant 0 : i32
    return %arg1, %arg0 : i32, i32
  }
  func.func @transform_3(%arg0: i32, %arg1: i32) -> (i32, i32) {
    %c0_i32 = arith.constant 0 : i32
    return %arg1, %arg0 : i32, i32
  }
}

module attributes {stable_mosaic.version = 11 : i64} {
  func.func @kernel(%arg0: i32, %arg1: i32, %arg2: memref<256x256xbf16, #tpu.memory_space<vmem>>, %arg3: memref<256x128xbf16, #tpu.memory_space<vmem>>, %arg4: memref<1x256xf32, #tpu.memory_space<vmem>>, %arg5: memref<1x256xf32, #tpu.memory_space<vmem>>, %arg6: memref<256x128xbf16, #tpu.memory_space<vmem>>, %arg7: memref<8x128xf32, #tpu.memory_space<vmem>>) attributes {dimension_semantics = [#tpu.dimension_semantics<parallel>, #tpu.dimension_semantics<parallel>], iteration_bounds = array<i64: 1, 4>, scalar_prefetch = 0 : i64, scratch_operands = 0 : i64, tpu.core_type = #tpu.core_type<tc>, window_params = [{transform_indices = @transform_0, window_bounds = array<i64: 256, 256>}, {transform_indices = @transform_1, window_bounds = array<i64: 256, 128>}, {pipeline_mode = #tpu.pipeline_mode<synchronous>, transform_indices = @transform_2, window_bounds = array<i64: 1, 256>}, {pipeline_mode = #tpu.pipeline_mode<synchronous>, transform_indices = @transform_3, window_bounds = array<i64: 1, 256>}, {transform_indices = @transform_4, window_bounds = array<i64: 256, 128>}, {transform_indices = @transform_5, window_bounds = array<i64: 8, 128>}]} {
    %c0 = arith.constant 0 : index
    %c0_0 = arith.constant 0 : index
    %0 = vector.load %arg2[%c0, %c0_0] : memref<256x256xbf16, #tpu.memory_space<vmem>>, vector<256x256xbf16>
    %1 = arith.extf %0 : vector<256x256xbf16> to vector<256x256xf32>
    %c0_1 = arith.constant 0 : index
    %c0_2 = arith.constant 0 : index
    %2 = vector.load %arg4[%c0_1, %c0_2] : memref<1x256xf32, #tpu.memory_space<vmem>>, vector<1x256xf32>
    %3 = vector.broadcast %2 : vector<1x256xf32> to vector<256x256xf32>
    %4 = arith.mulf %1, %3 : vector<256x256xf32>
    %c0_3 = arith.constant 0 : index
    %c0_4 = arith.constant 0 : index
    %5 = vector.load %arg5[%c0_3, %c0_4] : memref<1x256xf32, #tpu.memory_space<vmem>>, vector<1x256xf32>
    %6 = vector.broadcast %5 : vector<1x256xf32> to vector<256x256xf32>
    %7 = arith.addf %4, %6 : vector<256x256xf32>
    %cst = arith.constant 0.000000e+00 : f32
    %8 = vector.broadcast %cst : f32 to vector<256x256xf32>
    %9 = arith.maximumf %7, %8 : vector<256x256xf32>
    %10 = arith.truncf %9 : vector<256x256xf32> to vector<256x256xbf16>
    %c0_5 = arith.constant 0 : index
    %c0_6 = arith.constant 0 : index
    %11 = vector.load %arg3[%c0_5, %c0_6] : memref<256x128xbf16, #tpu.memory_space<vmem>>, vector<256x128xbf16>
    %cst_7 = arith.constant dense<0.000000e+00> : vector<256x128xf32>
    %12 = tpu.matmul %10, %11, %cst_7 {dimension_numbers = #tpu.dot_dimension_numbers<[1], [0], [0], [1], [0, 0, 1, 1], [], []>} : vector<256x256xbf16>, vector<256x128xbf16>, vector<256x128xf32> -> vector<256x128xf32>
    %c256_i32 = arith.constant 256 : i32
    %13 = arith.muli %arg1, %c256_i32 : i32
    %14 = tpu.iota {dimensions = array<i32: 0>} : vector<256x128xi32>
    %15 = vector.broadcast %13 : i32 to vector<256x128xi32>
    %16 = arith.addi %15, %14 : vector<256x128xi32>
    %c1024_i32 = arith.constant 1024 : i32
    %17 = vector.broadcast %c1024_i32 : i32 to vector<256x128xi32>
    %18 = arith.cmpi slt, %16, %17 : vector<256x128xi32>
    %cst_8 = arith.constant 0.000000e+00 : f32
    %19 = vector.broadcast %cst_8 : f32 to vector<256x128xf32>
    %20 = arith.select %18, %12, %19 : vector<256x128xi1>, vector<256x128xf32>
    %21 = arith.truncf %20 : vector<256x128xf32> to vector<256x128xbf16>
    %c0_9 = arith.constant 0 : index
    %c0_10 = arith.constant 0 : index
    %22 = vector.load %arg6[%c0_9, %c0_10] : memref<256x128xbf16, #tpu.memory_space<vmem>>, vector<256x128xbf16>
    tpu.vector_store %arg6[%c0_9, %c0_10], %21 {strides = array<i32>} : memref<256x128xbf16, #tpu.memory_space<vmem>>, vector<256x128xbf16>,
    %cst_11 = arith.constant dense<0.000000e+00> : vector<128xf32>
    %23 = vector.multi_reduction <add>, %20, %cst_11 [0] : vector<256x128xf32> to vector<128xf32>
    %24 = vector.shape_cast %23 : vector<128xf32> to vector<1x128xf32>
    %c0_12 = arith.constant 0 : index
    %c0_13 = arith.constant 0 : index
    %25 = vector.load %arg7[%c0_12, %c0_13] : memref<8x128xf32, #tpu.memory_space<vmem>>, vector<1x128xf32>
    tpu.vector_store %arg7[%c0_12, %c0_13], %24 {strides = array<i32>} : memref<8x128xf32, #tpu.memory_space<vmem>>, vector<1x128xf32>,
    %26 = arith.mulf %20, %20 : vector<256x128xf32>
    %cst_14 = arith.constant dense<0.000000e+00> : vector<128xf32>
    %27 = vector.multi_reduction <add>, %26, %cst_14 [0] : vector<256x128xf32> to vector<128xf32>
    %28 = vector.shape_cast %27 : vector<128xf32> to vector<1x128xf32>
    %c1 = arith.constant 1 : index
    %c0_15 = arith.constant 0 : index
    %29 = vector.load %arg7[%c1, %c0_15] : memref<8x128xf32, #tpu.memory_space<vmem>>, vector<1x128xf32>
    tpu.vector_store %arg7[%c1, %c0_15], %28 {strides = array<i32>} : memref<8x128xf32, #tpu.memory_space<vmem>>, vector<1x128xf32>,
    return
  }
  func.func @transform_0(%arg0: i32, %arg1: i32) -> (i32, i32) {
    %c0_i32 = arith.constant 0 : i32
    %c0_i32_0 = arith.constant 0 : i32
    return %arg1, %c0_i32 : i32, i32
  }
  func.func @transform_1(%arg0: i32, %arg1: i32) -> (i32, i32) {
    %c0_i32 = arith.constant 0 : i32
    %c0_i32_0 = arith.constant 0 : i32
    return %c0_i32, %arg0 : i32, i32
  }
  func.func @transform_2(%arg0: i32, %arg1: i32) -> (i32, i32) {
    %c0_i32 = arith.constant 0 : i32
    %c0_i32_0 = arith.constant 0 : i32
    %c0_i32_1 = arith.constant 0 : i32
    return %c0_i32, %c0_i32_0 : i32, i32
  }
  func.func @transform_3(%arg0: i32, %arg1: i32) -> (i32, i32) {
    %c0_i32 = arith.constant 0 : i32
    %c0_i32_0 = arith.constant 0 : i32
    %c0_i32_1 = arith.constant 0 : i32
    return %c0_i32, %c0_i32_0 : i32, i32
  }
  func.func @transform_4(%arg0: i32, %arg1: i32) -> (i32, i32) {
    %c0_i32 = arith.constant 0 : i32
    return %arg1, %arg0 : i32, i32
  }
  func.func @transform_5(%arg0: i32, %arg1: i32) -> (i32, i32) {
    %c0_i32 = arith.constant 0 : i32
    return %arg1, %arg0 : i32, i32
  }
}

module attributes {stable_mosaic.version = 11 : i64} {
  func.func @_skip_bn_relu_kernel(%arg0: i32, %arg1: memref<512x128xbf16, #tpu.memory_space<vmem>>, %arg2: memref<512x128xbf16, #tpu.memory_space<vmem>>, %arg3: memref<1x128xf32, #tpu.memory_space<vmem>>, %arg4: memref<1x128xf32, #tpu.memory_space<vmem>>, %arg5: memref<1x128xf32, #tpu.memory_space<vmem>>, %arg6: memref<1x128xf32, #tpu.memory_space<vmem>>, %arg7: memref<512x128xf32, #tpu.memory_space<vmem>>) attributes {dimension_semantics = [#tpu.dimension_semantics<parallel>], iteration_bounds = array<i64: 2>, scalar_prefetch = 0 : i64, scratch_operands = 0 : i64, tpu.core_type = #tpu.core_type<tc>, window_params = [{transform_indices = @transform_0, window_bounds = array<i64: 512, 128>}, {transform_indices = @transform_1, window_bounds = array<i64: 512, 128>}, {pipeline_mode = #tpu.pipeline_mode<synchronous>, transform_indices = @transform_2, window_bounds = array<i64: 1, 128>}, {pipeline_mode = #tpu.pipeline_mode<synchronous>, transform_indices = @transform_3, window_bounds = array<i64: 1, 128>}, {pipeline_mode = #tpu.pipeline_mode<synchronous>, transform_indices = @transform_4, window_bounds = array<i64: 1, 128>}, {pipeline_mode = #tpu.pipeline_mode<synchronous>, transform_indices = @transform_5, window_bounds = array<i64: 1, 128>}, {transform_indices = @transform_6, window_bounds = array<i64: 512, 128>}]} {
    %c0 = arith.constant 0 : index
    %c0_0 = arith.constant 0 : index
    %0 = vector.load %arg1[%c0, %c0_0] : memref<512x128xbf16, #tpu.memory_space<vmem>>, vector<512x128xbf16>
    %1 = arith.extf %0 : vector<512x128xbf16> to vector<512x128xf32>
    %c0_1 = arith.constant 0 : index
    %c0_2 = arith.constant 0 : index
    %2 = vector.load %arg3[%c0_1, %c0_2] : memref<1x128xf32, #tpu.memory_space<vmem>>, vector<1x128xf32>
    %3 = vector.broadcast %2 : vector<1x128xf32> to vector<512x128xf32>
    %4 = arith.mulf %1, %3 : vector<512x128xf32>
    %c0_3 = arith.constant 0 : index
    %c0_4 = arith.constant 0 : index
    %5 = vector.load %arg4[%c0_3, %c0_4] : memref<1x128xf32, #tpu.memory_space<vmem>>, vector<1x128xf32>
    %6 = vector.broadcast %5 : vector<1x128xf32> to vector<512x128xf32>
    %7 = arith.addf %4, %6 : vector<512x128xf32>
    %cst = arith.constant 0.000000e+00 : f32
    %8 = vector.broadcast %cst : f32 to vector<512x128xf32>
    %9 = arith.maximumf %7, %8 : vector<512x128xf32>
    %c0_5 = arith.constant 0 : index
    %c0_6 = arith.constant 0 : index
    %10 = vector.load %arg2[%c0_5, %c0_6] : memref<512x128xbf16, #tpu.memory_space<vmem>>, vector<512x128xbf16>
    %11 = arith.extf %10 : vector<512x128xbf16> to vector<512x128xf32>
    %c0_7 = arith.constant 0 : index
    %c0_8 = arith.constant 0 : index
    %12 = vector.load %arg5[%c0_7, %c0_8] : memref<1x128xf32, #tpu.memory_space<vmem>>, vector<1x128xf32>
    %13 = vector.broadcast %12 : vector<1x128xf32> to vector<512x128xf32>
    %14 = arith.mulf %11, %13 : vector<512x128xf32>
    %c0_9 = arith.constant 0 : index
    %c0_10 = arith.constant 0 : index
    %15 = vector.load %arg6[%c0_9, %c0_10] : memref<1x128xf32, #tpu.memory_space<vmem>>, vector<1x128xf32>
    %16 = vector.broadcast %15 : vector<1x128xf32> to vector<512x128xf32>
    %17 = arith.addf %14, %16 : vector<512x128xf32>
    %cst_11 = arith.constant 0.000000e+00 : f32
    %18 = vector.broadcast %cst_11 : f32 to vector<512x128xf32>
    %19 = arith.maximumf %17, %18 : vector<512x128xf32>
    %20 = arith.addf %9, %19 : vector<512x128xf32>
    %cst_12 = arith.constant 0.000000e+00 : f32
    %21 = vector.broadcast %cst_12 : f32 to vector<512x128xf32>
    %22 = arith.maximumf %20, %21 : vector<512x128xf32>
    %c0_13 = arith.constant 0 : index
    %c0_14 = arith.constant 0 : index
    %23 = vector.load %arg7[%c0_13, %c0_14] : memref<512x128xf32, #tpu.memory_space<vmem>>, vector<512x128xf32>
    tpu.vector_store %arg7[%c0_13, %c0_14], %22 {strides = array<i32>} : memref<512x128xf32, #tpu.memory_space<vmem>>, vector<512x128xf32>,
    return
  }
  func.func @transform_0(%arg0: i32) -> (i32, i32) {
    %c0_i32 = arith.constant 0 : i32
    %c0_i32_0 = arith.constant 0 : i32
    return %arg0, %c0_i32 : i32, i32
  }
  func.func @transform_1(%arg0: i32) -> (i32, i32) {
    %c0_i32 = arith.constant 0 : i32
    %c0_i32_0 = arith.constant 0 : i32
    return %arg0, %c0_i32 : i32, i32
  }
  func.func @transform_2(%arg0: i32) -> (i32, i32) {
    %c0_i32 = arith.constant 0 : i32
    %c0_i32_0 = arith.constant 0 : i32
    %c0_i32_1 = arith.constant 0 : i32
    return %c0_i32, %c0_i32_0 : i32, i32
  }
  func.func @transform_3(%arg0: i32) -> (i32, i32) {
    %c0_i32 = arith.constant 0 : i32
    %c0_i32_0 = arith.constant 0 : i32
    %c0_i32_1 = arith.constant 0 : i32
    return %c0_i32, %c0_i32_0 : i32, i32
  }
  func.func @transform_4(%arg0: i32) -> (i32, i32) {
    %c0_i32 = arith.constant 0 : i32
    %c0_i32_0 = arith.constant 0 : i32
    %c0_i32_1 = arith.constant 0 : i32
    return %c0_i32, %c0_i32_0 : i32, i32
  }
  func.func @transform_5(%arg0: i32) -> (i32, i32) {
    %c0_i32 = arith.constant 0 : i32
    %c0_i32_0 = arith.constant 0 : i32
    %c0_i32_1 = arith.constant 0 : i32
    return %c0_i32, %c0_i32_0 : i32, i32
  }
  func.func @transform_6(%arg0: i32) -> (i32, i32) {
    %c0_i32 = arith.constant 0 : i32
    %c0_i32_0 = arith.constant 0 : i32
    return %arg0, %c0_i32 : i32, i32
  }
}

</mosaic_0001>

<llo_original>
// kernel: down_block_forward.4
$region0: #{down_block_forward.4}
  #allocation0 [shape = 'u32[]', space=smem, size = 0x4, offset = 0x4, fixed_abs, tag = 'smem constant byte address 0x4 - core index']
  #allocation1 [shape = 'u32[144,128]{1,0:T(1,128)}', space=vmem, size = 0x12000, scoped, tag = 'internal scratch']
  %s0 = inlined_call_operand.vmem [shape: bf16[1024,128], index: 0, kind: input, shape index: {}]
  %s1 = inlined_call_operand.vmem [shape: bf16[128,128], index: 1, kind: input, shape index: {}]
  %s2 = inlined_call_operand.vmem [shape: bf16[1024,128], index: 2, kind: output, shape index: {0}]
  %s3 = inlined_call_operand.vmem [shape: f32[32,128], index: 3, kind: output, shape index: {1}]
  %4 = xla_tuple %s2, %s3
  %s5 = sld [smem:[#allocation0]]
  $region49: #{down_block_forward.4} parent=0
    _
  %s7 = ssub.s32 1, %s5
  %s8 = scalar_select 0, %s7, %s5
  loop: start=0, step=1, limit=6
  $region2: #{down_block_forward.4} parent=0 // loop_pre_header
    _
  $region3: #{down_block_forward.4} parent=0 // loop_header
    %s10 = sphi 0, %s14
    %p11 = scmp.ge.s32.totalorder %s10, 6
    %s17 = sphi 0, %s29
    %s18 = sphi 0, %s25
    %s19 = sphi 0, %s17
    %s20 = sphi 0, %s18
    %s21 = sphi 0, %s19
    %s22 = sphi 0, %s20
    %s32 = sphi 0, %s34
    %s35 = sphi 0, %s32
    %s36 = sphi 0, %s35
    %s52 = sphi 0, %s36
    %s58 = sphi 0, %s60
    %s61 = sphi 0, %s58
    %s62 = sphi 0, %s61
    %s78 = sphi 0, %s62
    %s86 = sphi 0, %s88
    %s89 = sphi 0, %s86
    %s90 = sphi 0, %s89
    %s106 = sphi 0, %s90
    %s114 = sphi 0, %s116
    %s117 = sphi 0, %s114
    %s118 = sphi 0, %s117
    %s134 = sphi 0, %s118
  $region4: #{down_block_forward.4} parent=0 // loop_header_branch
    %13 = sbr.rel (%p11) target = $region8
  $region5: #{down_block_forward.4} parent=0 // loop_body
    %s15 = ssub.s32 %s10, 1
    %s16 = ssub.s32 %s10, 2
    %s23 = sadd.s32 1, %s18
    %p24 = scmp.ge.s32.totalorder %s23, 4
    %s25 = scalar_select %p24, 0, %s23
    %s26 = sadd.s32 1, %s17
    %s27 = scalar_select %p24, %s26, %s17
    %p28 = scmp.ge.s32.totalorder %s27, 1
    %s29 = scalar_select %p28, 0, %s27
    %s30 = ssub.s32 %s18, %s25
    %p31 = scmp.eq.s32.totalorder %s30, 0
    %s33 = sadd.s32 %s32, 1
    %s34 = scalar_select %p31, %s32, %s33
    %p37 = pneg %p31
    %p38 = scmp.eq.s32.totalorder %s10, 3
    %p39 = por %p37, %p38
    %p40 = scmp.ne.s32.totalorder %s32, %s35
    %p41 = scmp.eq.s32.totalorder %s10, 0
    %p42 = por %p40, %p41
    %p43 = scmp.ne.s32.totalorder %s32, %s35
    %p44 = scmp.eq.s32.totalorder %s15, 3
    %p45 = por %p43, %p44
    %p46 = scmp.ne.s32.totalorder %s35, %s36
    %p47 = scmp.eq.s32.totalorder %s15, 0
    %p48 = por %p46, %p47
    %p49 = scmp.ne.s32.totalorder %s35, %s36
    %p50 = scmp.eq.s32.totalorder %s16, 3
    %p51 = por %p49, %p50
    %p53 = scmp.ne.s32.totalorder %s36, %s52
    %p54 = scmp.eq.s32.totalorder %s16, 0
    %p55 = por %p53, %p54
    %s56 = ssub.s32 %s17, %s29
    %p57 = scmp.eq.s32.totalorder %s56, 0
    %s59 = sadd.s32 %s58, 1
    %s60 = scalar_select %p57, %s58, %s59
    %p63 = pneg %p57
    %p64 = scmp.eq.s32.totalorder %s10, 3
    %p65 = por %p63, %p64
    %p66 = scmp.ne.s32.totalorder %s58, %s61
    %p67 = scmp.eq.s32.totalorder %s10, 0
    %p68 = por %p66, %p67
    %p69 = scmp.ne.s32.totalorder %s58, %s61
    %p70 = scmp.eq.s32.totalorder %s15, 3
    %p71 = por %p69, %p70
    %p72 = scmp.ne.s32.totalorder %s61, %s62
    %p73 = scmp.eq.s32.totalorder %s15, 0
    %p74 = por %p72, %p73
    %p75 = scmp.ne.s32.totalorder %s61, %s62
    %p76 = scmp.eq.s32.totalorder %s16, 3
    %p77 = por %p75, %p76
    %p79 = scmp.ne.s32.totalorder %s62, %s78
    %p80 = scmp.eq.s32.totalorder %s16, 0
    %p81 = por %p79, %p80
    %s82 = ssub.s32 %s18, %s25
    %s83 = ssub.s32 %s17, %s29
    %s84 = sor.u32 %s82, %s83
    %p85 = scmp.eq.s32.totalorder %s84, 0
    %s87 = sadd.s32 %s86, 1
    %s88 = scalar_select %p85, %s86, %s87
    %p91 = pneg %p85
    %p92 = scmp.eq.s32.totalorder %s10, 3
    %p93 = por %p91, %p92
    %p94 = scmp.ne.s32.totalorder %s86, %s89
    %p95 = scmp.eq.s32.totalorder %s10, 0
    %p96 = por %p94, %p95
    %p97 = scmp.ne.s32.totalorder %s86, %s89
    %p98 = scmp.eq.s32.totalorder %s15, 3
    %p99 = por %p97, %p98
    %p100 = scmp.ne.s32.totalorder %s89, %s90
    %p101 = scmp.eq.s32.totalorder %s15, 0
    %p102 = por %p100, %p101
    %p103 = scmp.ne.s32.totalorder %s89, %s90
    %p104 = scmp.eq.s32.totalorder %s16, 3
    %p105 = por %p103, %p104
    %p107 = scmp.ne.s32.totalorder %s90, %s106
    %p108 = scmp.eq.s32.totalorder %s16, 0
    %p109 = por %p107, %p108
    %s110 = ssub.s32 %s18, %s25
    %s111 = ssub.s32 %s17, %s29
    %s112 = sor.u32 %s110, %s111
    %p113 = scmp.eq.s32.totalorder %s112, 0
    %s115 = sadd.s32 %s114, 1
    %s116 = scalar_select %p113, %s114, %s115
    %p119 = pneg %p113
    %p120 = scmp.eq.s32.totalorder %s10, 3
    %p121 = por %p119, %p120
    %p122 = scmp.ne.s32.totalorder %s114, %s117
    %p123 = scmp.eq.s32.totalorder %s10, 0
    %p124 = por %p122, %p123
    %p125 = scmp.ne.s32.totalorder %s114, %s117
    %p126 = scmp.eq.s32.totalorder %s15, 3
    %p127 = por %p125, %p126
    %p128 = scmp.ne.s32.totalorder %s117, %s118
    %p129 = scmp.eq.s32.totalorder %s15, 0
    %p130 = por %p128, %p129
    %p131 = scmp.ne.s32.totalorder %s117, %s118
    %p132 = scmp.eq.s32.totalorder %s16, 3
    %p133 = por %p131, %p132
    %p135 = scmp.ne.s32.totalorder %s118, %s134
    %p136 = scmp.eq.s32.totalorder %s16, 0
    %p137 = por %p135, %p136
    %p138 = scmp.le.s32.totalorder 1, %s10
    %p139 = scmp.lt.s32.totalorder %s10, 5
    %p140 = pnand %p138, %p139
    %p141 = pneg %p140
    // Predicated region
    $region9: #{down_block_forward.4} parent=5 // pred_check
      _
    $region10: #{down_block_forward.4} parent=5 // pred_check_branch
      %143 = sbr.rel (%p140) target = $region12
    $region11: #{down_block_forward.4} parent=5 // pred_region
      %s144 = ssub.s32 %s10, 1
      // Predicated region
      $region13: #{down_block_forward.4} parent=11 // pred_check
        %p145 = pneg %p74
      $region14: #{down_block_forward.4} parent=11 // pred_check_branch
        %147 = sbr.rel (%p145) target = $region16
      $region15: #{down_block_forward.4} parent=11 // pred_region
        %p148 = scmp.lt.s32.totalorder %s19, 0
        %s149 = scalar_select %p148, %s19, 0
        %s150 = smul.addr %s149, 4
        %s151 = scalar_lea.vmem %s1, %s150
      $region16: #{down_block_forward.4} parent=11 // pred_fallthru
        _
    $region12: #{down_block_forward.4} parent=5 // pred_fallthru
      _
    %p152 = scmp.lt.s32.totalorder %s10, 4
    // Predicated region
    $region17: #{down_block_forward.4} parent=5 // pred_check
      %p153 = pneg %p152
    $region18: #{down_block_forward.4} parent=5 // pred_check_branch
      %155 = sbr.rel (%p153) target = $region20
    $region19: #{down_block_forward.4} parent=5 // pred_region
      // Predicated region
      $region21: #{down_block_forward.4} parent=19 // pred_check
        %p156 = pneg %p42
      $region22: #{down_block_forward.4} parent=19 // pred_check_branch
        %158 = sbr.rel (%p156) target = $region24
      $region23: #{down_block_forward.4} parent=19 // pred_region
        %s159 = smul.u32 32, %s18
        %p160 = scmp.lt.s32.totalorder %s159, 127
        %s161 = scalar_select %p160, %s159, 127
        %s162 = smul.addr %s161, 4
        %s163 = scalar_lea.vmem %s0, %s162
        %s164 = smul.u32 32, %s18
      $region24: #{down_block_forward.4} parent=19 // pred_fallthru
        _
    $region20: #{down_block_forward.4} parent=5 // pred_fallthru
      _
    %p165 = scmp.le.s32.totalorder 1, %s10
    %p166 = scmp.lt.s32.totalorder %s10, 5
    %p167 = pnand %p165, %p166
    %p168 = pneg %p167
    // Predicated region
    $region25: #{down_block_forward.4} parent=5 // pred_check
      _
    $region26: #{down_block_forward.4} parent=5 // pred_check_branch
      %170 = sbr.rel (%p167) target = $region28
    $region27: #{down_block_forward.4} parent=5 // pred_region
      %s171 = ssub.s32 %s10, 1
      %s172 = smul.u32 32, %s20
      %p173 = scmp.lt.s32.totalorder %s172, 127
      %s174 = scalar_select %p173, %s172, 127
      %s175 = smul.addr %s174, 4
      %s176 = scalar_lea.vmem %s0, %s175
      %p177 = pneg %p48
      %p178 = pneg %p45
      %p179 = scmp.lt.s32.totalorder %s19, 0
      %s180 = scalar_select %p179, %s19, 0
      %s181 = smul.addr %s180, 4
      %s182 = scalar_lea.vmem %s1, %s181
      %p183 = pneg %p74
      %p184 = pneg %p71
      %p185 = pneg %p102
      %p186 = pneg %p99
      %s187 = smul.u32 32, %s20
      %p188 = scmp.lt.s32.totalorder %s187, 127
      %s189 = scalar_select %p188, %s187, 127
      %p190 = scmp.lt.s32.totalorder %s19, 0
      %s191 = scalar_select %p190, %s19, 0
      %s192 = sadd.s32 %s191, %s189
      %s193 = smul.addr %s192, 4
      %s194 = scalar_lea.vmem %s2, %s193
      %p195 = pneg %p130
      %p196 = pneg %p127
      %p197 = scmp.lt.s32.totalorder %s20, 3
      %s198 = scalar_select %p197, %s20, 3
      %p199 = scmp.lt.s32.totalorder %s19, 0
      %s200 = scalar_select %p199, %s19, 0
      %s201 = sadd.s32 %s200, %s198
      %s202 = smul.addr %s201, 8
      %s203 = scalar_lea.vmem %s3, %s202
      %s204 = smul.u32 32, %s20
      %p205 = scmp.lt.s32.totalorder %s204, 127
      %s206 = scalar_select %p205, %s204, 127
      %s207 = smul.addr %s206, 4
      %s208 = scalar_lea.vmem %s0, %s207
      %s209 = smul.u32 32, %s20
      %p210 = scmp.lt.s32.totalorder %s19, 0
      %s211 = scalar_select %p210, %s19, 0
      %s212 = smul.addr %s211, 4
      %s213 = scalar_lea.vmem %s1, %s212
      %s214 = smul.u32 32, %s20
      %p215 = scmp.lt.s32.totalorder %s214, 127
      %s216 = scalar_select %p215, %s214, 127
      %p217 = scmp.lt.s32.totalorder %s19, 0
      %s218 = scalar_select %p217, %s19, 0
      %s219 = sadd.s32 %s218, %s216
      %s220 = smul.addr %s219, 4
      %s221 = scalar_lea.vmem %s2, %s220
      %s222 = smul.u32 32, %s20
      %p223 = scmp.lt.s32.totalorder %s20, 3
      %s224 = scalar_select %p223, %s20, 3
      %p225 = scmp.lt.s32.totalorder %s19, 0
      %s226 = scalar_select %p225, %s19, 0
      %s227 = sadd.s32 %s226, %s224
      %s228 = smul.addr %s227, 8
      %s229 = scalar_lea.vmem %s3, %s228
      %v231 = vld [vmem:[%s208] sm:$0xf]
      %v232 = vld [vmem:[%s208 + $0x4] sm:$0xf]
      %v233 = vld [vmem:[%s208 + $0x8] sm:$0xf]
      %v234 = vld [vmem:[%s208 + $0xc] sm:$0xf]
      %v235 = vld [vmem:[%s208 + $0x10] sm:$0xf]
      %v236 = vld [vmem:[%s208 + $0x14] sm:$0xf]
      %v237 = vld [vmem:[%s208 + $0x18] sm:$0xf]
      %v238 = vld [vmem:[%s208 + $0x1c] sm:$0xf]
      %v239 = vld [vmem:[%s208 + $0x20] sm:$0xf]
      %v240 = vld [vmem:[%s208 + $0x24] sm:$0xf]
      %v241 = vld [vmem:[%s208 + $0x28] sm:$0xf]
      %v242 = vld [vmem:[%s208 + $0x2c] sm:$0xf]
      %v243 = vld [vmem:[%s208 + $0x30] sm:$0xf]
      %v244 = vld [vmem:[%s208 + $0x34] sm:$0xf]
      %v245 = vld [vmem:[%s208 + $0x38] sm:$0xf]
      %v246 = vld [vmem:[%s208 + $0x3c] sm:$0xf]
      %v247 = vld [vmem:[%s208 + $0x40] sm:$0xf]
      %v248 = vld [vmem:[%s208 + $0x44] sm:$0xf]
      %v249 = vld [vmem:[%s208 + $0x48] sm:$0xf]
      %v250 = vld [vmem:[%s208 + $0x4c] sm:$0xf]
      %v251 = vld [vmem:[%s208 + $0x50] sm:$0xf]
      %v252 = vld [vmem:[%s208 + $0x54] sm:$0xf]
      %v253 = vld [vmem:[%s208 + $0x58] sm:$0xf]
      %v254 = vld [vmem:[%s208 + $0x5c] sm:$0xf]
      %v255 = vld [vmem:[%s208 + $0x60] sm:$0xf]
      %v256 = vld [vmem:[%s208 + $0x64] sm:$0xf]
      %v257 = vld [vmem:[%s208 + $0x68] sm:$0xf]
      %v258 = vld [vmem:[%s208 + $0x6c] sm:$0xf]
      %v259 = vld [vmem:[%s208 + $0x70] sm:$0xf]
      %v260 = vld [vmem:[%s208 + $0x74] sm:$0xf]
      %v261 = vld [vmem:[%s208 + $0x78] sm:$0xf]
      %v262 = vld [vmem:[%s208 + $0x7c] sm:$0xf]
      %v263 = vld [vmem:[%s213] sm:$0xf]
      %v264 = vld [vmem:[%s213 + $0x4] sm:$0xf]
      %v265 = vld [vmem:[%s213 + $0x8] sm:$0xf]
      %v266 = vld [vmem:[%s213 + $0xc] sm:$0xf]
      %v267 = vld [vmem:[%s213 + $0x10] sm:$0xf]
      %v268 = vld [vmem:[%s213 + $0x14] sm:$0xf]
      %v269 = vld [vmem:[%s213 + $0x18] sm:$0xf]
      %v270 = vld [vmem:[%s213 + $0x1c] sm:$0xf]
      %v271 = vld [vmem:[%s213 + $0x20] sm:$0xf]
      %v272 = vld [vmem:[%s213 + $0x24] sm:$0xf]
      %v273 = vld [vmem:[%s213 + $0x28] sm:$0xf]
      %v274 = vld [vmem:[%s213 + $0x2c] sm:$0xf]
      %v275 = vld [vmem:[%s213 + $0x30] sm:$0xf]
      %v276 = vld [vmem:[%s213 + $0x34] sm:$0xf]
      %v277 = vld [vmem:[%s213 + $0x38] sm:$0xf]
      %v278 = vld [vmem:[%s213 + $0x3c] sm:$0xf]
      %v311 = vunpack.c.l.b16 %v231
      %v312 = vunpack.c.l.b16 %v232
      %v313 = vunpack.c.l.b16 %v233
      %v314 = vunpack.c.l.b16 %v234
      %v315 = vunpack.c.l.b16 %v235
      %v316 = vunpack.c.l.b16 %v236
      %v317 = vunpack.c.l.b16 %v237
      %v318 = vunpack.c.l.b16 %v238
      %v319 = vunpack.c.l.b16 %v239
      %v320 = vunpack.c.l.b16 %v240
      %v321 = vunpack.c.l.b16 %v241
      %v322 = vunpack.c.l.b16 %v242
      %v323 = vunpack.c.l.b16 %v243
      %v324 = vunpack.c.l.b16 %v244
      %v325 = vunpack.c.l.b16 %v245
      %v326 = vunpack.c.l.b16 %v246
      %v327 = vunpack.c.l.b16 %v247
      %v328 = vunpack.c.l.b16 %v248
      %v329 = vunpack.c.l.b16 %v249
      %v330 = vunpack.c.l.b16 %v250
      %v331 = vunpack.c.l.b16 %v251
      %v332 = vunpack.c.l.b16 %v252
      %v333 = vunpack.c.l.b16 %v253
      %v334 = vunpack.c.l.b16 %v254
      %v335 = vunpack.c.l.b16 %v255
      %v336 = vunpack.c.l.b16 %v256
      %v337 = vunpack.c.l.b16 %v257
      %v338 = vunpack.c.l.b16 %v258
      %v339 = vunpack.c.l.b16 %v259
      %v340 = vunpack.c.l.b16 %v260
      %v341 = vunpack.c.l.b16 %v261
      %v342 = vunpack.c.l.b16 %v262
      %v343 = vpack.c.b16 %v312, %v311
      %v344 = vpack.c.b16 %v314, %v313
      %v345 = vpack.c.b16 %v316, %v315
      %v346 = vpack.c.b16 %v318, %v317
      %v347 = vpack.c.b16 %v320, %v319
      %v348 = vpack.c.b16 %v322, %v321
      %v349 = vpack.c.b16 %v324, %v323
      %v350 = vpack.c.b16 %v326, %v325
      %v351 = vpack.c.b16 %v328, %v327
      %v352 = vpack.c.b16 %v330, %v329
      %v353 = vpack.c.b16 %v332, %v331
      %v354 = vpack.c.b16 %v334, %v333
      %v355 = vpack.c.b16 %v336, %v335
      %v356 = vpack.c.b16 %v338, %v337
      %v357 = vpack.c.b16 %v340, %v339
      %v358 = vpack.c.b16 %v342, %v341
      %v391 = vunpack.c.l.b16 %v263
      %v392 = vunpack.c.l.b16 %v264
      %v393 = vunpack.c.l.b16 %v265
      %v394 = vunpack.c.l.b16 %v266
      %v395 = vunpack.c.l.b16 %v267
      %v396 = vunpack.c.l.b16 %v268
      %v397 = vunpack.c.l.b16 %v269
      %v398 = vunpack.c.l.b16 %v270
      %v399 = vunpack.c.l.b16 %v271
      %v400 = vunpack.c.l.b16 %v272
      %v401 = vunpack.c.l.b16 %v273
      %v402 = vunpack.c.l.b16 %v274
      %v403 = vunpack.c.l.b16 %v275
      %v404 = vunpack.c.l.b16 %v276
      %v405 = vunpack.c.l.b16 %v277
      %v406 = vunpack.c.l.b16 %v278
      %v407 = vpack.c.b16 %v392, %v391
      %v408 = vpack.c.b16 %v394, %v393
      %v409 = vpack.c.b16 %v396, %v395
      %v410 = vpack.c.b16 %v398, %v397
      %v411 = vpack.c.b16 %v400, %v399
      %v412 = vpack.c.b16 %v402, %v401
      %v413 = vpack.c.b16 %v404, %v403
      %v414 = vpack.c.b16 %v406, %v405
      %423 = vmatprep.subr.bf16.mxu0 0
      %424 = vmatpush1.bf16.msra.mxu0 %v407
      %425 = vmatprep.subr.bf16.mxu0 0
      %426 = vmatpush1.bf16.msra.mxu0 %v408
      %427 = vmatprep.subr.bf16.mxu0 0
      %428 = vmatpush1.bf16.msra.mxu0 %v409
      %429 = vmatprep.subr.bf16.mxu0 0
      %430 = vmatpush1.bf16.msra.mxu0 %v410
      %431 = vmatprep.subr.bf16.mxu0 0
      %432 = vmatpush1.bf16.msra.mxu0 %v411
      %433 = vmatprep.subr.bf16.mxu0 0
      %434 = vmatpush1.bf16.msra.mxu0 %v412
      %435 = vmatprep.subr.bf16.mxu0 0
      %436 = vmatpush1.bf16.msra.mxu0 %v413
      %437 = vmatprep.subr.bf16.mxu0 0
      %438 = vmatpush1.bf16.msra.mxu0 %v414
      %439 = vmatprep.subr.bf16.mxu0 0
      %440 = vmatpush1.bf16.msra.mxu0 0
      %441 = vmatprep.subr.bf16.mxu0 0
      %442 = vmatpush1.bf16.msra.mxu0 0
      %443 = vmatprep.subr.bf16.mxu0 0
      %444 = vmatpush1.bf16.msra.mxu0 0
      %445 = vmatprep.subr.bf16.mxu0 0
      %446 = vmatpush1.bf16.msra.mxu0 0
      %447 = vmatprep.subr.bf16.mxu0 0
      %448 = vmatpush1.bf16.msra.mxu0 0
      %449 = vmatprep.subr.bf16.mxu0 0
      %450 = vmatpush1.bf16.msra.mxu0 0
      %451 = vmatprep.subr.bf16.mxu0 0
      %452 = vmatpush1.bf16.msra.mxu0 0
      %453 = vmatprep.subr.bf16.mxu0 0
      %454 = vmatpush1.bf16.msra.mxu0 0
      %455 = vmatprep.mubr.bf16.mxu0 0
      %456 = vmatmul.mubr.bf16.gmra.mrb[0].mxu0 %v343
      %v457 = vpop.f32.mrb[0].mxu0
      %v458 = vadd.f32 0.0, %v457
      %v459 = vpop.f32.mrb[0].mxu0
      %v460 = vpop.f32.mrb[0].mxu0
      %v461 = vadd.f32 0.0, %v460
      %v462 = vpop.f32.mrb[0].mxu0
      %463 = vmatprep.mubr.bf16.mxu0 0
      %464 = vmatmul.mubr.bf16.gmra.mrb[0].mxu0 %v344
      %v465 = vpop.f32.mrb[0].mxu0
      %v466 = vadd.f32 0.0, %v465
      %v467 = vpop.f32.mrb[0].mxu0
      %v468 = vpop.f32.mrb[0].mxu0
      %v469 = vadd.f32 0.0, %v468
      %v470 = vpop.f32.mrb[0].mxu0
      %471 = vmatprep.mubr.bf16.mxu0 0
      %472 = vmatmul.mubr.bf16.gmra.mrb[0].mxu0 %v345
      %v473 = vpop.f32.mrb[0].mxu0
      %v474 = vadd.f32 0.0, %v473
      %v475 = vpop.f32.mrb[0].mxu0
      %v476 = vpop.f32.mrb[0].mxu0
      %v477 = vadd.f32 0.0, %v476
      %v478 = vpop.f32.mrb[0].mxu0
      %479 = vmatprep.mubr.bf16.mxu0 0
      %480 = vmatmul.mubr.bf16.gmra.mrb[0].mxu0 %v346
      %v481 = vpop.f32.mrb[0].mxu0
      %v482 = vadd.f32 0.0, %v481
      %v483 = vpop.f32.mrb[0].mxu0
      %v484 = vpop.f32.mrb[0].mxu0
      %v485 = vadd.f32 0.0, %v484
      %v486 = vpop.f32.mrb[0].mxu0
      %487 = vmatprep.mubr.bf16.mxu0 0
      %488 = vmatmul.mubr.bf16.gmra.mrb[0].mxu0 %v347
      %v489 = vpop.f32.mrb[0].mxu0
      %v490 = vadd.f32 0.0, %v489
      %v491 = vpop.f32.mrb[0].mxu0
      %v492 = vpop.f32.mrb[0].mxu0
      %v493 = vadd.f32 0.0, %v492
      %v494 = vpop.f32.mrb[0].mxu0
      %495 = vmatprep.mubr.bf16.mxu0 0
      %496 = vmatmul.mubr.bf16.gmra.mrb[0].mxu0 %v348
      %v497 = vpop.f32.mrb[0].mxu0
      %v498 = vadd.f32 0.0, %v497
      %v499 = vpop.f32.mrb[0].mxu0
      %v500 = vpop.f32.mrb[0].mxu0
      %v501 = vadd.f32 0.0, %v500
      %v502 = vpop.f32.mrb[0].mxu0
      %503 = vmatprep.mubr.bf16.mxu0 0
      %504 = vmatmul.mubr.bf16.gmra.mrb[0].mxu0 %v349
      %v505 = vpop.f32.mrb[0].mxu0
      %v506 = vadd.f32 0.0, %v505
      %v507 = vpop.f32.mrb[0].mxu0
      %v508 = vpop.f32.mrb[0].mxu0
      %v509 = vadd.f32 0.0, %v508
      %v510 = vpop.f32.mrb[0].mxu0
      %511 = vmatprep.mubr.bf16.mxu0 0
      %512 = vmatmul.mubr.bf16.gmra.mrb[0].mxu0 %v350
      %v513 = vpop.f32.mrb[0].mxu0
      %v514 = vadd.f32 0.0, %v513
      %v515 = vpop.f32.mrb[0].mxu0
      %v516 = vpop.f32.mrb[0].mxu0
      %v517 = vadd.f32 0.0, %v516
      %v518 = vpop.f32.mrb[0].mxu0
      %519 = vmatprep.mubr.bf16.mxu0 0
      %520 = vmatmul.mubr.bf16.gmra.mrb[0].mxu0 %v351
      %v521 = vpop.f32.mrb[0].mxu0
      %v522 = vadd.f32 0.0, %v521
      %v523 = vpop.f32.mrb[0].mxu0
      %v524 = vpop.f32.mrb[0].mxu0
      %v525 = vadd.f32 0.0, %v524
      %v526 = vpop.f32.mrb[0].mxu0
      %527 = vmatprep.mubr.bf16.mxu0 0
      %528 = vmatmul.mubr.bf16.gmra.mrb[0].mxu0 %v352
      %v529 = vpop.f32.mrb[0].mxu0
      %v530 = vadd.f32 0.0, %v529
      %v531 = vpop.f32.mrb[0].mxu0
      %v532 = vpop.f32.mrb[0].mxu0
      %v533 = vadd.f32 0.0, %v532
      %v534 = vpop.f32.mrb[0].mxu0
      %535 = vmatprep.mubr.bf16.mxu0 0
      %536 = vmatmul.mubr.bf16.gmra.mrb[0].mxu0 %v353
      %v537 = vpop.f32.mrb[0].mxu0
      %v538 = vadd.f32 0.0, %v537
      %v539 = vpop.f32.mrb[0].mxu0
      %v540 = vpop.f32.mrb[0].mxu0
      %v541 = vadd.f32 0.0, %v540
      %v542 = vpop.f32.mrb[0].mxu0
      %543 = vmatprep.mubr.bf16.mxu0 0
      %544 = vmatmul.mubr.bf16.gmra.mrb[0].mxu0 %v354
      %v545 = vpop.f32.mrb[0].mxu0
      %v546 = vadd.f32 0.0, %v545
      %v547 = vpop.f32.mrb[0].mxu0
      %v548 = vpop.f32.mrb[0].mxu0
      %v549 = vadd.f32 0.0, %v548
      %v550 = vpop.f32.mrb[0].mxu0
      %551 = vmatprep.mubr.bf16.mxu0 0
      %552 = vmatmul.mubr.bf16.gmra.mrb[0].mxu0 %v355
      %v553 = vpop.f32.mrb[0].mxu0
      %v554 = vadd.f32 0.0, %v553
      %v555 = vpop.f32.mrb[0].mxu0
      %v556 = vpop.f32.mrb[0].mxu0
      %v557 = vadd.f32 0.0, %v556
      %v558 = vpop.f32.mrb[0].mxu0
      %559 = vmatprep.mubr.bf16.mxu0 0
      %560 = vmatmul.mubr.bf16.gmra.mrb[0].mxu0 %v356
      %v561 = vpop.f32.mrb[0].mxu0
      %v562 = vadd.f32 0.0, %v561
      %v563 = vpop.f32.mrb[0].mxu0
      %v564 = vpop.f32.mrb[0].mxu0
      %v565 = vadd.f32 0.0, %v564
      %v566 = vpop.f32.mrb[0].mxu0
      %567 = vmatprep.mubr.bf16.mxu0 0
      %568 = vmatmul.mubr.bf16.gmra.mrb[0].mxu0 %v357
      %v569 = vpop.f32.mrb[0].mxu0
      %v570 = vadd.f32 0.0, %v569
      %v571 = vpop.f32.mrb[0].mxu0
      %v572 = vpop.f32.mrb[0].mxu0
      %v573 = vadd.f32 0.0, %v572
      %v574 = vpop.f32.mrb[0].mxu0
      %575 = vmatprep.mubr.bf16.mxu0 0
      %576 = vmatmul.mubr.bf16.gmra.mrb[0].mxu0 %v358
      %v577 = vpop.f32.mrb[0].mxu0
      %v578 = vadd.f32 0.0, %v577
      %v579 = vpop.f32.mrb[0].mxu0
      %v580 = vpop.f32.mrb[0].mxu0
      %v581 = vadd.f32 0.0, %v580
      %v582 = vpop.f32.mrb[0].mxu0
      %583 = vdwg.mxu0
      %v584 = vpack.c.bf16 %v461, %v458
      %v585 = vpack.c.bf16 %v469, %v466
      %v586 = vpack.c.bf16 %v477, %v474
      %v587 = vpack.c.bf16 %v485, %v482
      %v588 = vpack.c.bf16 %v493, %v490
      %v589 = vpack.c.bf16 %v501, %v498
      %v590 = vpack.c.bf16 %v509, %v506
      %v591 = vpack.c.bf16 %v517, %v514
      %v592 = vpack.c.bf16 %v525, %v522
      %v593 = vpack.c.bf16 %v533, %v530
      %v594 = vpack.c.bf16 %v541, %v538
      %v595 = vpack.c.bf16 %v549, %v546
      %v596 = vpack.c.bf16 %v557, %v554
      %v597 = vpack.c.bf16 %v565, %v562
      %v598 = vpack.c.bf16 %v573, %v570
      %v599 = vpack.c.bf16 %v581, %v578
      %v616 = vunpack.c.l.b16 %v584
      %v617 = vunpack.c.h.b16 %v584
      %v618 = vunpack.c.l.b16 %v585
      %v619 = vunpack.c.h.b16 %v585
      %v620 = vunpack.c.l.b16 %v586
      %v621 = vunpack.c.h.b16 %v586
      %v622 = vunpack.c.l.b16 %v587
      %v623 = vunpack.c.h.b16 %v587
      %v624 = vunpack.c.l.b16 %v588
      %v625 = vunpack.c.h.b16 %v588
      %v626 = vunpack.c.l.b16 %v589
      %v627 = vunpack.c.h.b16 %v589
      %v628 = vunpack.c.l.b16 %v590
      %v629 = vunpack.c.h.b16 %v590
      %v630 = vunpack.c.l.b16 %v591
      %v631 = vunpack.c.h.b16 %v591
      %v632 = vunpack.c.l.b16 %v592
      %v633 = vunpack.c.h.b16 %v592
      %v634 = vunpack.c.l.b16 %v593
      %v635 = vunpack.c.h.b16 %v593
      %v636 = vunpack.c.l.b16 %v594
      %v637 = vunpack.c.h.b16 %v594
      %v638 = vunpack.c.l.b16 %v595
      %v639 = vunpack.c.h.b16 %v595
      %v640 = vunpack.c.l.b16 %v596
      %v641 = vunpack.c.h.b16 %v596
      %v642 = vunpack.c.l.b16 %v597
      %v643 = vunpack.c.h.b16 %v597
      %v644 = vunpack.c.l.b16 %v598
      %v645 = vunpack.c.h.b16 %v598
      %v646 = vunpack.c.l.b16 %v599
      %v647 = vunpack.c.h.b16 %v599
      %v648 = vpack.c.b16 %v616, %v616
      %v649 = vpack.c.b16 %v617, %v617
      %v650 = vpack.c.b16 %v618, %v618
      %v651 = vpack.c.b16 %v619, %v619
      %v652 = vpack.c.b16 %v620, %v620
      %v653 = vpack.c.b16 %v621, %v621
      %v654 = vpack.c.b16 %v622, %v622
      %v655 = vpack.c.b16 %v623, %v623
      %v656 = vpack.c.b16 %v624, %v624
      %v657 = vpack.c.b16 %v625, %v625
      %v658 = vpack.c.b16 %v626, %v626
      %v659 = vpack.c.b16 %v627, %v627
      %v660 = vpack.c.b16 %v628, %v628
      %v661 = vpack.c.b16 %v629, %v629
      %v662 = vpack.c.b16 %v630, %v630
      %v663 = vpack.c.b16 %v631, %v631
      %v664 = vpack.c.b16 %v632, %v632
      %v665 = vpack.c.b16 %v633, %v633
      %v666 = vpack.c.b16 %v634, %v634
      %v667 = vpack.c.b16 %v635, %v635
      %v668 = vpack.c.b16 %v636, %v636
      %v669 = vpack.c.b16 %v637, %v637
      %v670 = vpack.c.b16 %v638, %v638
      %v671 = vpack.c.b16 %v639, %v639
      %v672 = vpack.c.b16 %v640, %v640
      %v673 = vpack.c.b16 %v641, %v641
      %v674 = vpack.c.b16 %v642, %v642
      %v675 = vpack.c.b16 %v643, %v643
      %v676 = vpack.c.b16 %v644, %v644
      %v677 = vpack.c.b16 %v645, %v645
      %v678 = vpack.c.b16 %v646, %v646
      %v679 = vpack.c.b16 %v647, %v647
      %712 = vst [vmem:[%s221] sm:$0xf] %v648
      %713 = vst [vmem:[%s221 + $0x4] sm:$0xf] %v649
      %714 = vst [vmem:[%s221 + $0x8] sm:$0xf] %v650
      %715 = vst [vmem:[%s221 + $0xc] sm:$0xf] %v651
      %716 = vst [vmem:[%s221 + $0x10] sm:$0xf] %v652
      %717 = vst [vmem:[%s221 + $0x14] sm:$0xf] %v653
      %718 = vst [vmem:[%s221 + $0x18] sm:$0xf] %v654
      %719 = vst [vmem:[%s221 + $0x1c] sm:$0xf] %v655
      %720 = vst [vmem:[%s221 + $0x20] sm:$0xf] %v656
      %721 = vst [vmem:[%s221 + $0x24] sm:$0xf] %v657
      %722 = vst [vmem:[%s221 + $0x28] sm:$0xf] %v658
      %723 = vst [vmem:[%s221 + $0x2c] sm:$0xf] %v659
      %724 = vst [vmem:[%s221 + $0x30] sm:$0xf] %v660
      %725 = vst [vmem:[%s221 + $0x34] sm:$0xf] %v661
      %726 = vst [vmem:[%s221 + $0x38] sm:$0xf] %v662
      %727 = vst [vmem:[%s221 + $0x3c] sm:$0xf] %v663
      %728 = vst [vmem:[%s221 + $0x40] sm:$0xf] %v664
      %729 = vst [vmem:[%s221 + $0x44] sm:$0xf] %v665
      %730 = vst [vmem:[%s221 + $0x48] sm:$0xf] %v666
      %731 = vst [vmem:[%s221 + $0x4c] sm:$0xf] %v667
      %732 = vst [vmem:[%s221 + $0x50] sm:$0xf] %v668
      %733 = vst [vmem:[%s221 + $0x54] sm:$0xf] %v669
      %734 = vst [vmem:[%s221 + $0x58] sm:$0xf] %v670
      %735 = vst [vmem:[%s221 + $0x5c] sm:$0xf] %v671
      %736 = vst [vmem:[%s221 + $0x60] sm:$0xf] %v672
      %737 = vst [vmem:[%s221 + $0x64] sm:$0xf] %v673
      %738 = vst [vmem:[%s221 + $0x68] sm:$0xf] %v674
      %739 = vst [vmem:[%s221 + $0x6c] sm:$0xf] %v675
      %740 = vst [vmem:[%s221 + $0x70] sm:$0xf] %v676
      %741 = vst [vmem:[%s221 + $0x74] sm:$0xf] %v677
      %742 = vst [vmem:[%s221 + $0x78] sm:$0xf] %v678
      %743 = vst [vmem:[%s221 + $0x7c] sm:$0xf] %v679
      %v744 = vadd.f32 %v458, %v461
      %v745 = vadd.f32 %v744, %v466
      %v746 = vadd.f32 %v745, %v469
      %v747 = vadd.f32 %v746, %v474
      %v748 = vadd.f32 %v747, %v477
      %v749 = vadd.f32 %v748, %v482
      %v750 = vadd.f32 %v749, %v485
      %v751 = vadd.f32 %v750, %v490
      %v752 = vadd.f32 %v751, %v493
      %v753 = vadd.f32 %v752, %v498
      %v754 = vadd.f32 %v753, %v501
      %v755 = vadd.f32 %v754, %v506
      %v756 = vadd.f32 %v755, %v509
      %v757 = vadd.f32 %v756, %v514
      %v758 = vadd.f32 %v757, %v517
      %v759 = vadd.f32 %v758, %v522
      %v760 = vadd.f32 %v759, %v525
      %v761 = vadd.f32 %v760, %v530
      %v762 = vadd.f32 %v761, %v533
      %v763 = vadd.f32 %v762, %v538
      %v764 = vadd.f32 %v763, %v541
      %v765 = vadd.f32 %v764, %v546
      %v766 = vadd.f32 %v765, %v549
      %v767 = vadd.f32 %v766, %v554
      %v768 = vadd.f32 %v767, %v557
      %v769 = vadd.f32 %v768, %v562
      %v770 = vadd.f32 %v769, %v565
      %v771 = vadd.f32 %v770, %v570
      %v772 = vadd.f32 %v771, %v573
      %v773 = vadd.f32 %v772, %v578
      %v774 = vadd.f32 %v773, %v581
      %v775 = vrot.slane %v774, 4
      %v776 = vadd.f32 %v774, %v775
      %v777 = vrot.slane %v776, 2
      %v778 = vadd.f32 %v776, %v777
      %v779 = vrot.slane %v778, 1
      %v780 = vadd.f32 %v778, %v779
      %781 = vst [vmem:[%s229] sm:$0x1] %v780
      %v782 = vmul.f32 %v458, %v458
      %v783 = vmul.f32 %v461, %v461
      %v784 = vmul.f32 %v466, %v466
      %v785 = vmul.f32 %v469, %v469
      %v786 = vmul.f32 %v474, %v474
      %v787 = vmul.f32 %v477, %v477
      %v788 = vmul.f32 %v482, %v482
      %v789 = vmul.f32 %v485, %v485
      %v790 = vmul.f32 %v490, %v490
      %v791 = vmul.f32 %v493, %v493
      %v792 = vmul.f32 %v498, %v498
      %v793 = vmul.f32 %v501, %v501
      %v794 = vmul.f32 %v506, %v506
      %v795 = vmul.f32 %v509, %v509
      %v796 = vmul.f32 %v514, %v514
      %v797 = vmul.f32 %v517, %v517
      %v798 = vmul.f32 %v522, %v522
      %v799 = vmul.f32 %v525, %v525
      %v800 = vmul.f32 %v530, %v530
      %v801 = vmul.f32 %v533, %v533
      %v802 = vmul.f32 %v538, %v538
      %v803 = vmul.f32 %v541, %v541
      %v804 = vmul.f32 %v546, %v546
      %v805 = vmul.f32 %v549, %v549
      %v806 = vmul.f32 %v554, %v554
      %v807 = vmul.f32 %v557, %v557
      %v808 = vmul.f32 %v562, %v562
      %v809 = vmul.f32 %v565, %v565
      %v810 = vmul.f32 %v570, %v570
      %v811 = vmul.f32 %v573, %v573
      %v812 = vmul.f32 %v578, %v578
      %v813 = vmul.f32 %v581, %v581
      %v814 = vadd.f32 %v782, %v783
      %v815 = vadd.f32 %v814, %v784
      %v816 = vadd.f32 %v815, %v785
      %v817 = vadd.f32 %v816, %v786
      %v818 = vadd.f32 %v817, %v787
      %v819 = vadd.f32 %v818, %v788
      %v820 = vadd.f32 %v819, %v789
      %v821 = vadd.f32 %v820, %v790
      %v822 = vadd.f32 %v821, %v791
      %v823 = vadd.f32 %v822, %v792
      %v824 = vadd.f32 %v823, %v793
      %v825 = vadd.f32 %v824, %v794
      %v826 = vadd.f32 %v825, %v795
      %v827 = vadd.f32 %v826, %v796
      %v828 = vadd.f32 %v827, %v797
      %v829 = vadd.f32 %v828, %v798
      %v830 = vadd.f32 %v829, %v799
      %v831 = vadd.f32 %v830, %v800
      %v832 = vadd.f32 %v831, %v801
      %v833 = vadd.f32 %v832, %v802
      %v834 = vadd.f32 %v833, %v803
      %v835 = vadd.f32 %v834, %v804
      %v836 = vadd.f32 %v835, %v805
      %v837 = vadd.f32 %v836, %v806
      %v838 = vadd.f32 %v837, %v807
      %v839 = vadd.f32 %v838, %v808
      %v840 = vadd.f32 %v839, %v809
      %v841 = vadd.f32 %v840, %v810
      %v842 = vadd.f32 %v841, %v811
      %v843 = vadd.f32 %v842, %v812
      %v844 = vadd.f32 %v843, %v813
      %v845 = vrot.slane %v844, 4
      %v846 = vadd.f32 %v844, %v845
      %v847 = vrot.slane %v846, 2
      %v848 = vadd.f32 %v846, %v847
      %v849 = vrot.slane %v848, 1
      %v850 = vadd.f32 %v848, %v849
      %851 = vst [vmem:[%s229 + $0x1] sm:$0x1] %v850
      %s852 = smul.u32 32, %s20
      %p853 = scmp.lt.s32.totalorder %s852, 127
      %s854 = scalar_select %p853, %s852, 127
      %p855 = scmp.lt.s32.totalorder %s19, 0
      %s856 = scalar_select %p855, %s19, 0
      %s857 = sadd.s32 %s856, %s854
      %s858 = smul.addr %s857, 4
      %s859 = scalar_lea.vmem %s2, %s858
      %p860 = scmp.lt.s32.totalorder %s20, 3
      %s861 = scalar_select %p860, %s20, 3
      %p862 = scmp.lt.s32.totalorder %s19, 0
      %s863 = scalar_select %p862, %s19, 0
      %s864 = sadd.s32 %s863, %s861
      %s865 = smul.addr %s864, 8
      %s866 = scalar_lea.vmem %s3, %s865
      // Predicated region
      $region29: #{down_block_forward.4} parent=27 // pred_check
        %p867 = pneg %p99
      $region30: #{down_block_forward.4} parent=27 // pred_check_branch
        %869 = sbr.rel (%p867) target = $region32
      $region31: #{down_block_forward.4} parent=27 // pred_region
        %s870 = smul.u32 32, %s20
      $region32: #{down_block_forward.4} parent=27 // pred_fallthru
        _
      // Predicated region
      $region33: #{down_block_forward.4} parent=27 // pred_check
        %p871 = pneg %p127
      $region34: #{down_block_forward.4} parent=27 // pred_check_branch
        %873 = sbr.rel (%p871) target = $region36
      $region35: #{down_block_forward.4} parent=27 // pred_region
        _
      $region36: #{down_block_forward.4} parent=27 // pred_fallthru
        _
    $region28: #{down_block_forward.4} parent=5 // pred_fallthru
      _
    %p874 = scmp.le.s32.totalorder 2, %s10
    // Predicated region
    $region37: #{down_block_forward.4} parent=5 // pred_check
      %p875 = pneg %p874
    $region38: #{down_block_forward.4} parent=5 // pred_check_branch
      %877 = sbr.rel (%p875) target = $region40
    $region39: #{down_block_forward.4} parent=5 // pred_region
      %s878 = ssub.s32 %s10, 2
      // Predicated region
      $region41: #{down_block_forward.4} parent=39 // pred_check
        %p879 = pneg %p105
      $region42: #{down_block_forward.4} parent=39 // pred_check_branch
        %881 = sbr.rel (%p879) target = $region44
      $region43: #{down_block_forward.4} parent=39 // pred_region
        %s882 = smul.u32 32, %s22
        %p883 = scmp.lt.s32.totalorder %s882, 127
        %s884 = scalar_select %p883, %s882, 127
        %p885 = scmp.lt.s32.totalorder %s21, 0
        %s886 = scalar_select %p885, %s21, 0
        %s887 = sadd.s32 %s886, %s884
        %s888 = smul.addr %s887, 4
        %s889 = scalar_lea.vmem %s2, %s888
      $region44: #{down_block_forward.4} parent=39 // pred_fallthru
        _
      // Predicated region
      $region45: #{down_block_forward.4} parent=39 // pred_check
        %p890 = pneg %p133
      $region46: #{down_block_forward.4} parent=39 // pred_check_branch
        %892 = sbr.rel (%p890) target = $region48
      $region47: #{down_block_forward.4} parent=39 // pred_region
        %p893 = scmp.lt.s32.totalorder %s22, 3
        %s894 = scalar_select %p893, %s22, 3
        %p895 = scmp.lt.s32.totalorder %s21, 0
        %s896 = scalar_select %p895, %s21, 0
        %s897 = sadd.s32 %s896, %s894
        %s898 = smul.addr %s897, 8
        %s899 = scalar_lea.vmem %s3, %s898
      $region48: #{down_block_forward.4} parent=39 // pred_fallthru
        _
    $region40: #{down_block_forward.4} parent=5 // pred_fallthru
      _
  $region6: #{down_block_forward.4} parent=0 // loop_footer
    %s14 = sadd.s32 1, %s10
  $region7: #{down_block_forward.4} parent=0 // loop_footer_branch
    %9 = sbr.rel target = $region3
  $region8: #{down_block_forward.4} parent=0 // loop_exit
    _

// kernel: tile.18
$region0: #{tile.18}
  #allocation0 [shape = 's32[1]{0}', space=sflag, size = 0x4, scoped, tag = 'scoped memory for tile.18']
  %s0 = inlined_call_operand.vmem [shape: f32[8], index: 0, kind: input, shape index: {}]
  %s1 = inlined_call_operand.vmem [shape: f32[27,8], index: 1, kind: output, shape index: {}]
  // Predicated region
  $region2: #{tile.18} parent=0 // pred_check
    _
  $region3: #{tile.18} parent=0 // pred_check_branch
    %3 = sbr.rel (0) target = $region5
  $region4: #{tile.18} parent=0 // pred_region
    _
  $region5: #{tile.18} parent=0 // pred_fallthru
    _
  %v4 = vld [vmem:[%s0] ss:$0 sm:$0xff]
  %5 = vst [vmem:[%s1] sm:$0xff] %v4
  %s6 = scalar_lea.vmem %s1, 8
  %7 = vst [vmem:[%s6] sm:$0xff] %v4
  %s8 = scalar_lea.vmem %s1, 16
  %9 = vst [vmem:[%s8] sm:$0xff] %v4
  %s10 = scalar_lea.vmem %s1, 24
  %11 = vst [vmem:[%s10] sm:$0xff] %v4

// kernel: tile.19
$region0: #{tile.19}
  %s0 = inlined_call_operand.vmem [shape: f32[27,8], index: 0, kind: input, shape index: {}]
  %s1 = inlined_call_operand.vmem [shape: f32[216], index: 1, kind: output, shape index: {}]
  $region1: #{tile.19} parent=0
    #allocation0 [shape = 'u8[4096]{0}', space=vmem, size = 0x1000, scoped, tag = 'scoped mem for output reshape']
    %s2 = smov 3
    %v3 = vld [vmem:[%s0] ss:$16 sm:%s2]
    %vm4 = vcmask 64512
    %5 = vst.msk [vmem:[#allocation0] sm:$0x3] %vm4, %v3
    %s6 = scalar_lea.vmem %s0, 15
    %v7 = vld [vmem:[%s6] sm:$0x1]
    %8 = vrot.lane.b32.xlu0 %v7, 120
    %v9 = vpop.permute.xlu0 %8
    %vm10 = vcmask 1048512
    %11 = vst.msk [vmem:[#allocation0] sm:$0x1] %vm10, %v9
    %s12 = scalar_lea.vmem %s0, 14
    %v13 = vld [vmem:[%s12] sm:$0x1]
    %14 = vrot.lane.b32.xlu0 %v13, 112
    %v15 = vpop.permute.xlu0 %14
    %vm16 = vcmask 982912
    %17 = vst.msk [vmem:[#allocation0] sm:$0x1] %vm16, %v15
    %s18 = scalar_lea.vmem %s0, 13
    %v19 = vld [vmem:[%s18] sm:$0x1]
    %20 = vrot.lane.b32.xlu0 %v19, 104
    %v21 = vpop.permute.xlu0 %20
    %vm22 = vcmask 917312
    %23 = vst.msk [vmem:[#allocation0] sm:$0x1] %vm22, %v21
    %s24 = scalar_lea.vmem %s0, 12
    %v25 = vld [vmem:[%s24] sm:$0x1]
    %26 = vrot.lane.b32.xlu0 %v25, 96
    %v27 = vpop.permute.xlu0 %26
    %vm28 = vcmask 851712
    %29 = vst.msk [vmem:[#allocation0] sm:$0x1] %vm28, %v27
    %s30 = scalar_lea.vmem %s0, 11
    %v31 = vld [vmem:[%s30] sm:$0x1]
    %32 = vrot.lane.b32.xlu0 %v31, 88
    %v33 = vpop.permute.xlu0 %32
    %vm34 = vcmask 786112
    %35 = vst.msk [vmem:[#allocation0] sm:$0x1] %vm34, %v33
    %s36 = scalar_lea.vmem %s0, 10
    %s37 = smov 3
    %v38 = vld [vmem:[%s36] ss:$16 sm:%s37]
    %39 = vrot.lane.b32.xlu0 %v38, 80
    %v40 = vpop.permute.xlu0 %39
    %vm41 = vcmask 720512
    %42 = vst.msk [vmem:[#allocation0] sm:$0x3] %vm41, %v40
    %s43 = scalar_lea.vmem %s0, 9
    %s44 = smov 3
    %v45 = vld [vmem:[%s43] ss:$16 sm:%s44]
    %46 = vrot.lane.b32.xlu0 %v45, 72
    %v47 = vpop.permute.xlu0 %46
    %vm48 = vcmask 654912
    %49 = vst.msk [vmem:[#allocation0] sm:$0x3] %vm48, %v47
    %s50 = scalar_lea.vmem %s0, 8
    %s51 = smov 3
    %v52 = vld [vmem:[%s50] ss:$16 sm:%s51]
    %53 = vrot.lane.b32.xlu0 %v52, 64
    %v54 = vpop.permute.xlu0 %53
    %vm55 = vcmask 589312
    %56 = vst.msk [vmem:[#allocation0] sm:$0x3] %vm55, %v54
    %s57 = scalar_lea.vmem %s0, 7
    %s58 = smov 3
    %v59 = vld [vmem:[%s57] ss:$16 sm:%s58]
    %60 = vrot.lane.b32.xlu0 %v59, 56
    %v61 = vpop.permute.xlu0 %60
    %vm62 = vcmask 523712
    %63 = vst.msk [vmem:[#allocation0] sm:$0x3] %vm62, %v61
    %s64 = scalar_lea.vmem %s0, 6
    %s65 = smov 3
    %v66 = vld [vmem:[%s64] ss:$16 sm:%s65]
    %67 = vrot.lane.b32.xlu0 %v66, 48
    %v68 = vpop.permute.xlu0 %67
    %vm69 = vcmask 458112
    %70 = vst.msk [vmem:[#allocation0] sm:$0x3] %vm69, %v68
    %s71 = scalar_lea.vmem %s0, 5
    %s72 = smov 3
    %v73 = vld [vmem:[%s71] ss:$16 sm:%s72]
    %74 = vrot.lane.b32.xlu0 %v73, 40
    %v75 = vpop.permute.xlu0 %74
    %vm76 = vcmask 392512
    %77 = vst.msk [vmem:[#allocation0] sm:$0x3] %vm76, %v75
    %s78 = scalar_lea.vmem %s0, 4
    %s79 = smov 3
    %v80 = vld [vmem:[%s78] ss:$16 sm:%s79]
    %81 = vrot.lane.b32.xlu0 %v80, 32
    %v82 = vpop.permute.xlu0 %81
    %vm83 = vcmask 326912
    %84 = vst.msk [vmem:[#allocation0] sm:$0x3] %vm83, %v82
    %s85 = scalar_lea.vmem %s0, 3
    %s86 = smov 3
    %v87 = vld [vmem:[%s85] ss:$16 sm:%s86]
    %88 = vrot.lane.b32.xlu0 %v87, 24
    %v89 = vpop.permute.xlu0 %88
    %vm90 = vcmask 261312
    %91 = vst.msk [vmem:[#allocation0] sm:$0x3] %vm90, %v89
    %s92 = scalar_lea.vmem %s0, 2
    %s93 = smov 3
    %v94 = vld [vmem:[%s92] ss:$16 sm:%s93]
    %95 = vrot.lane.b32.xlu0 %v94, 16
    %v96 = vpop.permute.xlu0 %95
    %vm97 = vcmask 195712
    %98 = vst.msk [vmem:[#allocation0] sm:$0x3] %vm97, %v96
    %s99 = scalar_lea.vmem %s0, 1
    %s100 = smov 3
    %v101 = vld [vmem:[%s99] ss:$16 sm:%s100]
    %102 = vrot.lane.b32.xlu0 %v101, 8
    %v103 = vpop.permute.xlu0 %102
    %vm104 = vcmask 130112
    %105 = vst.msk [vmem:[#allocation0] sm:$0x3] %vm104, %v103
    %s107 = sshllo.u32 0, 2
    %v109 = vld [vmem:[#allocation0] sm:%s107]
    %s110 = sshllo.u32 0, 2
    %111 = vst [vmem:[%s1] sm:%s110] %v109

// kernel: down_block_forward.7
$region0: #{down_block_forward.7}
  #allocation0 [shape = 'u32[]', space=smem, size = 0x4, offset = 0x4, fixed_abs, tag = 'smem constant byte address 0x4 - core index']
  #allocation1 [shape = 'u32[144,128]{1,0:T(1,128)}', space=vmem, size = 0x12000, scoped, tag = 'internal scratch']
  %s0 = inlined_call_operand.vmem [shape: bf16[1024,128], index: 0, kind: input, shape index: {}]
  %s1 = inlined_call_operand.vmem [shape: bf16[1024,128], index: 1, kind: input, shape index: {}]
  %s2 = inlined_call_operand.vmem [shape: f32[1,128], index: 2, kind: input, shape index: {}]
  %s3 = inlined_call_operand.vmem [shape: f32[1,128], index: 3, kind: input, shape index: {}]
  %s4 = inlined_call_operand.vmem [shape: f32[1,128], index: 4, kind: input, shape index: {}]
  %s5 = inlined_call_operand.vmem [shape: f32[1,128], index: 5, kind: input, shape index: {}]
  %s6 = inlined_call_operand.vmem [shape: f32[1024,128], index: 6, kind: output, shape index: {}]
  %s7 = sld [smem:[#allocation0]]
  $region57: #{down_block_forward.7} parent=0
    _
  %s9 = ssub.s32 1, %s7
  %s10 = scalar_select 0, %s9, %s7
  loop: start=0, step=1, limit=4
  $region2: #{down_block_forward.7} parent=0 // loop_pre_header
    _
  $region3: #{down_block_forward.7} parent=0 // loop_header
    %s12 = sphi 0, %s16
    %p13 = scmp.ge.s32.totalorder %s12, 4
    %s22 = sphi 0, %s24
    %s25 = sphi 0, %s22
    %s26 = sphi 0, %s25
    %s42 = sphi 0, %s26
    %s48 = sphi 0, %s50
    %s51 = sphi 0, %s48
    %s52 = sphi 0, %s51
    %s68 = sphi 0, %s52
    %s72 = sphi 0, %s72
    %s74 = sphi 0, %s72
    %s75 = sphi 0, %s74
    %s89 = sphi 0, %s75
    %s93 = sphi 0, %s93
    %s95 = sphi 0, %s93
    %s96 = sphi 0, %s95
    %s110 = sphi 0, %s96
    %s114 = sphi 0, %s114
    %s116 = sphi 0, %s114
    %s117 = sphi 0, %s116
    %s131 = sphi 0, %s117
    %s135 = sphi 0, %s135
    %s137 = sphi 0, %s135
    %s138 = sphi 0, %s137
    %s152 = sphi 0, %s138
    %s158 = sphi 0, %s160
    %s161 = sphi 0, %s158
    %s162 = sphi 0, %s161
    %s178 = sphi 0, %s162
  $region4: #{down_block_forward.7} parent=0 // loop_header_branch
    %15 = sbr.rel (%p13) target = $region8
  $region5: #{down_block_forward.7} parent=0 // loop_body
    %s17 = ssub.s32 %s12, 1
    %s18 = ssub.s32 %s12, 2
    %s19 = sadd.s32 %s12, 1
    %s20 = ssub.s32 %s12, %s19
    %p21 = scmp.eq.s32.totalorder %s20, 0
    %s23 = sadd.s32 %s22, 1
    %s24 = scalar_select %p21, %s22, %s23
    %p27 = pneg %p21
    %p28 = scmp.eq.s32.totalorder %s12, 1
    %p29 = por %p27, %p28
    %p30 = scmp.ne.s32.totalorder %s22, %s25
    %p31 = scmp.eq.s32.totalorder %s12, 0
    %p32 = por %p30, %p31
    %p33 = scmp.ne.s32.totalorder %s22, %s25
    %p34 = scmp.eq.s32.totalorder %s17, 1
    %p35 = por %p33, %p34
    %p36 = scmp.ne.s32.totalorder %s25, %s26
    %p37 = scmp.eq.s32.totalorder %s17, 0
    %p38 = por %p36, %p37
    %p39 = scmp.ne.s32.totalorder %s25, %s26
    %p40 = scmp.eq.s32.totalorder %s18, 1
    %p41 = por %p39, %p40
    %p43 = scmp.ne.s32.totalorder %s26, %s42
    %p44 = scmp.eq.s32.totalorder %s18, 0
    %p45 = por %p43, %p44
    %s46 = ssub.s32 %s12, %s19
    %p47 = scmp.eq.s32.totalorder %s46, 0
    %s49 = sadd.s32 %s48, 1
    %s50 = scalar_select %p47, %s48, %s49
    %p53 = pneg %p47
    %p54 = scmp.eq.s32.totalorder %s12, 1
    %p55 = por %p53, %p54
    %p56 = scmp.ne.s32.totalorder %s48, %s51
    %p57 = scmp.eq.s32.totalorder %s12, 0
    %p58 = por %p56, %p57
    %p59 = scmp.ne.s32.totalorder %s48, %s51
    %p60 = scmp.eq.s32.totalorder %s17, 1
    %p61 = por %p59, %p60
    %p62 = scmp.ne.s32.totalorder %s51, %s52
    %p63 = scmp.eq.s32.totalorder %s17, 0
    %p64 = por %p62, %p63
    %p65 = scmp.ne.s32.totalorder %s51, %s52
    %p66 = scmp.eq.s32.totalorder %s18, 1
    %p67 = por %p65, %p66
    %p69 = scmp.ne.s32.totalorder %s52, %s68
    %p70 = scmp.eq.s32.totalorder %s18, 0
    %p71 = por %p69, %p70
    %s73 = sadd.s32 %s72, 1
    %p76 = scmp.eq.s32.totalorder %s12, 1
    %p77 = scmp.ne.s32.totalorder %s72, %s74
    %p78 = scmp.eq.s32.totalorder %s12, 0
    %p79 = por %p77, %p78
    %p80 = scmp.ne.s32.totalorder %s72, %s74
    %p81 = scmp.eq.s32.totalorder %s17, 1
    %p82 = por %p80, %p81
    %p83 = scmp.ne.s32.totalorder %s74, %s75
    %p84 = scmp.eq.s32.totalorder %s17, 0
    %p85 = por %p83, %p84
    %p86 = scmp.ne.s32.totalorder %s74, %s75
    %p87 = scmp.eq.s32.totalorder %s18, 1
    %p88 = por %p86, %p87
    %p90 = scmp.ne.s32.totalorder %s75, %s89
    %p91 = scmp.eq.s32.totalorder %s18, 0
    %p92 = por %p90, %p91
    %s94 = sadd.s32 %s93, 1
    %p97 = scmp.eq.s32.totalorder %s12, 1
    %p98 = scmp.ne.s32.totalorder %s93, %s95
    %p99 = scmp.eq.s32.totalorder %s12, 0
    %p100 = por %p98, %p99
    %p101 = scmp.ne.s32.totalorder %s93, %s95
    %p102 = scmp.eq.s32.totalorder %s17, 1
    %p103 = por %p101, %p102
    %p104 = scmp.ne.s32.totalorder %s95, %s96
    %p105 = scmp.eq.s32.totalorder %s17, 0
    %p106 = por %p104, %p105
    %p107 = scmp.ne.s32.totalorder %s95, %s96
    %p108 = scmp.eq.s32.totalorder %s18, 1
    %p109 = por %p107, %p108
    %p111 = scmp.ne.s32.totalorder %s96, %s110
    %p112 = scmp.eq.s32.totalorder %s18, 0
    %p113 = por %p111, %p112
    %s115 = sadd.s32 %s114, 1
    %p118 = scmp.eq.s32.totalorder %s12, 1
    %p119 = scmp.ne.s32.totalorder %s114, %s116
    %p120 = scmp.eq.s32.totalorder %s12, 0
    %p121 = por %p119, %p120
    %p122 = scmp.ne.s32.totalorder %s114, %s116
    %p123 = scmp.eq.s32.totalorder %s17, 1
    %p124 = por %p122, %p123
    %p125 = scmp.ne.s32.totalorder %s116, %s117
    %p126 = scmp.eq.s32.totalorder %s17, 0
    %p127 = por %p125, %p126
    %p128 = scmp.ne.s32.totalorder %s116, %s117
    %p129 = scmp.eq.s32.totalorder %s18, 1
    %p130 = por %p128, %p129
    %p132 = scmp.ne.s32.totalorder %s117, %s131
    %p133 = scmp.eq.s32.totalorder %s18, 0
    %p134 = por %p132, %p133
    %s136 = sadd.s32 %s135, 1
    %p139 = scmp.eq.s32.totalorder %s12, 1
    %p140 = scmp.ne.s32.totalorder %s135, %s137
    %p141 = scmp.eq.s32.totalorder %s12, 0
    %p142 = por %p140, %p141
    %p143 = scmp.ne.s32.totalorder %s135, %s137
    %p144 = scmp.eq.s32.totalorder %s17, 1
    %p145 = por %p143, %p144
    %p146 = scmp.ne.s32.totalorder %s137, %s138
    %p147 = scmp.eq.s32.totalorder %s17, 0
    %p148 = por %p146, %p147
    %p149 = scmp.ne.s32.totalorder %s137, %s138
    %p150 = scmp.eq.s32.totalorder %s18, 1
    %p151 = por %p149, %p150
    %p153 = scmp.ne.s32.totalorder %s138, %s152
    %p154 = scmp.eq.s32.totalorder %s18, 0
    %p155 = por %p153, %p154
    %s156 = ssub.s32 %s12, %s19
    %p157 = scmp.eq.s32.totalorder %s156, 0
    %s159 = sadd.s32 %s158, 1
    %s160 = scalar_select %p157, %s158, %s159
    %p163 = pneg %p157
    %p164 = scmp.eq.s32.totalorder %s12, 1
    %p165 = por %p163, %p164
    %p166 = scmp.ne.s32.totalorder %s158, %s161
    %p167 = scmp.eq.s32.totalorder %s12, 0
    %p168 = por %p166, %p167
    %p169 = scmp.ne.s32.totalorder %s158, %s161
    %p170 = scmp.eq.s32.totalorder %s17, 1
    %p171 = por %p169, %p170
    %p172 = scmp.ne.s32.totalorder %s161, %s162
    %p173 = scmp.eq.s32.totalorder %s17, 0
    %p174 = por %p172, %p173
    %p175 = scmp.ne.s32.totalorder %s161, %s162
    %p176 = scmp.eq.s32.totalorder %s18, 1
    %p177 = por %p175, %p176
    %p179 = scmp.ne.s32.totalorder %s162, %s178
    %p180 = scmp.eq.s32.totalorder %s18, 0
    %p181 = por %p179, %p180
    %p182 = scmp.le.s32.totalorder 1, %s12
    %p183 = scmp.lt.s32.totalorder %s12, 3
    %p184 = pnand %p182, %p183
    %p185 = pneg %p184
    // Predicated region
    $region9: #{down_block_forward.7} parent=5 // pred_check
      _
    $region10: #{down_block_forward.7} parent=5 // pred_check_branch
      %187 = sbr.rel (%p184) target = $region12
    $region11: #{down_block_forward.7} parent=5 // pred_region
      %s188 = ssub.s32 %s12, 1
      // Predicated region
      $region13: #{down_block_forward.7} parent=11 // pred_check
        %p189 = pneg %p85
      $region14: #{down_block_forward.7} parent=11 // pred_check_branch
        %191 = sbr.rel (%p189) target = $region16
      $region15: #{down_block_forward.7} parent=11 // pred_region
        _
      $region16: #{down_block_forward.7} parent=11 // pred_fallthru
        _
      // Predicated region
      $region17: #{down_block_forward.7} parent=11 // pred_check
        %p192 = pneg %p106
      $region18: #{down_block_forward.7} parent=11 // pred_check_branch
        %194 = sbr.rel (%p192) target = $region20
      $region19: #{down_block_forward.7} parent=11 // pred_region
        _
      $region20: #{down_block_forward.7} parent=11 // pred_fallthru
        _
      // Predicated region
      $region21: #{down_block_forward.7} parent=11 // pred_check
        %p195 = pneg %p127
      $region22: #{down_block_forward.7} parent=11 // pred_check_branch
        %197 = sbr.rel (%p195) target = $region24
      $region23: #{down_block_forward.7} parent=11 // pred_region
        _
      $region24: #{down_block_forward.7} parent=11 // pred_fallthru
        _
      // Predicated region
      $region25: #{down_block_forward.7} parent=11 // pred_check
        %p198 = pneg %p148
      $region26: #{down_block_forward.7} parent=11 // pred_check_branch
        %200 = sbr.rel (%p198) target = $region28
      $region27: #{down_block_forward.7} parent=11 // pred_region
        _
      $region28: #{down_block_forward.7} parent=11 // pred_fallthru
        _
    $region12: #{down_block_forward.7} parent=5 // pred_fallthru
      _
    %p201 = scmp.lt.s32.totalorder %s12, 2
    // Predicated region
    $region29: #{down_block_forward.7} parent=5 // pred_check
      %p202 = pneg %p201
    $region30: #{down_block_forward.7} parent=5 // pred_check_branch
      %204 = sbr.rel (%p202) target = $region32
    $region31: #{down_block_forward.7} parent=5 // pred_region
      // Predicated region
      $region33: #{down_block_forward.7} parent=31 // pred_check
        %p205 = pneg %p32
      $region34: #{down_block_forward.7} parent=31 // pred_check_branch
        %207 = sbr.rel (%p205) target = $region36
      $region35: #{down_block_forward.7} parent=31 // pred_region
        %s208 = smul.u32 64, %s12
        %p209 = scmp.lt.s32.totalorder %s208, 127
        %s210 = scalar_select %p209, %s208, 127
        %s211 = smul.addr %s210, 4
        %s212 = scalar_lea.vmem %s0, %s211
        %s213 = smul.u32 64, %s12
      $region36: #{down_block_forward.7} parent=31 // pred_fallthru
        _
      // Predicated region
      $region37: #{down_block_forward.7} parent=31 // pred_check
        %p214 = pneg %p58
      $region38: #{down_block_forward.7} parent=31 // pred_check_branch
        %216 = sbr.rel (%p214) target = $region40
      $region39: #{down_block_forward.7} parent=31 // pred_region
        %s217 = smul.u32 64, %s12
        %p218 = scmp.lt.s32.totalorder %s217, 127
        %s219 = scalar_select %p218, %s217, 127
        %s220 = smul.addr %s219, 4
        %s221 = scalar_lea.vmem %s1, %s220
        %s222 = smul.u32 64, %s12
      $region40: #{down_block_forward.7} parent=31 // pred_fallthru
        _
    $region32: #{down_block_forward.7} parent=5 // pred_fallthru
      _
    %p223 = scmp.le.s32.totalorder 1, %s12
    %p224 = scmp.lt.s32.totalorder %s12, 3
    %p225 = pnand %p223, %p224
    %p226 = pneg %p225
    // Predicated region
    $region41: #{down_block_forward.7} parent=5 // pred_check
      _
    $region42: #{down_block_forward.7} parent=5 // pred_check_branch
      %228 = sbr.rel (%p225) target = $region44
    $region43: #{down_block_forward.7} parent=5 // pred_region
      %s229 = ssub.s32 %s12, 1
      %s230 = smul.u32 64, %s17
      %p231 = scmp.lt.s32.totalorder %s230, 127
      %s232 = scalar_select %p231, %s230, 127
      %s233 = smul.addr %s232, 4
      %s234 = scalar_lea.vmem %s0, %s233
      %p235 = pneg %p38
      %p236 = pneg %p35
      %s237 = smul.u32 64, %s17
      %p238 = scmp.lt.s32.totalorder %s237, 127
      %s239 = scalar_select %p238, %s237, 127
      %s240 = smul.addr %s239, 4
      %s241 = scalar_lea.vmem %s1, %s240
      %p242 = pneg %p64
      %p243 = pneg %p61
      %p244 = pneg %p85
      %p245 = pneg %p82
      %p246 = pneg %p106
      %p247 = pneg %p103
      %p248 = pneg %p127
      %p249 = pneg %p124
      %p250 = pneg %p148
      %p251 = pneg %p145
      %p252 = pneg %p174
      %p253 = pneg %p171
      %s254 = smul.u32 64, %s17
      %p255 = scmp.lt.s32.totalorder %s254, 127
      %s256 = scalar_select %p255, %s254, 127
      %s257 = smul.addr %s256, 8
      %s258 = scalar_lea.vmem %s6, %s257
      %s259 = smul.u32 64, %s17
      %p260 = scmp.lt.s32.totalorder %s259, 127
      %s261 = scalar_select %p260, %s259, 127
      %s262 = smul.addr %s261, 4
      %s263 = scalar_lea.vmem %s0, %s262
      %s264 = smul.u32 64, %s17
      %s265 = smul.u32 64, %s17
      %p266 = scmp.lt.s32.totalorder %s265, 127
      %s267 = scalar_select %p266, %s265, 127
      %s268 = smul.addr %s267, 4
      %s269 = scalar_lea.vmem %s1, %s268
      %s270 = smul.u32 64, %s17
      %s271 = smul.u32 64, %s17
      %p272 = scmp.lt.s32.totalorder %s271, 127
      %s273 = scalar_select %p272, %s271, 127
      %s274 = smul.addr %s273, 8
      %s275 = scalar_lea.vmem %s6, %s274
      %s276 = smul.u32 64, %s17
      %v277 = vld [vmem:[%s263] sm:$0xf]
      %v278 = vld [vmem:[%s263 + $0x4] sm:$0xf]
      %v279 = vld [vmem:[%s263 + $0x8] sm:$0xf]
      %v280 = vld [vmem:[%s263 + $0xc] sm:$0xf]
      %v281 = vld [vmem:[%s263 + $0x10] sm:$0xf]
      %v282 = vld [vmem:[%s263 + $0x14] sm:$0xf]
      %v283 = vld [vmem:[%s263 + $0x18] sm:$0xf]
      %v284 = vld [vmem:[%s263 + $0x1c] sm:$0xf]
      %v285 = vld [vmem:[%s263 + $0x20] sm:$0xf]
      %v286 = vld [vmem:[%s263 + $0x24] sm:$0xf]
      %v287 = vld [vmem:[%s263 + $0x28] sm:$0xf]
      %v288 = vld [vmem:[%s263 + $0x2c] sm:$0xf]
      %v289 = vld [vmem:[%s263 + $0x30] sm:$0xf]
      %v290 = vld [vmem:[%s263 + $0x34] sm:$0xf]
      %v291 = vld [vmem:[%s263 + $0x38] sm:$0xf]
      %v292 = vld [vmem:[%s263 + $0x3c] sm:$0xf]
      %v293 = vld [vmem:[%s263 + $0x40] sm:$0xf]
      %v294 = vld [vmem:[%s263 + $0x44] sm:$0xf]
      %v295 = vld [vmem:[%s263 + $0x48] sm:$0xf]
      %v296 = vld [vmem:[%s263 + $0x4c] sm:$0xf]
      %v297 = vld [vmem:[%s263 + $0x50] sm:$0xf]
      %v298 = vld [vmem:[%s263 + $0x54] sm:$0xf]
      %v299 = vld [vmem:[%s263 + $0x58] sm:$0xf]
      %v300 = vld [vmem:[%s263 + $0x5c] sm:$0xf]
      %v301 = vld [vmem:[%s263 + $0x60] sm:$0xf]
      %v302 = vld [vmem:[%s263 + $0x64] sm:$0xf]
      %v303 = vld [vmem:[%s263 + $0x68] sm:$0xf]
      %v304 = vld [vmem:[%s263 + $0x6c] sm:$0xf]
      %v305 = vld [vmem:[%s263 + $0x70] sm:$0xf]
      %v306 = vld [vmem:[%s263 + $0x74] sm:$0xf]
      %v307 = vld [vmem:[%s263 + $0x78] sm:$0xf]
      %v308 = vld [vmem:[%s263 + $0x7c] sm:$0xf]
      %v309 = vld [vmem:[%s263 + $0x80] sm:$0xf]
      %v310 = vld [vmem:[%s263 + $0x84] sm:$0xf]
      %v311 = vld [vmem:[%s263 + $0x88] sm:$0xf]
      %v312 = vld [vmem:[%s263 + $0x8c] sm:$0xf]
      %v313 = vld [vmem:[%s263 + $0x90] sm:$0xf]
      %v314 = vld [vmem:[%s263 + $0x94] sm:$0xf]
      %v315 = vld [vmem:[%s263 + $0x98] sm:$0xf]
      %v316 = vld [vmem:[%s263 + $0x9c] sm:$0xf]
      %v317 = vld [vmem:[%s263 + $0xa0] sm:$0xf]
      %v318 = vld [vmem:[%s263 + $0xa4] sm:$0xf]
      %v319 = vld [vmem:[%s263 + $0xa8] sm:$0xf]
      %v320 = vld [vmem:[%s263 + $0xac] sm:$0xf]
      %v321 = vld [vmem:[%s263 + $0xb0] sm:$0xf]
      %v322 = vld [vmem:[%s263 + $0xb4] sm:$0xf]
      %v323 = vld [vmem:[%s263 + $0xb8] sm:$0xf]
      %v324 = vld [vmem:[%s263 + $0xbc] sm:$0xf]
      %v325 = vld [vmem:[%s263 + $0xc0] sm:$0xf]
      %v326 = vld [vmem:[%s263 + $0xc4] sm:$0xf]
      %v327 = vld [vmem:[%s263 + $0xc8] sm:$0xf]
      %v328 = vld [vmem:[%s263 + $0xcc] sm:$0xf]
      %v329 = vld [vmem:[%s263 + $0xd0] sm:$0xf]
      %v330 = vld [vmem:[%s263 + $0xd4] sm:$0xf]
      %v331 = vld [vmem:[%s263 + $0xd8] sm:$0xf]
      %v332 = vld [vmem:[%s263 + $0xdc] sm:$0xf]
      %v333 = vld [vmem:[%s263 + $0xe0] sm:$0xf]
      %v334 = vld [vmem:[%s263 + $0xe4] sm:$0xf]
      %v335 = vld [vmem:[%s263 + $0xe8] sm:$0xf]
      %v336 = vld [vmem:[%s263 + $0xec] sm:$0xf]
      %v337 = vld [vmem:[%s263 + $0xf0] sm:$0xf]
      %v338 = vld [vmem:[%s263 + $0xf4] sm:$0xf]
      %v339 = vld [vmem:[%s263 + $0xf8] sm:$0xf]
      %v340 = vld [vmem:[%s263 + $0xfc] sm:$0xf]
      %v341 = vunpack.c.l.bf16 %v277
      %v342 = vunpack.c.l.bf16 %v278
      %v343 = vunpack.c.l.bf16 %v279
      %v344 = vunpack.c.l.bf16 %v280
      %v345 = vunpack.c.l.bf16 %v281
      %v346 = vunpack.c.l.bf16 %v282
      %v347 = vunpack.c.l.bf16 %v283
      %v348 = vunpack.c.l.bf16 %v284
      %v349 = vunpack.c.l.bf16 %v285
      %v350 = vunpack.c.l.bf16 %v286
      %v351 = vunpack.c.l.bf16 %v287
      %v352 = vunpack.c.l.bf16 %v288
      %v353 = vunpack.c.l.bf16 %v289
      %v354 = vunpack.c.l.bf16 %v290
      %v355 = vunpack.c.l.bf16 %v291
      %v356 = vunpack.c.l.bf16 %v292
      %v357 = vunpack.c.l.bf16 %v293
      %v358 = vunpack.c.l.bf16 %v294
      %v359 = vunpack.c.l.bf16 %v295
      %v360 = vunpack.c.l.bf16 %v296
      %v361 = vunpack.c.l.bf16 %v297
      %v362 = vunpack.c.l.bf16 %v298
      %v363 = vunpack.c.l.bf16 %v299
      %v364 = vunpack.c.l.bf16 %v300
      %v365 = vunpack.c.l.bf16 %v301
      %v366 = vunpack.c.l.bf16 %v302
      %v367 = vunpack.c.l.bf16 %v303
      %v368 = vunpack.c.l.bf16 %v304
      %v369 = vunpack.c.l.bf16 %v305
      %v370 = vunpack.c.l.bf16 %v306
      %v371 = vunpack.c.l.bf16 %v307
      %v372 = vunpack.c.l.bf16 %v308
      %v373 = vunpack.c.l.bf16 %v309
      %v374 = vunpack.c.l.bf16 %v310
      %v375 = vunpack.c.l.bf16 %v311
      %v376 = vunpack.c.l.bf16 %v312
      %v377 = vunpack.c.l.bf16 %v313
      %v378 = vunpack.c.l.bf16 %v314
      %v379 = vunpack.c.l.bf16 %v315
      %v380 = vunpack.c.l.bf16 %v316
      %v381 = vunpack.c.l.bf16 %v317
      %v382 = vunpack.c.l.bf16 %v318
      %v383 = vunpack.c.l.bf16 %v319
      %v384 = vunpack.c.l.bf16 %v320
      %v385 = vunpack.c.l.bf16 %v321
      %v386 = vunpack.c.l.bf16 %v322
      %v387 = vunpack.c.l.bf16 %v323
      %v388 = vunpack.c.l.bf16 %v324
      %v389 = vunpack.c.l.bf16 %v325
      %v390 = vunpack.c.l.bf16 %v326
      %v391 = vunpack.c.l.bf16 %v327
      %v392 = vunpack.c.l.bf16 %v328
      %v393 = vunpack.c.l.bf16 %v329
      %v394 = vunpack.c.l.bf16 %v330
      %v395 = vunpack.c.l.bf16 %v331
      %v396 = vunpack.c.l.bf16 %v332
      %v397 = vunpack.c.l.bf16 %v333
      %v398 = vunpack.c.l.bf16 %v334
      %v399 = vunpack.c.l.bf16 %v335
      %v400 = vunpack.c.l.bf16 %v336
      %v401 = vunpack.c.l.bf16 %v337
      %v402 = vunpack.c.l.bf16 %v338
      %v403 = vunpack.c.l.bf16 %v339
      %v404 = vunpack.c.l.bf16 %v340
      %v405 = vld [vmem:[%s2] sm:$0x1]
      %v407 = vlaneseq
      %v408 = vshrl.u32 %v407, 7
      %v409 = vsub.s32 0, %v408
      %v410 = vrot.slane %v405, %v409
      %v412 = vmul.f32 %v341, %v410
      %v413 = vmul.f32 %v342, %v410
      %v414 = vmul.f32 %v343, %v410
      %v415 = vmul.f32 %v344, %v410
      %v416 = vmul.f32 %v345, %v410
      %v417 = vmul.f32 %v346, %v410
      %v418 = vmul.f32 %v347, %v410
      %v419 = vmul.f32 %v348, %v410
      %v420 = vmul.f32 %v349, %v410
      %v421 = vmul.f32 %v350, %v410
      %v422 = vmul.f32 %v351, %v410
      %v423 = vmul.f32 %v352, %v410
      %v424 = vmul.f32 %v353, %v410
      %v425 = vmul.f32 %v354, %v410
      %v426 = vmul.f32 %v355, %v410
      %v427 = vmul.f32 %v356, %v410
      %v428 = vmul.f32 %v357, %v410
      %v429 = vmul.f32 %v358, %v410
      %v430 = vmul.f32 %v359, %v410
      %v431 = vmul.f32 %v360, %v410
      %v432 = vmul.f32 %v361, %v410
      %v433 = vmul.f32 %v362, %v410
      %v434 = vmul.f32 %v363, %v410
      %v435 = vmul.f32 %v364, %v410
      %v436 = vmul.f32 %v365, %v410
      %v437 = vmul.f32 %v366, %v410
      %v438 = vmul.f32 %v367, %v410
      %v439 = vmul.f32 %v368, %v410
      %v440 = vmul.f32 %v369, %v410
      %v441 = vmul.f32 %v370, %v410
      %v442 = vmul.f32 %v371, %v410
      %v443 = vmul.f32 %v372, %v410
      %v444 = vmul.f32 %v373, %v410
      %v445 = vmul.f32 %v374, %v410
      %v446 = vmul.f32 %v375, %v410
      %v447 = vmul.f32 %v376, %v410
      %v448 = vmul.f32 %v377, %v410
      %v449 = vmul.f32 %v378, %v410
      %v450 = vmul.f32 %v379, %v410
      %v451 = vmul.f32 %v380, %v410
      %v452 = vmul.f32 %v381, %v410
      %v453 = vmul.f32 %v382, %v410
      %v454 = vmul.f32 %v383, %v410
      %v455 = vmul.f32 %v384, %v410
      %v456 = vmul.f32 %v385, %v410
      %v457 = vmul.f32 %v386, %v410
      %v458 = vmul.f32 %v387, %v410
      %v459 = vmul.f32 %v388, %v410
      %v460 = vmul.f32 %v389, %v410
      %v461 = vmul.f32 %v390, %v410
      %v462 = vmul.f32 %v391, %v410
      %v463 = vmul.f32 %v392, %v410
      %v464 = vmul.f32 %v393, %v410
      %v465 = vmul.f32 %v394, %v410
      %v466 = vmul.f32 %v395, %v410
      %v467 = vmul.f32 %v396, %v410
      %v468 = vmul.f32 %v397, %v410
      %v469 = vmul.f32 %v398, %v410
      %v470 = vmul.f32 %v399, %v410
      %v471 = vmul.f32 %v400, %v410
      %v472 = vmul.f32 %v401, %v410
      %v473 = vmul.f32 %v402, %v410
      %v474 = vmul.f32 %v403, %v410
      %v475 = vmul.f32 %v404, %v410
      %v476 = vld [vmem:[%s3] sm:$0x1]
      %v478 = vlaneseq
      %v479 = vshrl.u32 %v478, 7
      %v480 = vsub.s32 0, %v479
      %v481 = vrot.slane %v476, %v480
      %v483 = vadd.f32 %v412, %v481
      %v484 = vadd.f32 %v413, %v481
      %v485 = vadd.f32 %v414, %v481
      %v486 = vadd.f32 %v415, %v481
      %v487 = vadd.f32 %v416, %v481
      %v488 = vadd.f32 %v417, %v481
      %v489 = vadd.f32 %v418, %v481
      %v490 = vadd.f32 %v419, %v481
      %v491 = vadd.f32 %v420, %v481
      %v492 = vadd.f32 %v421, %v481
      %v493 = vadd.f32 %v422, %v481
      %v494 = vadd.f32 %v423, %v481
      %v495 = vadd.f32 %v424, %v481
      %v496 = vadd.f32 %v425, %v481
      %v497 = vadd.f32 %v426, %v481
      %v498 = vadd.f32 %v427, %v481
      %v499 = vadd.f32 %v428, %v481
      %v500 = vadd.f32 %v429, %v481
      %v501 = vadd.f32 %v430, %v481
      %v502 = vadd.f32 %v431, %v481
      %v503 = vadd.f32 %v432, %v481
      %v504 = vadd.f32 %v433, %v481
      %v505 = vadd.f32 %v434, %v481
      %v506 = vadd.f32 %v435, %v481
      %v507 = vadd.f32 %v436, %v481
      %v508 = vadd.f32 %v437, %v481
      %v509 = vadd.f32 %v438, %v481
      %v510 = vadd.f32 %v439, %v481
      %v511 = vadd.f32 %v440, %v481
      %v512 = vadd.f32 %v441, %v481
      %v513 = vadd.f32 %v442, %v481
      %v514 = vadd.f32 %v443, %v481
      %v515 = vadd.f32 %v444, %v481
      %v516 = vadd.f32 %v445, %v481
      %v517 = vadd.f32 %v446, %v481
      %v518 = vadd.f32 %v447, %v481
      %v519 = vadd.f32 %v448, %v481
      %v520 = vadd.f32 %v449, %v481
      %v521 = vadd.f32 %v450, %v481
      %v522 = vadd.f32 %v451, %v481
      %v523 = vadd.f32 %v452, %v481
      %v524 = vadd.f32 %v453, %v481
      %v525 = vadd.f32 %v454, %v481
      %v526 = vadd.f32 %v455, %v481
      %v527 = vadd.f32 %v456, %v481
      %v528 = vadd.f32 %v457, %v481
      %v529 = vadd.f32 %v458, %v481
      %v530 = vadd.f32 %v459, %v481
      %v531 = vadd.f32 %v460, %v481
      %v532 = vadd.f32 %v461, %v481
      %v533 = vadd.f32 %v462, %v481
      %v534 = vadd.f32 %v463, %v481
      %v535 = vadd.f32 %v464, %v481
      %v536 = vadd.f32 %v465, %v481
      %v537 = vadd.f32 %v466, %v481
      %v538 = vadd.f32 %v467, %v481
      %v539 = vadd.f32 %v468, %v481
      %v540 = vadd.f32 %v469, %v481
      %v541 = vadd.f32 %v470, %v481
      %v542 = vadd.f32 %v471, %v481
      %v543 = vadd.f32 %v472, %v481
      %v544 = vadd.f32 %v473, %v481
      %v545 = vadd.f32 %v474, %v481
      %v546 = vadd.f32 %v475, %v481
      %v547 = vmax.f32 %v483, 0.0
      %v548 = vmax.f32 %v484, 0.0
      %v549 = vmax.f32 %v485, 0.0
      %v550 = vmax.f32 %v486, 0.0
      %v551 = vmax.f32 %v487, 0.0
      %v552 = vmax.f32 %v488, 0.0
      %v553 = vmax.f32 %v489, 0.0
      %v554 = vmax.f32 %v490, 0.0
      %v555 = vmax.f32 %v491, 0.0
      %v556 = vmax.f32 %v492, 0.0
      %v557 = vmax.f32 %v493, 0.0
      %v558 = vmax.f32 %v494, 0.0
      %v559 = vmax.f32 %v495, 0.0
      %v560 = vmax.f32 %v496, 0.0
      %v561 = vmax.f32 %v497, 0.0
      %v562 = vmax.f32 %v498, 0.0
      %v563 = vmax.f32 %v499, 0.0
      %v564 = vmax.f32 %v500, 0.0
      %v565 = vmax.f32 %v501, 0.0
      %v566 = vmax.f32 %v502, 0.0
      %v567 = vmax.f32 %v503, 0.0
      %v568 = vmax.f32 %v504, 0.0
      %v569 = vmax.f32 %v505, 0.0
      %v570 = vmax.f32 %v506, 0.0
      %v571 = vmax.f32 %v507, 0.0
      %v572 = vmax.f32 %v508, 0.0
      %v573 = vmax.f32 %v509, 0.0
      %v574 = vmax.f32 %v510, 0.0
      %v575 = vmax.f32 %v511, 0.0
      %v576 = vmax.f32 %v512, 0.0
      %v577 = vmax.f32 %v513, 0.0
      %v578 = vmax.f32 %v514, 0.0
      %v579 = vmax.f32 %v515, 0.0
      %v580 = vmax.f32 %v516, 0.0
      %v581 = vmax.f32 %v517, 0.0
      %v582 = vmax.f32 %v518, 0.0
      %v583 = vmax.f32 %v519, 0.0
      %v584 = vmax.f32 %v520, 0.0
      %v585 = vmax.f32 %v521, 0.0
      %v586 = vmax.f32 %v522, 0.0
      %v587 = vmax.f32 %v523, 0.0
      %v588 = vmax.f32 %v524, 0.0
      %v589 = vmax.f32 %v525, 0.0
      %v590 = vmax.f32 %v526, 0.0
      %v591 = vmax.f32 %v527, 0.0
      %v592 = vmax.f32 %v528, 0.0
      %v593 = vmax.f32 %v529, 0.0
      %v594 = vmax.f32 %v530, 0.0
      %v595 = vmax.f32 %v531, 0.0
      %v596 = vmax.f32 %v532, 0.0
      %v597 = vmax.f32 %v533, 0.0
      %v598 = vmax.f32 %v534, 0.0
      %v599 = vmax.f32 %v535, 0.0
      %v600 = vmax.f32 %v536, 0.0
      %v601 = vmax.f32 %v537, 0.0
      %v602 = vmax.f32 %v538, 0.0
      %v603 = vmax.f32 %v539, 0.0
      %v604 = vmax.f32 %v540, 0.0
      %v605 = vmax.f32 %v541, 0.0
      %v606 = vmax.f32 %v542, 0.0
      %v607 = vmax.f32 %v543, 0.0
      %v608 = vmax.f32 %v544, 0.0
      %v609 = vmax.f32 %v545, 0.0
      %v610 = vmax.f32 %v546, 0.0
      %v611 = vld [vmem:[%s269] sm:$0xf]
      %v612 = vld [vmem:[%s269 + $0x4] sm:$0xf]
      %v613 = vld [vmem:[%s269 + $0x8] sm:$0xf]
      %v614 = vld [vmem:[%s269 + $0xc] sm:$0xf]
      %v615 = vld [vmem:[%s269 + $0x10] sm:$0xf]
      %v616 = vld [vmem:[%s269 + $0x14] sm:$0xf]
      %v617 = vld [vmem:[%s269 + $0x18] sm:$0xf]
      %v618 = vld [vmem:[%s269 + $0x1c] sm:$0xf]
      %v619 = vld [vmem:[%s269 + $0x20] sm:$0xf]
      %v620 = vld [vmem:[%s269 + $0x24] sm:$0xf]
      %v621 = vld [vmem:[%s269 + $0x28] sm:$0xf]
      %v622 = vld [vmem:[%s269 + $0x2c] sm:$0xf]
      %v623 = vld [vmem:[%s269 + $0x30] sm:$0xf]
      %v624 = vld [vmem:[%s269 + $0x34] sm:$0xf]
      %v625 = vld [vmem:[%s269 + $0x38] sm:$0xf]
      %v626 = vld [vmem:[%s269 + $0x3c] sm:$0xf]
      %v627 = vld [vmem:[%s269 + $0x40] sm:$0xf]
      %v628 = vld [vmem:[%s269 + $0x44] sm:$0xf]
      %v629 = vld [vmem:[%s269 + $0x48] sm:$0xf]
      %v630 = vld [vmem:[%s269 + $0x4c] sm:$0xf]
      %v631 = vld [vmem:[%s269 + $0x50] sm:$0xf]
      %v632 = vld [vmem:[%s269 + $0x54] sm:$0xf]
      %v633 = vld [vmem:[%s269 + $0x58] sm:$0xf]
      %v634 = vld [vmem:[%s269 + $0x5c] sm:$0xf]
      %v635 = vld [vmem:[%s269 + $0x60] sm:$0xf]
      %v636 = vld [vmem:[%s269 + $0x64] sm:$0xf]
      %v637 = vld [vmem:[%s269 + $0x68] sm:$0xf]
      %v638 = vld [vmem:[%s269 + $0x6c] sm:$0xf]
      %v639 = vld [vmem:[%s269 + $0x70] sm:$0xf]
      %v640 = vld [vmem:[%s269 + $0x74] sm:$0xf]
      %v641 = vld [vmem:[%s269 + $0x78] sm:$0xf]
      %v642 = vld [vmem:[%s269 + $0x7c] sm:$0xf]
      %v643 = vld [vmem:[%s269 + $0x80] sm:$0xf]
      %v644 = vld [vmem:[%s269 + $0x84] sm:$0xf]
      %v645 = vld [vmem:[%s269 + $0x88] sm:$0xf]
      %v646 = vld [vmem:[%s269 + $0x8c] sm:$0xf]
      %v647 = vld [vmem:[%s269 + $0x90] sm:$0xf]
      %v648 = vld [vmem:[%s269 + $0x94] sm:$0xf]
      %v649 = vld [vmem:[%s269 + $0x98] sm:$0xf]
      %v650 = vld [vmem:[%s269 + $0x9c] sm:$0xf]
      %v651 = vld [vmem:[%s269 + $0xa0] sm:$0xf]
      %v652 = vld [vmem:[%s269 + $0xa4] sm:$0xf]
      %v653 = vld [vmem:[%s269 + $0xa8] sm:$0xf]
      %v654 = vld [vmem:[%s269 + $0xac] sm:$0xf]
      %v655 = vld [vmem:[%s269 + $0xb0] sm:$0xf]
      %v656 = vld [vmem:[%s269 + $0xb4] sm:$0xf]
      %v657 = vld [vmem:[%s269 + $0xb8] sm:$0xf]
      %v658 = vld [vmem:[%s269 + $0xbc] sm:$0xf]
      %v659 = vld [vmem:[%s269 + $0xc0] sm:$0xf]
      %v660 = vld [vmem:[%s269 + $0xc4] sm:$0xf]
      %v661 = vld [vmem:[%s269 + $0xc8] sm:$0xf]
      %v662 = vld [vmem:[%s269 + $0xcc] sm:$0xf]
      %v663 = vld [vmem:[%s269 + $0xd0] sm:$0xf]
      %v664 = vld [vmem:[%s269 + $0xd4] sm:$0xf]
      %v665 = vld [vmem:[%s269 + $0xd8] sm:$0xf]
      %v666 = vld [vmem:[%s269 + $0xdc] sm:$0xf]
      %v667 = vld [vmem:[%s269 + $0xe0] sm:$0xf]
      %v668 = vld [vmem:[%s269 + $0xe4] sm:$0xf]
      %v669 = vld [vmem:[%s269 + $0xe8] sm:$0xf]
      %v670 = vld [vmem:[%s269 + $0xec] sm:$0xf]
      %v671 = vld [vmem:[%s269 + $0xf0] sm:$0xf]
      %v672 = vld [vmem:[%s269 + $0xf4] sm:$0xf]
      %v673 = vld [vmem:[%s269 + $0xf8] sm:$0xf]
      %v674 = vld [vmem:[%s269 + $0xfc] sm:$0xf]
      %v675 = vunpack.c.l.bf16 %v611
      %v676 = vunpack.c.l.bf16 %v612
      %v677 = vunpack.c.l.bf16 %v613
      %v678 = vunpack.c.l.bf16 %v614
      %v679 = vunpack.c.l.bf16 %v615
      %v680 = vunpack.c.l.bf16 %v616
      %v681 = vunpack.c.l.bf16 %v617
      %v682 = vunpack.c.l.bf16 %v618
      %v683 = vunpack.c.l.bf16 %v619
      %v684 = vunpack.c.l.bf16 %v620
      %v685 = vunpack.c.l.bf16 %v621
      %v686 = vunpack.c.l.bf16 %v622
      %v687 = vunpack.c.l.bf16 %v623
      %v688 = vunpack.c.l.bf16 %v624
      %v689 = vunpack.c.l.bf16 %v625
      %v690 = vunpack.c.l.bf16 %v626
      %v691 = vunpack.c.l.bf16 %v627
      %v692 = vunpack.c.l.bf16 %v628
      %v693 = vunpack.c.l.bf16 %v629
      %v694 = vunpack.c.l.bf16 %v630
      %v695 = vunpack.c.l.bf16 %v631
      %v696 = vunpack.c.l.bf16 %v632
      %v697 = vunpack.c.l.bf16 %v633
      %v698 = vunpack.c.l.bf16 %v634
      %v699 = vunpack.c.l.bf16 %v635
      %v700 = vunpack.c.l.bf16 %v636
      %v701 = vunpack.c.l.bf16 %v637
      %v702 = vunpack.c.l.bf16 %v638
      %v703 = vunpack.c.l.bf16 %v639
      %v704 = vunpack.c.l.bf16 %v640
      %v705 = vunpack.c.l.bf16 %v641
      %v706 = vunpack.c.l.bf16 %v642
      %v707 = vunpack.c.l.bf16 %v643
      %v708 = vunpack.c.l.bf16 %v644
      %v709 = vunpack.c.l.bf16 %v645
      %v710 = vunpack.c.l.bf16 %v646
      %v711 = vunpack.c.l.bf16 %v647
      %v712 = vunpack.c.l.bf16 %v648
      %v713 = vunpack.c.l.bf16 %v649
      %v714 = vunpack.c.l.bf16 %v650
      %v715 = vunpack.c.l.bf16 %v651
      %v716 = vunpack.c.l.bf16 %v652
      %v717 = vunpack.c.l.bf16 %v653
      %v718 = vunpack.c.l.bf16 %v654
      %v719 = vunpack.c.l.bf16 %v655
      %v720 = vunpack.c.l.bf16 %v656
      %v721 = vunpack.c.l.bf16 %v657
      %v722 = vunpack.c.l.bf16 %v658
      %v723 = vunpack.c.l.bf16 %v659
      %v724 = vunpack.c.l.bf16 %v660
      %v725 = vunpack.c.l.bf16 %v661
      %v726 = vunpack.c.l.bf16 %v662
      %v727 = vunpack.c.l.bf16 %v663
      %v728 = vunpack.c.l.bf16 %v664
      %v729 = vunpack.c.l.bf16 %v665
      %v730 = vunpack.c.l.bf16 %v666
      %v731 = vunpack.c.l.bf16 %v667
      %v732 = vunpack.c.l.bf16 %v668
      %v733 = vunpack.c.l.bf16 %v669
      %v734 = vunpack.c.l.bf16 %v670
      %v735 = vunpack.c.l.bf16 %v671
      %v736 = vunpack.c.l.bf16 %v672
      %v737 = vunpack.c.l.bf16 %v673
      %v738 = vunpack.c.l.bf16 %v674
      %v739 = vld [vmem:[%s4] sm:$0x1]
      %v741 = vlaneseq
      %v742 = vshrl.u32 %v741, 7
      %v743 = vsub.s32 0, %v742
      %v744 = vrot.slane %v739, %v743
      %v746 = vmul.f32 %v675, %v744
      %v747 = vmul.f32 %v676, %v744
      %v748 = vmul.f32 %v677, %v744
      %v749 = vmul.f32 %v678, %v744
      %v750 = vmul.f32 %v679, %v744
      %v751 = vmul.f32 %v680, %v744
      %v752 = vmul.f32 %v681, %v744
      %v753 = vmul.f32 %v682, %v744
      %v754 = vmul.f32 %v683, %v744
      %v755 = vmul.f32 %v684, %v744
      %v756 = vmul.f32 %v685, %v744
      %v757 = vmul.f32 %v686, %v744
      %v758 = vmul.f32 %v687, %v744
      %v759 = vmul.f32 %v688, %v744
      %v760 = vmul.f32 %v689, %v744
      %v761 = vmul.f32 %v690, %v744
      %v762 = vmul.f32 %v691, %v744
      %v763 = vmul.f32 %v692, %v744
      %v764 = vmul.f32 %v693, %v744
      %v765 = vmul.f32 %v694, %v744
      %v766 = vmul.f32 %v695, %v744
      %v767 = vmul.f32 %v696, %v744
      %v768 = vmul.f32 %v697, %v744
      %v769 = vmul.f32 %v698, %v744
      %v770 = vmul.f32 %v699, %v744
      %v771 = vmul.f32 %v700, %v744
      %v772 = vmul.f32 %v701, %v744
      %v773 = vmul.f32 %v702, %v744
      %v774 = vmul.f32 %v703, %v744
      %v775 = vmul.f32 %v704, %v744
      %v776 = vmul.f32 %v705, %v744
      %v777 = vmul.f32 %v706, %v744
      %v778 = vmul.f32 %v707, %v744
      %v779 = vmul.f32 %v708, %v744
      %v780 = vmul.f32 %v709, %v744
      %v781 = vmul.f32 %v710, %v744
      %v782 = vmul.f32 %v711, %v744
      %v783 = vmul.f32 %v712, %v744
      %v784 = vmul.f32 %v713, %v744
      %v785 = vmul.f32 %v714, %v744
      %v786 = vmul.f32 %v715, %v744
      %v787 = vmul.f32 %v716, %v744
      %v788 = vmul.f32 %v717, %v744
      %v789 = vmul.f32 %v718, %v744
      %v790 = vmul.f32 %v719, %v744
      %v791 = vmul.f32 %v720, %v744
      %v792 = vmul.f32 %v721, %v744
      %v793 = vmul.f32 %v722, %v744
      %v794 = vmul.f32 %v723, %v744
      %v795 = vmul.f32 %v724, %v744
      %v796 = vmul.f32 %v725, %v744
      %v797 = vmul.f32 %v726, %v744
      %v798 = vmul.f32 %v727, %v744
      %v799 = vmul.f32 %v728, %v744
      %v800 = vmul.f32 %v729, %v744
      %v801 = vmul.f32 %v730, %v744
      %v802 = vmul.f32 %v731, %v744
      %v803 = vmul.f32 %v732, %v744
      %v804 = vmul.f32 %v733, %v744
      %v805 = vmul.f32 %v734, %v744
      %v806 = vmul.f32 %v735, %v744
      %v807 = vmul.f32 %v736, %v744
      %v808 = vmul.f32 %v737, %v744
      %v809 = vmul.f32 %v738, %v744
      %v810 = vld [vmem:[%s5] sm:$0x1]
      %v812 = vlaneseq
      %v813 = vshrl.u32 %v812, 7
      %v814 = vsub.s32 0, %v813
      %v815 = vrot.slane %v810, %v814
      %v817 = vadd.f32 %v746, %v815
      %v818 = vadd.f32 %v747, %v815
      %v819 = vadd.f32 %v748, %v815
      %v820 = vadd.f32 %v749, %v815
      %v821 = vadd.f32 %v750, %v815
      %v822 = vadd.f32 %v751, %v815
      %v823 = vadd.f32 %v752, %v815
      %v824 = vadd.f32 %v753, %v815
      %v825 = vadd.f32 %v754, %v815
      %v826 = vadd.f32 %v755, %v815
      %v827 = vadd.f32 %v756, %v815
      %v828 = vadd.f32 %v757, %v815
      %v829 = vadd.f32 %v758, %v815
      %v830 = vadd.f32 %v759, %v815
      %v831 = vadd.f32 %v760, %v815
      %v832 = vadd.f32 %v761, %v815
      %v833 = vadd.f32 %v762, %v815
      %v834 = vadd.f32 %v763, %v815
      %v835 = vadd.f32 %v764, %v815
      %v836 = vadd.f32 %v765, %v815
      %v837 = vadd.f32 %v766, %v815
      %v838 = vadd.f32 %v767, %v815
      %v839 = vadd.f32 %v768, %v815
      %v840 = vadd.f32 %v769, %v815
      %v841 = vadd.f32 %v770, %v815
      %v842 = vadd.f32 %v771, %v815
      %v843 = vadd.f32 %v772, %v815
      %v844 = vadd.f32 %v773, %v815
      %v845 = vadd.f32 %v774, %v815
      %v846 = vadd.f32 %v775, %v815
      %v847 = vadd.f32 %v776, %v815
      %v848 = vadd.f32 %v777, %v815
      %v849 = vadd.f32 %v778, %v815
      %v850 = vadd.f32 %v779, %v815
      %v851 = vadd.f32 %v780, %v815
      %v852 = vadd.f32 %v781, %v815
      %v853 = vadd.f32 %v782, %v815
      %v854 = vadd.f32 %v783, %v815
      %v855 = vadd.f32 %v784, %v815
      %v856 = vadd.f32 %v785, %v815
      %v857 = vadd.f32 %v786, %v815
      %v858 = vadd.f32 %v787, %v815
      %v859 = vadd.f32 %v788, %v815
      %v860 = vadd.f32 %v789, %v815
      %v861 = vadd.f32 %v790, %v815
      %v862 = vadd.f32 %v791, %v815
      %v863 = vadd.f32 %v792, %v815
      %v864 = vadd.f32 %v793, %v815
      %v865 = vadd.f32 %v794, %v815
      %v866 = vadd.f32 %v795, %v815
      %v867 = vadd.f32 %v796, %v815
      %v868 = vadd.f32 %v797, %v815
      %v869 = vadd.f32 %v798, %v815
      %v870 = vadd.f32 %v799, %v815
      %v871 = vadd.f32 %v800, %v815
      %v872 = vadd.f32 %v801, %v815
      %v873 = vadd.f32 %v802, %v815
      %v874 = vadd.f32 %v803, %v815
      %v875 = vadd.f32 %v804, %v815
      %v876 = vadd.f32 %v805, %v815
      %v877 = vadd.f32 %v806, %v815
      %v878 = vadd.f32 %v807, %v815
      %v879 = vadd.f32 %v808, %v815
      %v880 = vadd.f32 %v809, %v815
      %v881 = vmax.f32 %v817, 0.0
      %v882 = vmax.f32 %v818, 0.0
      %v883 = vmax.f32 %v819, 0.0
      %v884 = vmax.f32 %v820, 0.0
      %v885 = vmax.f32 %v821, 0.0
      %v886 = vmax.f32 %v822, 0.0
      %v887 = vmax.f32 %v823, 0.0
      %v888 = vmax.f32 %v824, 0.0
      %v889 = vmax.f32 %v825, 0.0
      %v890 = vmax.f32 %v826, 0.0
      %v891 = vmax.f32 %v827, 0.0
      %v892 = vmax.f32 %v828, 0.0
      %v893 = vmax.f32 %v829, 0.0
      %v894 = vmax.f32 %v830, 0.0
      %v895 = vmax.f32 %v831, 0.0
      %v896 = vmax.f32 %v832, 0.0
      %v897 = vmax.f32 %v833, 0.0
      %v898 = vmax.f32 %v834, 0.0
      %v899 = vmax.f32 %v835, 0.0
      %v900 = vmax.f32 %v836, 0.0
      %v901 = vmax.f32 %v837, 0.0
      %v902 = vmax.f32 %v838, 0.0
      %v903 = vmax.f32 %v839, 0.0
      %v904 = vmax.f32 %v840, 0.0
      %v905 = vmax.f32 %v841, 0.0
      %v906 = vmax.f32 %v842, 0.0
      %v907 = vmax.f32 %v843, 0.0
      %v908 = vmax.f32 %v844, 0.0
      %v909 = vmax.f32 %v845, 0.0
      %v910 = vmax.f32 %v846, 0.0
      %v911 = vmax.f32 %v847, 0.0
      %v912 = vmax.f32 %v848, 0.0
      %v913 = vmax.f32 %v849, 0.0
      %v914 = vmax.f32 %v850, 0.0
      %v915 = vmax.f32 %v851, 0.0
      %v916 = vmax.f32 %v852, 0.0
      %v917 = vmax.f32 %v853, 0.0
      %v918 = vmax.f32 %v854, 0.0
      %v919 = vmax.f32 %v855, 0.0
      %v920 = vmax.f32 %v856, 0.0
      %v921 = vmax.f32 %v857, 0.0
      %v922 = vmax.f32 %v858, 0.0
      %v923 = vmax.f32 %v859, 0.0
      %v924 = vmax.f32 %v860, 0.0
      %v925 = vmax.f32 %v861, 0.0
      %v926 = vmax.f32 %v862, 0.0
      %v927 = vmax.f32 %v863, 0.0
      %v928 = vmax.f32 %v864, 0.0
      %v929 = vmax.f32 %v865, 0.0
      %v930 = vmax.f32 %v866, 0.0
      %v931 = vmax.f32 %v867, 0.0
      %v932 = vmax.f32 %v868, 0.0
      %v933 = vmax.f32 %v869, 0.0
      %v934 = vmax.f32 %v870, 0.0
      %v935 = vmax.f32 %v871, 0.0
      %v936 = vmax.f32 %v872, 0.0
      %v937 = vmax.f32 %v873, 0.0
      %v938 = vmax.f32 %v874, 0.0
      %v939 = vmax.f32 %v875, 0.0
      %v940 = vmax.f32 %v876, 0.0
      %v941 = vmax.f32 %v877, 0.0
      %v942 = vmax.f32 %v878, 0.0
      %v943 = vmax.f32 %v879, 0.0
      %v944 = vmax.f32 %v880, 0.0
      %v945 = vadd.f32 %v547, %v881
      %v946 = vadd.f32 %v548, %v882
      %v947 = vadd.f32 %v549, %v883
      %v948 = vadd.f32 %v550, %v884
      %v949 = vadd.f32 %v551, %v885
      %v950 = vadd.f32 %v552, %v886
      %v951 = vadd.f32 %v553, %v887
      %v952 = vadd.f32 %v554, %v888
      %v953 = vadd.f32 %v555, %v889
      %v954 = vadd.f32 %v556, %v890
      %v955 = vadd.f32 %v557, %v891
      %v956 = vadd.f32 %v558, %v892
      %v957 = vadd.f32 %v559, %v893
      %v958 = vadd.f32 %v560, %v894
      %v959 = vadd.f32 %v561, %v895
      %v960 = vadd.f32 %v562, %v896
      %v961 = vadd.f32 %v563, %v897
      %v962 = vadd.f32 %v564, %v898
      %v963 = vadd.f32 %v565, %v899
      %v964 = vadd.f32 %v566, %v900
      %v965 = vadd.f32 %v567, %v901
      %v966 = vadd.f32 %v568, %v902
      %v967 = vadd.f32 %v569, %v903
      %v968 = vadd.f32 %v570, %v904
      %v969 = vadd.f32 %v571, %v905
      %v970 = vadd.f32 %v572, %v906
      %v971 = vadd.f32 %v573, %v907
      %v972 = vadd.f32 %v574, %v908
      %v973 = vadd.f32 %v575, %v909
      %v974 = vadd.f32 %v576, %v910
      %v975 = vadd.f32 %v577, %v911
      %v976 = vadd.f32 %v578, %v912
      %v977 = vadd.f32 %v579, %v913
      %v978 = vadd.f32 %v580, %v914
      %v979 = vadd.f32 %v581, %v915
      %v980 = vadd.f32 %v582, %v916
      %v981 = vadd.f32 %v583, %v917
      %v982 = vadd.f32 %v584, %v918
      %v983 = vadd.f32 %v585, %v919
      %v984 = vadd.f32 %v586, %v920
      %v985 = vadd.f32 %v587, %v921
      %v986 = vadd.f32 %v588, %v922
      %v987 = vadd.f32 %v589, %v923
      %v988 = vadd.f32 %v590, %v924
      %v989 = vadd.f32 %v591, %v925
      %v990 = vadd.f32 %v592, %v926
      %v991 = vadd.f32 %v593, %v927
      %v992 = vadd.f32 %v594, %v928
      %v993 = vadd.f32 %v595, %v929
      %v994 = vadd.f32 %v596, %v930
      %v995 = vadd.f32 %v597, %v931
      %v996 = vadd.f32 %v598, %v932
      %v997 = vadd.f32 %v599, %v933
      %v998 = vadd.f32 %v600, %v934
      %v999 = vadd.f32 %v601, %v935
      %v1000 = vadd.f32 %v602, %v936
      %v1001 = vadd.f32 %v603, %v937
      %v1002 = vadd.f32 %v604, %v938
      %v1003 = vadd.f32 %v605, %v939
      %v1004 = vadd.f32 %v606, %v940
      %v1005 = vadd.f32 %v607, %v941
      %v1006 = vadd.f32 %v608, %v942
      %v1007 = vadd.f32 %v609, %v943
      %v1008 = vadd.f32 %v610, %v944
      %v1009 = vmax.f32 %v945, 0.0
      %v1010 = vmax.f32 %v946, 0.0
      %v1011 = vmax.f32 %v947, 0.0
      %v1012 = vmax.f32 %v948, 0.0
      %v1013 = vmax.f32 %v949, 0.0
      %v1014 = vmax.f32 %v950, 0.0
      %v1015 = vmax.f32 %v951, 0.0
      %v1016 = vmax.f32 %v952, 0.0
      %v1017 = vmax.f32 %v953, 0.0
      %v1018 = vmax.f32 %v954, 0.0
      %v1019 = vmax.f32 %v955, 0.0
      %v1020 = vmax.f32 %v956, 0.0
      %v1021 = vmax.f32 %v957, 0.0
      %v1022 = vmax.f32 %v958, 0.0
      %v1023 = vmax.f32 %v959, 0.0
      %v1024 = vmax.f32 %v960, 0.0
      %v1025 = vmax.f32 %v961, 0.0
      %v1026 = vmax.f32 %v962, 0.0
      %v1027 = vmax.f32 %v963, 0.0
      %v1028 = vmax.f32 %v964, 0.0
      %v1029 = vmax.f32 %v965, 0.0
      %v1030 = vmax.f32 %v966, 0.0
      %v1031 = vmax.f32 %v967, 0.0
      %v1032 = vmax.f32 %v968, 0.0
      %v1033 = vmax.f32 %v969, 0.0
      %v1034 = vmax.f32 %v970, 0.0
      %v1035 = vmax.f32 %v971, 0.0
      %v1036 = vmax.f32 %v972, 0.0
      %v1037 = vmax.f32 %v973, 0.0
      %v1038 = vmax.f32 %v974, 0.0
      %v1039 = vmax.f32 %v975, 0.0
      %v1040 = vmax.f32 %v976, 0.0
      %v1041 = vmax.f32 %v977, 0.0
      %v1042 = vmax.f32 %v978, 0.0
      %v1043 = vmax.f32 %v979, 0.0
      %v1044 = vmax.f32 %v980, 0.0
      %v1045 = vmax.f32 %v981, 0.0
      %v1046 = vmax.f32 %v982, 0.0
      %v1047 = vmax.f32 %v983, 0.0
      %v1048 = vmax.f32 %v984, 0.0
      %v1049 = vmax.f32 %v985, 0.0
      %v1050 = vmax.f32 %v986, 0.0
      %v1051 = vmax.f32 %v987, 0.0
      %v1052 = vmax.f32 %v988, 0.0
      %v1053 = vmax.f32 %v989, 0.0
      %v1054 = vmax.f32 %v990, 0.0
      %v1055 = vmax.f32 %v991, 0.0
      %v1056 = vmax.f32 %v992, 0.0
      %v1057 = vmax.f32 %v993, 0.0
      %v1058 = vmax.f32 %v994, 0.0
      %v1059 = vmax.f32 %v995, 0.0
      %v1060 = vmax.f32 %v996, 0.0
      %v1061 = vmax.f32 %v997, 0.0
      %v1062 = vmax.f32 %v998, 0.0
      %v1063 = vmax.f32 %v999, 0.0
      %v1064 = vmax.f32 %v1000, 0.0
      %v1065 = vmax.f32 %v1001, 0.0
      %v1066 = vmax.f32 %v1002, 0.0
      %v1067 = vmax.f32 %v1003, 0.0
      %v1068 = vmax.f32 %v1004, 0.0
      %v1069 = vmax.f32 %v1005, 0.0
      %v1070 = vmax.f32 %v1006, 0.0
      %v1071 = vmax.f32 %v1007, 0.0
      %v1072 = vmax.f32 %v1008, 0.0
      %1073 = vst [vmem:[%s275] sm:$0xff] %v1009
      %1074 = vst [vmem:[%s275 + $0x8] sm:$0xff] %v1010
      %1075 = vst [vmem:[%s275 + $0x10] sm:$0xff] %v1011
      %1076 = vst [vmem:[%s275 + $0x18] sm:$0xff] %v1012
      %1077 = vst [vmem:[%s275 + $0x20] sm:$0xff] %v1013
      %1078 = vst [vmem:[%s275 + $0x28] sm:$0xff] %v1014
      %1079 = vst [vmem:[%s275 + $0x30] sm:$0xff] %v1015
      %1080 = vst [vmem:[%s275 + $0x38] sm:$0xff] %v1016
      %1081 = vst [vmem:[%s275 + $0x40] sm:$0xff] %v1017
      %1082 = vst [vmem:[%s275 + $0x48] sm:$0xff] %v1018
      %1083 = vst [vmem:[%s275 + $0x50] sm:$0xff] %v1019
      %1084 = vst [vmem:[%s275 + $0x58] sm:$0xff] %v1020
      %1085 = vst [vmem:[%s275 + $0x60] sm:$0xff] %v1021
      %1086 = vst [vmem:[%s275 + $0x68] sm:$0xff] %v1022
      %1087 = vst [vmem:[%s275 + $0x70] sm:$0xff] %v1023
      %1088 = vst [vmem:[%s275 + $0x78] sm:$0xff] %v1024
      %1089 = vst [vmem:[%s275 + $0x80] sm:$0xff] %v1025
      %1090 = vst [vmem:[%s275 + $0x88] sm:$0xff] %v1026
      %1091 = vst [vmem:[%s275 + $0x90] sm:$0xff] %v1027
      %1092 = vst [vmem:[%s275 + $0x98] sm:$0xff] %v1028
      %1093 = vst [vmem:[%s275 + $0xa0] sm:$0xff] %v1029
      %1094 = vst [vmem:[%s275 + $0xa8] sm:$0xff] %v1030
      %1095 = vst [vmem:[%s275 + $0xb0] sm:$0xff] %v1031
      %1096 = vst [vmem:[%s275 + $0xb8] sm:$0xff] %v1032
      %1097 = vst [vmem:[%s275 + $0xc0] sm:$0xff] %v1033
      %1098 = vst [vmem:[%s275 + $0xc8] sm:$0xff] %v1034
      %1099 = vst [vmem:[%s275 + $0xd0] sm:$0xff] %v1035
      %1100 = vst [vmem:[%s275 + $0xd8] sm:$0xff] %v1036
      %1101 = vst [vmem:[%s275 + $0xe0] sm:$0xff] %v1037
      %1102 = vst [vmem:[%s275 + $0xe8] sm:$0xff] %v1038
      %1103 = vst [vmem:[%s275 + $0xf0] sm:$0xff] %v1039
      %1104 = vst [vmem:[%s275 + $0xf8] sm:$0xff] %v1040
      %1105 = vst [vmem:[%s275 + $0x100] sm:$0xff] %v1041
      %1106 = vst [vmem:[%s275 + $0x108] sm:$0xff] %v1042
      %1107 = vst [vmem:[%s275 + $0x110] sm:$0xff] %v1043
      %1108 = vst [vmem:[%s275 + $0x118] sm:$0xff] %v1044
      %1109 = vst [vmem:[%s275 + $0x120] sm:$0xff] %v1045
      %1110 = vst [vmem:[%s275 + $0x128] sm:$0xff] %v1046
      %1111 = vst [vmem:[%s275 + $0x130] sm:$0xff] %v1047
      %1112 = vst [vmem:[%s275 + $0x138] sm:$0xff] %v1048
      %1113 = vst [vmem:[%s275 + $0x140] sm:$0xff] %v1049
      %1114 = vst [vmem:[%s275 + $0x148] sm:$0xff] %v1050
      %1115 = vst [vmem:[%s275 + $0x150] sm:$0xff] %v1051
      %1116 = vst [vmem:[%s275 + $0x158] sm:$0xff] %v1052
      %1117 = vst [vmem:[%s275 + $0x160] sm:$0xff] %v1053
      %1118 = vst [vmem:[%s275 + $0x168] sm:$0xff] %v1054
      %1119 = vst [vmem:[%s275 + $0x170] sm:$0xff] %v1055
      %1120 = vst [vmem:[%s275 + $0x178] sm:$0xff] %v1056
      %1121 = vst [vmem:[%s275 + $0x180] sm:$0xff] %v1057
      %1122 = vst [vmem:[%s275 + $0x188] sm:$0xff] %v1058
      %1123 = vst [vmem:[%s275 + $0x190] sm:$0xff] %v1059
      %1124 = vst [vmem:[%s275 + $0x198] sm:$0xff] %v1060
      %1125 = vst [vmem:[%s275 + $0x1a0] sm:$0xff] %v1061
      %1126 = vst [vmem:[%s275 + $0x1a8] sm:$0xff] %v1062
      %1127 = vst [vmem:[%s275 + $0x1b0] sm:$0xff] %v1063
      %1128 = vst [vmem:[%s275 + $0x1b8] sm:$0xff] %v1064
      %1129 = vst [vmem:[%s275 + $0x1c0] sm:$0xff] %v1065
      %1130 = vst [vmem:[%s275 + $0x1c8] sm:$0xff] %v1066
      %1131 = vst [vmem:[%s275 + $0x1d0] sm:$0xff] %v1067
      %1132 = vst [vmem:[%s275 + $0x1d8] sm:$0xff] %v1068
      %1133 = vst [vmem:[%s275 + $0x1e0] sm:$0xff] %v1069
      %1134 = vst [vmem:[%s275 + $0x1e8] sm:$0xff] %v1070
      %1135 = vst [vmem:[%s275 + $0x1f0] sm:$0xff] %v1071
      %1136 = vst [vmem:[%s275 + $0x1f8] sm:$0xff] %v1072
      %s1137 = smul.u32 64, %s17
      %p1138 = scmp.lt.s32.totalorder %s1137, 127
      %s1139 = scalar_select %p1138, %s1137, 127
      %s1140 = smul.addr %s1139, 8
      %s1141 = scalar_lea.vmem %s6, %s1140
      // Predicated region
      $region45: #{down_block_forward.7} parent=43 // pred_check
        %p1142 = pneg %p171
      $region46: #{down_block_forward.7} parent=43 // pred_check_branch
        %1144 = sbr.rel (%p1142) target = $region48
      $region47: #{down_block_forward.7} parent=43 // pred_region
        %s1145 = smul.u32 64, %s17
      $region48: #{down_block_forward.7} parent=43 // pred_fallthru
        _
    $region44: #{down_block_forward.7} parent=5 // pred_fallthru
      _
    %p1146 = scmp.le.s32.totalorder 2, %s12
    // Predicated region
    $region49: #{down_block_forward.7} parent=5 // pred_check
      %p1147 = pneg %p1146
    $region50: #{down_block_forward.7} parent=5 // pred_check_branch
      %1149 = sbr.rel (%p1147) target = $region52
    $region51: #{down_block_forward.7} parent=5 // pred_region
      %s1150 = ssub.s32 %s12, 2
      // Predicated region
      $region53: #{down_block_forward.7} parent=51 // pred_check
        %p1151 = pneg %p177
      $region54: #{down_block_forward.7} parent=51 // pred_check_branch
        %1153 = sbr.rel (%p1151) target = $region56
      $region55: #{down_block_forward.7} parent=51 // pred_region
        %s1154 = smul.u32 64, %s18
        %p1155 = scmp.lt.s32.totalorder %s1154, 127
        %s1156 = scalar_select %p1155, %s1154, 127
        %s1157 = smul.addr %s1156, 8
        %s1158 = scalar_lea.vmem %s6, %s1157
      $region56: #{down_block_forward.7} parent=51 // pred_fallthru
        _
    $region52: #{down_block_forward.7} parent=5 // pred_fallthru
      _
  $region6: #{down_block_forward.7} parent=0 // loop_footer
    %s16 = sadd.s32 1, %s12
  $region7: #{down_block_forward.7} parent=0 // loop_footer_branch
    %11 = sbr.rel target = $region3
  $region8: #{down_block_forward.7} parent=0 // loop_exit
    _

// kernel: down_block_forward.5
$region0: #{down_block_forward.5}
  #allocation0 [shape = 'u32[]', space=smem, size = 0x4, offset = 0x4, fixed_abs, tag = 'smem constant byte address 0x4 - core index']
  #allocation1 [shape = 'u32[144,128]{1,0:T(1,128)}', space=vmem, size = 0x12000, scoped, tag = 'internal scratch']
  %s0 = inlined_call_operand.vmem [shape: bf16[1024,256], index: 0, kind: input, shape index: {}]
  %s1 = inlined_call_operand.vmem [shape: bf16[256,128], index: 1, kind: input, shape index: {}]
  %s2 = inlined_call_operand.vmem [shape: f32[1,256], index: 2, kind: input, shape index: {}]
  %s3 = inlined_call_operand.vmem [shape: f32[1,256], index: 3, kind: input, shape index: {}]
  %s4 = inlined_call_operand.vmem [shape: bf16[1024,128], index: 4, kind: output, shape index: {0}]
  %s5 = inlined_call_operand.vmem [shape: f32[32,128], index: 5, kind: output, shape index: {1}]
  %6 = xla_tuple %s4, %s5
  %s7 = sld [smem:[#allocation0]]
  $region57: #{down_block_forward.5} parent=0
    _
  %s9 = ssub.s32 1, %s7
  %s10 = scalar_select 0, %s9, %s7
  loop: start=0, step=1, limit=6
  $region2: #{down_block_forward.5} parent=0 // loop_pre_header
    _
  $region3: #{down_block_forward.5} parent=0 // loop_header
    %s12 = sphi 0, %s16
    %p13 = scmp.ge.s32.totalorder %s12, 6
    %s19 = sphi 0, %s31
    %s20 = sphi 0, %s27
    %s21 = sphi 0, %s19
    %s22 = sphi 0, %s20
    %s23 = sphi 0, %s21
    %s24 = sphi 0, %s22
    %s34 = sphi 0, %s36
    %s37 = sphi 0, %s34
    %s38 = sphi 0, %s37
    %s54 = sphi 0, %s38
    %s60 = sphi 0, %s62
    %s63 = sphi 0, %s60
    %s64 = sphi 0, %s63
    %s80 = sphi 0, %s64
    %s84 = sphi 0, %s84
    %s86 = sphi 0, %s84
    %s87 = sphi 0, %s86
    %s101 = sphi 0, %s87
    %s105 = sphi 0, %s105
    %s107 = sphi 0, %s105
    %s108 = sphi 0, %s107
    %s122 = sphi 0, %s108
    %s130 = sphi 0, %s132
    %s133 = sphi 0, %s130
    %s134 = sphi 0, %s133
    %s150 = sphi 0, %s134
    %s158 = sphi 0, %s160
    %s161 = sphi 0, %s158
    %s162 = sphi 0, %s161
    %s178 = sphi 0, %s162
  $region4: #{down_block_forward.5} parent=0 // loop_header_branch
    %15 = sbr.rel (%p13) target = $region8
  $region5: #{down_block_forward.5} parent=0 // loop_body
    %s17 = ssub.s32 %s12, 1
    %s18 = ssub.s32 %s12, 2
    %s25 = sadd.s32 1, %s20
    %p26 = scmp.ge.s32.totalorder %s25, 4
    %s27 = scalar_select %p26, 0, %s25
    %s28 = sadd.s32 1, %s19
    %s29 = scalar_select %p26, %s28, %s19
    %p30 = scmp.ge.s32.totalorder %s29, 1
    %s31 = scalar_select %p30, 0, %s29
    %s32 = ssub.s32 %s20, %s27
    %p33 = scmp.eq.s32.totalorder %s32, 0
    %s35 = sadd.s32 %s34, 1
    %s36 = scalar_select %p33, %s34, %s35
    %p39 = pneg %p33
    %p40 = scmp.eq.s32.totalorder %s12, 3
    %p41 = por %p39, %p40
    %p42 = scmp.ne.s32.totalorder %s34, %s37
    %p43 = scmp.eq.s32.totalorder %s12, 0
    %p44 = por %p42, %p43
    %p45 = scmp.ne.s32.totalorder %s34, %s37
    %p46 = scmp.eq.s32.totalorder %s17, 3
    %p47 = por %p45, %p46
    %p48 = scmp.ne.s32.totalorder %s37, %s38
    %p49 = scmp.eq.s32.totalorder %s17, 0
    %p50 = por %p48, %p49
    %p51 = scmp.ne.s32.totalorder %s37, %s38
    %p52 = scmp.eq.s32.totalorder %s18, 3
    %p53 = por %p51, %p52
    %p55 = scmp.ne.s32.totalorder %s38, %s54
    %p56 = scmp.eq.s32.totalorder %s18, 0
    %p57 = por %p55, %p56
    %s58 = ssub.s32 %s19, %s31
    %p59 = scmp.eq.s32.totalorder %s58, 0
    %s61 = sadd.s32 %s60, 1
    %s62 = scalar_select %p59, %s60, %s61
    %p65 = pneg %p59
    %p66 = scmp.eq.s32.totalorder %s12, 3
    %p67 = por %p65, %p66
    %p68 = scmp.ne.s32.totalorder %s60, %s63
    %p69 = scmp.eq.s32.totalorder %s12, 0
    %p70 = por %p68, %p69
    %p71 = scmp.ne.s32.totalorder %s60, %s63
    %p72 = scmp.eq.s32.totalorder %s17, 3
    %p73 = por %p71, %p72
    %p74 = scmp.ne.s32.totalorder %s63, %s64
    %p75 = scmp.eq.s32.totalorder %s17, 0
    %p76 = por %p74, %p75
    %p77 = scmp.ne.s32.totalorder %s63, %s64
    %p78 = scmp.eq.s32.totalorder %s18, 3
    %p79 = por %p77, %p78
    %p81 = scmp.ne.s32.totalorder %s64, %s80
    %p82 = scmp.eq.s32.totalorder %s18, 0
    %p83 = por %p81, %p82
    %s85 = sadd.s32 %s84, 1
    %p88 = scmp.eq.s32.totalorder %s12, 3
    %p89 = scmp.ne.s32.totalorder %s84, %s86
    %p90 = scmp.eq.s32.totalorder %s12, 0
    %p91 = por %p89, %p90
    %p92 = scmp.ne.s32.totalorder %s84, %s86
    %p93 = scmp.eq.s32.totalorder %s17, 3
    %p94 = por %p92, %p93
    %p95 = scmp.ne.s32.totalorder %s86, %s87
    %p96 = scmp.eq.s32.totalorder %s17, 0
    %p97 = por %p95, %p96
    %p98 = scmp.ne.s32.totalorder %s86, %s87
    %p99 = scmp.eq.s32.totalorder %s18, 3
    %p100 = por %p98, %p99
    %p102 = scmp.ne.s32.totalorder %s87, %s101
    %p103 = scmp.eq.s32.totalorder %s18, 0
    %p104 = por %p102, %p103
    %s106 = sadd.s32 %s105, 1
    %p109 = scmp.eq.s32.totalorder %s12, 3
    %p110 = scmp.ne.s32.totalorder %s105, %s107
    %p111 = scmp.eq.s32.totalorder %s12, 0
    %p112 = por %p110, %p111
    %p113 = scmp.ne.s32.totalorder %s105, %s107
    %p114 = scmp.eq.s32.totalorder %s17, 3
    %p115 = por %p113, %p114
    %p116 = scmp.ne.s32.totalorder %s107, %s108
    %p117 = scmp.eq.s32.totalorder %s17, 0
    %p118 = por %p116, %p117
    %p119 = scmp.ne.s32.totalorder %s107, %s108
    %p120 = scmp.eq.s32.totalorder %s18, 3
    %p121 = por %p119, %p120
    %p123 = scmp.ne.s32.totalorder %s108, %s122
    %p124 = scmp.eq.s32.totalorder %s18, 0
    %p125 = por %p123, %p124
    %s126 = ssub.s32 %s20, %s27
    %s127 = ssub.s32 %s19, %s31
    %s128 = sor.u32 %s126, %s127
    %p129 = scmp.eq.s32.totalorder %s128, 0
    %s131 = sadd.s32 %s130, 1
    %s132 = scalar_select %p129, %s130, %s131
    %p135 = pneg %p129
    %p136 = scmp.eq.s32.totalorder %s12, 3
    %p137 = por %p135, %p136
    %p138 = scmp.ne.s32.totalorder %s130, %s133
    %p139 = scmp.eq.s32.totalorder %s12, 0
    %p140 = por %p138, %p139
    %p141 = scmp.ne.s32.totalorder %s130, %s133
    %p142 = scmp.eq.s32.totalorder %s17, 3
    %p143 = por %p141, %p142
    %p144 = scmp.ne.s32.totalorder %s133, %s134
    %p145 = scmp.eq.s32.totalorder %s17, 0
    %p146 = por %p144, %p145
    %p147 = scmp.ne.s32.totalorder %s133, %s134
    %p148 = scmp.eq.s32.totalorder %s18, 3
    %p149 = por %p147, %p148
    %p151 = scmp.ne.s32.totalorder %s134, %s150
    %p152 = scmp.eq.s32.totalorder %s18, 0
    %p153 = por %p151, %p152
    %s154 = ssub.s32 %s20, %s27
    %s155 = ssub.s32 %s19, %s31
    %s156 = sor.u32 %s154, %s155
    %p157 = scmp.eq.s32.totalorder %s156, 0
    %s159 = sadd.s32 %s158, 1
    %s160 = scalar_select %p157, %s158, %s159
    %p163 = pneg %p157
    %p164 = scmp.eq.s32.totalorder %s12, 3
    %p165 = por %p163, %p164
    %p166 = scmp.ne.s32.totalorder %s158, %s161
    %p167 = scmp.eq.s32.totalorder %s12, 0
    %p168 = por %p166, %p167
    %p169 = scmp.ne.s32.totalorder %s158, %s161
    %p170 = scmp.eq.s32.totalorder %s17, 3
    %p171 = por %p169, %p170
    %p172 = scmp.ne.s32.totalorder %s161, %s162
    %p173 = scmp.eq.s32.totalorder %s17, 0
    %p174 = por %p172, %p173
    %p175 = scmp.ne.s32.totalorder %s161, %s162
    %p176 = scmp.eq.s32.totalorder %s18, 3
    %p177 = por %p175, %p176
    %p179 = scmp.ne.s32.totalorder %s162, %s178
    %p180 = scmp.eq.s32.totalorder %s18, 0
    %p181 = por %p179, %p180
    %p182 = scmp.le.s32.totalorder 1, %s12
    %p183 = scmp.lt.s32.totalorder %s12, 5
    %p184 = pnand %p182, %p183
    %p185 = pneg %p184
    // Predicated region
    $region9: #{down_block_forward.5} parent=5 // pred_check
      _
    $region10: #{down_block_forward.5} parent=5 // pred_check_branch
      %187 = sbr.rel (%p184) target = $region12
    $region11: #{down_block_forward.5} parent=5 // pred_region
      %s188 = ssub.s32 %s12, 1
      // Predicated region
      $region13: #{down_block_forward.5} parent=11 // pred_check
        %p189 = pneg %p76
      $region14: #{down_block_forward.5} parent=11 // pred_check_branch
        %191 = sbr.rel (%p189) target = $region16
      $region15: #{down_block_forward.5} parent=11 // pred_region
        %p192 = scmp.lt.s32.totalorder %s21, 0
        %s193 = scalar_select %p192, %s21, 0
        %s194 = smul.addr %s193, 4
        %s195 = scalar_lea.vmem %s1, %s194
      $region16: #{down_block_forward.5} parent=11 // pred_fallthru
        _
      // Predicated region
      $region17: #{down_block_forward.5} parent=11 // pred_check
        %p196 = pneg %p97
      $region18: #{down_block_forward.5} parent=11 // pred_check_branch
        %198 = sbr.rel (%p196) target = $region20
      $region19: #{down_block_forward.5} parent=11 // pred_region
        _
      $region20: #{down_block_forward.5} parent=11 // pred_fallthru
        _
      // Predicated region
      $region21: #{down_block_forward.5} parent=11 // pred_check
        %p199 = pneg %p118
      $region22: #{down_block_forward.5} parent=11 // pred_check_branch
        %201 = sbr.rel (%p199) target = $region24
      $region23: #{down_block_forward.5} parent=11 // pred_region
        _
      $region24: #{down_block_forward.5} parent=11 // pred_fallthru
        _
    $region12: #{down_block_forward.5} parent=5 // pred_fallthru
      _
    %p202 = scmp.lt.s32.totalorder %s12, 4
    // Predicated region
    $region25: #{down_block_forward.5} parent=5 // pred_check
      %p203 = pneg %p202
    $region26: #{down_block_forward.5} parent=5 // pred_check_branch
      %205 = sbr.rel (%p203) target = $region28
    $region27: #{down_block_forward.5} parent=5 // pred_region
      // Predicated region
      $region29: #{down_block_forward.5} parent=27 // pred_check
        %p206 = pneg %p44
      $region30: #{down_block_forward.5} parent=27 // pred_check_branch
        %208 = sbr.rel (%p206) target = $region32
      $region31: #{down_block_forward.5} parent=27 // pred_region
        %s209 = smul.u32 32, %s20
        %p210 = scmp.lt.s32.totalorder %s209, 127
        %s211 = scalar_select %p210, %s209, 127
        %s212 = smul.addr %s211, 2
        %s213 = smul.addr %s212, 4
        %s214 = scalar_lea.vmem %s0, %s213
        %s215 = smul.u32 32, %s20
      $region32: #{down_block_forward.5} parent=27 // pred_fallthru
        _
    $region28: #{down_block_forward.5} parent=5 // pred_fallthru
      _
    %p216 = scmp.le.s32.totalorder 1, %s12
    %p217 = scmp.lt.s32.totalorder %s12, 5
    %p218 = pnand %p216, %p217
    %p219 = pneg %p218
    // Predicated region
    $region33: #{down_block_forward.5} parent=5 // pred_check
      _
    $region34: #{down_block_forward.5} parent=5 // pred_check_branch
      %221 = sbr.rel (%p218) target = $region36
    $region35: #{down_block_forward.5} parent=5 // pred_region
      %s222 = ssub.s32 %s12, 1
      %s223 = smul.u32 32, %s22
      %p224 = scmp.lt.s32.totalorder %s223, 127
      %s225 = scalar_select %p224, %s223, 127
      %s226 = smul.addr %s225, 2
      %s227 = smul.addr %s226, 4
      %s228 = scalar_lea.vmem %s0, %s227
      %p229 = pneg %p50
      %p230 = pneg %p47
      %p231 = scmp.lt.s32.totalorder %s21, 0
      %s232 = scalar_select %p231, %s21, 0
      %s233 = smul.addr %s232, 4
      %s234 = scalar_lea.vmem %s1, %s233
      %p235 = pneg %p76
      %p236 = pneg %p73
      %p237 = pneg %p97
      %p238 = pneg %p94
      %p239 = pneg %p118
      %p240 = pneg %p115
      %p241 = pneg %p146
      %p242 = pneg %p143
      %s243 = smul.u32 32, %s22
      %p244 = scmp.lt.s32.totalorder %s243, 127
      %s245 = scalar_select %p244, %s243, 127
      %p246 = scmp.lt.s32.totalorder %s21, 0
      %s247 = scalar_select %p246, %s21, 0
      %s248 = sadd.s32 %s247, %s245
      %s249 = smul.addr %s248, 4
      %s250 = scalar_lea.vmem %s4, %s249
      %p251 = pneg %p174
      %p252 = pneg %p171
      %p253 = scmp.lt.s32.totalorder %s22, 3
      %s254 = scalar_select %p253, %s22, 3
      %p255 = scmp.lt.s32.totalorder %s21, 0
      %s256 = scalar_select %p255, %s21, 0
      %s257 = sadd.s32 %s256, %s254
      %s258 = smul.addr %s257, 8
      %s259 = scalar_lea.vmem %s5, %s258
      %s260 = smul.u32 32, %s22
      %p261 = scmp.lt.s32.totalorder %s260, 127
      %s262 = scalar_select %p261, %s260, 127
      %s263 = smul.addr %s262, 2
      %s264 = smul.addr %s263, 4
      %s265 = scalar_lea.vmem %s0, %s264
      %s266 = smul.u32 32, %s22
      %p267 = scmp.lt.s32.totalorder %s21, 0
      %s268 = scalar_select %p267, %s21, 0
      %s269 = smul.addr %s268, 4
      %s270 = scalar_lea.vmem %s1, %s269
      %s271 = smul.u32 32, %s22
      %p272 = scmp.lt.s32.totalorder %s271, 127
      %s273 = scalar_select %p272, %s271, 127
      %p274 = scmp.lt.s32.totalorder %s21, 0
      %s275 = scalar_select %p274, %s21, 0
      %s276 = sadd.s32 %s275, %s273
      %s277 = smul.addr %s276, 4
      %s278 = scalar_lea.vmem %s4, %s277
      %s279 = smul.u32 32, %s22
      %p280 = scmp.lt.s32.totalorder %s22, 3
      %s281 = scalar_select %p280, %s22, 3
      %p282 = scmp.lt.s32.totalorder %s21, 0
      %s283 = scalar_select %p282, %s21, 0
      %s284 = sadd.s32 %s283, %s281
      %s285 = smul.addr %s284, 8
      %s286 = scalar_lea.vmem %s5, %s285
      %v288 = vld [vmem:[%s265] sm:$0xff]
      %v289 = vld [vmem:[%s265 + $0x8] sm:$0xff]
      %v290 = vld [vmem:[%s265 + $0x10] sm:$0xff]
      %v291 = vld [vmem:[%s265 + $0x18] sm:$0xff]
      %v292 = vld [vmem:[%s265 + $0x20] sm:$0xff]
      %v293 = vld [vmem:[%s265 + $0x28] sm:$0xff]
      %v294 = vld [vmem:[%s265 + $0x30] sm:$0xff]
      %v295 = vld [vmem:[%s265 + $0x38] sm:$0xff]
      %v296 = vld [vmem:[%s265 + $0x40] sm:$0xff]
      %v297 = vld [vmem:[%s265 + $0x48] sm:$0xff]
      %v298 = vld [vmem:[%s265 + $0x50] sm:$0xff]
      %v299 = vld [vmem:[%s265 + $0x58] sm:$0xff]
      %v300 = vld [vmem:[%s265 + $0x60] sm:$0xff]
      %v301 = vld [vmem:[%s265 + $0x68] sm:$0xff]
      %v302 = vld [vmem:[%s265 + $0x70] sm:$0xff]
      %v303 = vld [vmem:[%s265 + $0x78] sm:$0xff]
      %v304 = vld [vmem:[%s265 + $0x80] sm:$0xff]
      %v305 = vld [vmem:[%s265 + $0x88] sm:$0xff]
      %v306 = vld [vmem:[%s265 + $0x90] sm:$0xff]
      %v307 = vld [vmem:[%s265 + $0x98] sm:$0xff]
      %v308 = vld [vmem:[%s265 + $0xa0] sm:$0xff]
      %v309 = vld [vmem:[%s265 + $0xa8] sm:$0xff]
      %v310 = vld [vmem:[%s265 + $0xb0] sm:$0xff]
      %v311 = vld [vmem:[%s265 + $0xb8] sm:$0xff]
      %v312 = vld [vmem:[%s265 + $0xc0] sm:$0xff]
      %v313 = vld [vmem:[%s265 + $0xc8] sm:$0xff]
      %v314 = vld [vmem:[%s265 + $0xd0] sm:$0xff]
      %v315 = vld [vmem:[%s265 + $0xd8] sm:$0xff]
      %v316 = vld [vmem:[%s265 + $0xe0] sm:$0xff]
      %v317 = vld [vmem:[%s265 + $0xe8] sm:$0xff]
      %v318 = vld [vmem:[%s265 + $0xf0] sm:$0xff]
      %v319 = vld [vmem:[%s265 + $0xf8] sm:$0xff]
      %v320 = vunpack.c.l.bf16 %v288
      %v321 = vunpack.c.h.bf16 %v288
      %v322 = vunpack.c.l.bf16 %v289
      %v323 = vunpack.c.h.bf16 %v289
      %v324 = vunpack.c.l.bf16 %v290
      %v325 = vunpack.c.h.bf16 %v290
      %v326 = vunpack.c.l.bf16 %v291
      %v327 = vunpack.c.h.bf16 %v291
      %v328 = vunpack.c.l.bf16 %v292
      %v329 = vunpack.c.h.bf16 %v292
      %v330 = vunpack.c.l.bf16 %v293
      %v331 = vunpack.c.h.bf16 %v293
      %v332 = vunpack.c.l.bf16 %v294
      %v333 = vunpack.c.h.bf16 %v294
      %v334 = vunpack.c.l.bf16 %v295
      %v335 = vunpack.c.h.bf16 %v295
      %v336 = vunpack.c.l.bf16 %v296
      %v337 = vunpack.c.h.bf16 %v296
      %v338 = vunpack.c.l.bf16 %v297
      %v339 = vunpack.c.h.bf16 %v297
      %v340 = vunpack.c.l.bf16 %v298
      %v341 = vunpack.c.h.bf16 %v298
      %v342 = vunpack.c.l.bf16 %v299
      %v343 = vunpack.c.h.bf16 %v299
      %v344 = vunpack.c.l.bf16 %v300
      %v345 = vunpack.c.h.bf16 %v300
      %v346 = vunpack.c.l.bf16 %v301
      %v347 = vunpack.c.h.bf16 %v301
      %v348 = vunpack.c.l.bf16 %v302
      %v349 = vunpack.c.h.bf16 %v302
      %v350 = vunpack.c.l.bf16 %v303
      %v351 = vunpack.c.h.bf16 %v303
      %v352 = vunpack.c.l.bf16 %v304
      %v353 = vunpack.c.h.bf16 %v304
      %v354 = vunpack.c.l.bf16 %v305
      %v355 = vunpack.c.h.bf16 %v305
      %v356 = vunpack.c.l.bf16 %v306
      %v357 = vunpack.c.h.bf16 %v306
      %v358 = vunpack.c.l.bf16 %v307
      %v359 = vunpack.c.h.bf16 %v307
      %v360 = vunpack.c.l.bf16 %v308
      %v361 = vunpack.c.h.bf16 %v308
      %v362 = vunpack.c.l.bf16 %v309
      %v363 = vunpack.c.h.bf16 %v309
      %v364 = vunpack.c.l.bf16 %v310
      %v365 = vunpack.c.h.bf16 %v310
      %v366 = vunpack.c.l.bf16 %v311
      %v367 = vunpack.c.h.bf16 %v311
      %v368 = vunpack.c.l.bf16 %v312
      %v369 = vunpack.c.h.bf16 %v312
      %v370 = vunpack.c.l.bf16 %v313
      %v371 = vunpack.c.h.bf16 %v313
      %v372 = vunpack.c.l.bf16 %v314
      %v373 = vunpack.c.h.bf16 %v314
      %v374 = vunpack.c.l.bf16 %v315
      %v375 = vunpack.c.h.bf16 %v315
      %v376 = vunpack.c.l.bf16 %v316
      %v377 = vunpack.c.h.bf16 %v316
      %v378 = vunpack.c.l.bf16 %v317
      %v379 = vunpack.c.h.bf16 %v317
      %v380 = vunpack.c.l.bf16 %v318
      %v381 = vunpack.c.h.bf16 %v318
      %v382 = vunpack.c.l.bf16 %v319
      %v383 = vunpack.c.h.bf16 %v319
      %v384 = vld [vmem:[%s2] sm:$0x3]
      %v386 = vlaneseq
      %v387 = vshrl.u32 %v386, 7
      %v388 = vsub.s32 0, %v387
      %v389 = vrot.slane %v384, %v388
      %v390 = vlaneseq
      %v391 = vshrl.u32 %v390, 7
      %v392 = vsub.s32 1, %v391
      %v393 = vrot.slane %v384, %v392
      %v396 = vmul.f32 %v320, %v389
      %v397 = vmul.f32 %v321, %v393
      %v398 = vmul.f32 %v322, %v389
      %v399 = vmul.f32 %v323, %v393
      %v400 = vmul.f32 %v324, %v389
      %v401 = vmul.f32 %v325, %v393
      %v402 = vmul.f32 %v326, %v389
      %v403 = vmul.f32 %v327, %v393
      %v404 = vmul.f32 %v328, %v389
      %v405 = vmul.f32 %v329, %v393
      %v406 = vmul.f32 %v330, %v389
      %v407 = vmul.f32 %v331, %v393
      %v408 = vmul.f32 %v332, %v389
      %v409 = vmul.f32 %v333, %v393
      %v410 = vmul.f32 %v334, %v389
      %v411 = vmul.f32 %v335, %v393
      %v412 = vmul.f32 %v336, %v389
      %v413 = vmul.f32 %v337, %v393
      %v414 = vmul.f32 %v338, %v389
      %v415 = vmul.f32 %v339, %v393
      %v416 = vmul.f32 %v340, %v389
      %v417 = vmul.f32 %v341, %v393
      %v418 = vmul.f32 %v342, %v389
      %v419 = vmul.f32 %v343, %v393
      %v420 = vmul.f32 %v344, %v389
      %v421 = vmul.f32 %v345, %v393
      %v422 = vmul.f32 %v346, %v389
      %v423 = vmul.f32 %v347, %v393
      %v424 = vmul.f32 %v348, %v389
      %v425 = vmul.f32 %v349, %v393
      %v426 = vmul.f32 %v350, %v389
      %v427 = vmul.f32 %v351, %v393
      %v428 = vmul.f32 %v352, %v389
      %v429 = vmul.f32 %v353, %v393
      %v430 = vmul.f32 %v354, %v389
      %v431 = vmul.f32 %v355, %v393
      %v432 = vmul.f32 %v356, %v389
      %v433 = vmul.f32 %v357, %v393
      %v434 = vmul.f32 %v358, %v389
      %v435 = vmul.f32 %v359, %v393
      %v436 = vmul.f32 %v360, %v389
      %v437 = vmul.f32 %v361, %v393
      %v438 = vmul.f32 %v362, %v389
      %v439 = vmul.f32 %v363, %v393
      %v440 = vmul.f32 %v364, %v389
      %v441 = vmul.f32 %v365, %v393
      %v442 = vmul.f32 %v366, %v389
      %v443 = vmul.f32 %v367, %v393
      %v444 = vmul.f32 %v368, %v389
      %v445 = vmul.f32 %v369, %v393
      %v446 = vmul.f32 %v370, %v389
      %v447 = vmul.f32 %v371, %v393
      %v448 = vmul.f32 %v372, %v389
      %v449 = vmul.f32 %v373, %v393
      %v450 = vmul.f32 %v374, %v389
      %v451 = vmul.f32 %v375, %v393
      %v452 = vmul.f32 %v376, %v389
      %v453 = vmul.f32 %v377, %v393
      %v454 = vmul.f32 %v378, %v389
      %v455 = vmul.f32 %v379, %v393
      %v456 = vmul.f32 %v380, %v389
      %v457 = vmul.f32 %v381, %v393
      %v458 = vmul.f32 %v382, %v389
      %v459 = vmul.f32 %v383, %v393
      %v460 = vld [vmem:[%s3] sm:$0x3]
      %v462 = vlaneseq
      %v463 = vshrl.u32 %v462, 7
      %v464 = vsub.s32 0, %v463
      %v465 = vrot.slane %v460, %v464
      %v466 = vlaneseq
      %v467 = vshrl.u32 %v466, 7
      %v468 = vsub.s32 1, %v467
      %v469 = vrot.slane %v460, %v468
      %v472 = vadd.f32 %v396, %v465
      %v473 = vadd.f32 %v397, %v469
      %v474 = vadd.f32 %v398, %v465
      %v475 = vadd.f32 %v399, %v469
      %v476 = vadd.f32 %v400, %v465
      %v477 = vadd.f32 %v401, %v469
      %v478 = vadd.f32 %v402, %v465
      %v479 = vadd.f32 %v403, %v469
      %v480 = vadd.f32 %v404, %v465
      %v481 = vadd.f32 %v405, %v469
      %v482 = vadd.f32 %v406, %v465
      %v483 = vadd.f32 %v407, %v469
      %v484 = vadd.f32 %v408, %v465
      %v485 = vadd.f32 %v409, %v469
      %v486 = vadd.f32 %v410, %v465
      %v487 = vadd.f32 %v411, %v469
      %v488 = vadd.f32 %v412, %v465
      %v489 = vadd.f32 %v413, %v469
      %v490 = vadd.f32 %v414, %v465
      %v491 = vadd.f32 %v415, %v469
      %v492 = vadd.f32 %v416, %v465
      %v493 = vadd.f32 %v417, %v469
      %v494 = vadd.f32 %v418, %v465
      %v495 = vadd.f32 %v419, %v469
      %v496 = vadd.f32 %v420, %v465
      %v497 = vadd.f32 %v421, %v469
      %v498 = vadd.f32 %v422, %v465
      %v499 = vadd.f32 %v423, %v469
      %v500 = vadd.f32 %v424, %v465
      %v501 = vadd.f32 %v425, %v469
      %v502 = vadd.f32 %v426, %v465
      %v503 = vadd.f32 %v427, %v469
      %v504 = vadd.f32 %v428, %v465
      %v505 = vadd.f32 %v429, %v469
      %v506 = vadd.f32 %v430, %v465
      %v507 = vadd.f32 %v431, %v469
      %v508 = vadd.f32 %v432, %v465
      %v509 = vadd.f32 %v433, %v469
      %v510 = vadd.f32 %v434, %v465
      %v511 = vadd.f32 %v435, %v469
      %v512 = vadd.f32 %v436, %v465
      %v513 = vadd.f32 %v437, %v469
      %v514 = vadd.f32 %v438, %v465
      %v515 = vadd.f32 %v439, %v469
      %v516 = vadd.f32 %v440, %v465
      %v517 = vadd.f32 %v441, %v469
      %v518 = vadd.f32 %v442, %v465
      %v519 = vadd.f32 %v443, %v469
      %v520 = vadd.f32 %v444, %v465
      %v521 = vadd.f32 %v445, %v469
      %v522 = vadd.f32 %v446, %v465
      %v523 = vadd.f32 %v447, %v469
      %v524 = vadd.f32 %v448, %v465
      %v525 = vadd.f32 %v449, %v469
      %v526 = vadd.f32 %v450, %v465
      %v527 = vadd.f32 %v451, %v469
      %v528 = vadd.f32 %v452, %v465
      %v529 = vadd.f32 %v453, %v469
      %v530 = vadd.f32 %v454, %v465
      %v531 = vadd.f32 %v455, %v469
      %v532 = vadd.f32 %v456, %v465
      %v533 = vadd.f32 %v457, %v469
      %v534 = vadd.f32 %v458, %v465
      %v535 = vadd.f32 %v459, %v469
      %v536 = vmax.f32 %v472, 0.0
      %v537 = vmax.f32 %v473, 0.0
      %v538 = vmax.f32 %v474, 0.0
      %v539 = vmax.f32 %v475, 0.0
      %v540 = vmax.f32 %v476, 0.0
      %v541 = vmax.f32 %v477, 0.0
      %v542 = vmax.f32 %v478, 0.0
      %v543 = vmax.f32 %v479, 0.0
      %v544 = vmax.f32 %v480, 0.0
      %v545 = vmax.f32 %v481, 0.0
      %v546 = vmax.f32 %v482, 0.0
      %v547 = vmax.f32 %v483, 0.0
      %v548 = vmax.f32 %v484, 0.0
      %v549 = vmax.f32 %v485, 0.0
      %v550 = vmax.f32 %v486, 0.0
      %v551 = vmax.f32 %v487, 0.0
      %v552 = vmax.f32 %v488, 0.0
      %v553 = vmax.f32 %v489, 0.0
      %v554 = vmax.f32 %v490, 0.0
      %v555 = vmax.f32 %v491, 0.0
      %v556 = vmax.f32 %v492, 0.0
      %v557 = vmax.f32 %v493, 0.0
      %v558 = vmax.f32 %v494, 0.0
      %v559 = vmax.f32 %v495, 0.0
      %v560 = vmax.f32 %v496, 0.0
      %v561 = vmax.f32 %v497, 0.0
      %v562 = vmax.f32 %v498, 0.0
      %v563 = vmax.f32 %v499, 0.0
      %v564 = vmax.f32 %v500, 0.0
      %v565 = vmax.f32 %v501, 0.0
      %v566 = vmax.f32 %v502, 0.0
      %v567 = vmax.f32 %v503, 0.0
      %v568 = vmax.f32 %v504, 0.0
      %v569 = vmax.f32 %v505, 0.0
      %v570 = vmax.f32 %v506, 0.0
      %v571 = vmax.f32 %v507, 0.0
      %v572 = vmax.f32 %v508, 0.0
      %v573 = vmax.f32 %v509, 0.0
      %v574 = vmax.f32 %v510, 0.0
      %v575 = vmax.f32 %v511, 0.0
      %v576 = vmax.f32 %v512, 0.0
      %v577 = vmax.f32 %v513, 0.0
      %v578 = vmax.f32 %v514, 0.0
      %v579 = vmax.f32 %v515, 0.0
      %v580 = vmax.f32 %v516, 0.0
      %v581 = vmax.f32 %v517, 0.0
      %v582 = vmax.f32 %v518, 0.0
      %v583 = vmax.f32 %v519, 0.0
      %v584 = vmax.f32 %v520, 0.0
      %v585 = vmax.f32 %v521, 0.0
      %v586 = vmax.f32 %v522, 0.0
      %v587 = vmax.f32 %v523, 0.0
      %v588 = vmax.f32 %v524, 0.0
      %v589 = vmax.f32 %v525, 0.0
      %v590 = vmax.f32 %v526, 0.0
      %v591 = vmax.f32 %v527, 0.0
      %v592 = vmax.f32 %v528, 0.0
      %v593 = vmax.f32 %v529, 0.0
      %v594 = vmax.f32 %v530, 0.0
      %v595 = vmax.f32 %v531, 0.0
      %v596 = vmax.f32 %v532, 0.0
      %v597 = vmax.f32 %v533, 0.0
      %v598 = vmax.f32 %v534, 0.0
      %v599 = vmax.f32 %v535, 0.0
      %v600 = vpack.c.bf16 %v538, %v536
      %v601 = vpack.c.bf16 %v539, %v537
      %v602 = vpack.c.bf16 %v542, %v540
      %v603 = vpack.c.bf16 %v543, %v541
      %v604 = vpack.c.bf16 %v546, %v544
      %v605 = vpack.c.bf16 %v547, %v545
      %v606 = vpack.c.bf16 %v550, %v548
      %v607 = vpack.c.bf16 %v551, %v549
      %v608 = vpack.c.bf16 %v554, %v552
      %v609 = vpack.c.bf16 %v555, %v553
      %v610 = vpack.c.bf16 %v558, %v556
      %v611 = vpack.c.bf16 %v559, %v557
      %v612 = vpack.c.bf16 %v562, %v560
      %v613 = vpack.c.bf16 %v563, %v561
      %v614 = vpack.c.bf16 %v566, %v564
      %v615 = vpack.c.bf16 %v567, %v565
      %v616 = vpack.c.bf16 %v570, %v568
      %v617 = vpack.c.bf16 %v571, %v569
      %v618 = vpack.c.bf16 %v574, %v572
      %v619 = vpack.c.bf16 %v575, %v573
      %v620 = vpack.c.bf16 %v578, %v576
      %v621 = vpack.c.bf16 %v579, %v577
      %v622 = vpack.c.bf16 %v582, %v580
      %v623 = vpack.c.bf16 %v583, %v581
      %v624 = vpack.c.bf16 %v586, %v584
      %v625 = vpack.c.bf16 %v587, %v585
      %v626 = vpack.c.bf16 %v590, %v588
      %v627 = vpack.c.bf16 %v591, %v589
      %v628 = vpack.c.bf16 %v594, %v592
      %v629 = vpack.c.bf16 %v595, %v593
      %v630 = vpack.c.bf16 %v598, %v596
      %v631 = vpack.c.bf16 %v599, %v597
      %v632 = vld [vmem:[%s270] sm:$0xf]
      %v633 = vld [vmem:[%s270 + $0x4] sm:$0xf]
      %v634 = vld [vmem:[%s270 + $0x8] sm:$0xf]
      %v635 = vld [vmem:[%s270 + $0xc] sm:$0xf]
      %v636 = vld [vmem:[%s270 + $0x10] sm:$0xf]
      %v637 = vld [vmem:[%s270 + $0x14] sm:$0xf]
      %v638 = vld [vmem:[%s270 + $0x18] sm:$0xf]
      %v639 = vld [vmem:[%s270 + $0x1c] sm:$0xf]
      %v640 = vld [vmem:[%s270 + $0x20] sm:$0xf]
      %v641 = vld [vmem:[%s270 + $0x24] sm:$0xf]
      %v642 = vld [vmem:[%s270 + $0x28] sm:$0xf]
      %v643 = vld [vmem:[%s270 + $0x2c] sm:$0xf]
      %v644 = vld [vmem:[%s270 + $0x30] sm:$0xf]
      %v645 = vld [vmem:[%s270 + $0x34] sm:$0xf]
      %v646 = vld [vmem:[%s270 + $0x38] sm:$0xf]
      %v647 = vld [vmem:[%s270 + $0x3c] sm:$0xf]
      %v648 = vld [vmem:[%s270 + $0x40] sm:$0xf]
      %v649 = vld [vmem:[%s270 + $0x44] sm:$0xf]
      %v650 = vld [vmem:[%s270 + $0x48] sm:$0xf]
      %v651 = vld [vmem:[%s270 + $0x4c] sm:$0xf]
      %v652 = vld [vmem:[%s270 + $0x50] sm:$0xf]
      %v653 = vld [vmem:[%s270 + $0x54] sm:$0xf]
      %v654 = vld [vmem:[%s270 + $0x58] sm:$0xf]
      %v655 = vld [vmem:[%s270 + $0x5c] sm:$0xf]
      %v656 = vld [vmem:[%s270 + $0x60] sm:$0xf]
      %v657 = vld [vmem:[%s270 + $0x64] sm:$0xf]
      %v658 = vld [vmem:[%s270 + $0x68] sm:$0xf]
      %v659 = vld [vmem:[%s270 + $0x6c] sm:$0xf]
      %v660 = vld [vmem:[%s270 + $0x70] sm:$0xf]
      %v661 = vld [vmem:[%s270 + $0x74] sm:$0xf]
      %v662 = vld [vmem:[%s270 + $0x78] sm:$0xf]
      %v663 = vld [vmem:[%s270 + $0x7c] sm:$0xf]
      %v696 = vunpack.c.l.b16 %v632
      %v697 = vunpack.c.l.b16 %v633
      %v698 = vunpack.c.l.b16 %v634
      %v699 = vunpack.c.l.b16 %v635
      %v700 = vunpack.c.l.b16 %v636
      %v701 = vunpack.c.l.b16 %v637
      %v702 = vunpack.c.l.b16 %v638
      %v703 = vunpack.c.l.b16 %v639
      %v704 = vunpack.c.l.b16 %v640
      %v705 = vunpack.c.l.b16 %v641
      %v706 = vunpack.c.l.b16 %v642
      %v707 = vunpack.c.l.b16 %v643
      %v708 = vunpack.c.l.b16 %v644
      %v709 = vunpack.c.l.b16 %v645
      %v710 = vunpack.c.l.b16 %v646
      %v711 = vunpack.c.l.b16 %v647
      %v712 = vunpack.c.l.b16 %v648
      %v713 = vunpack.c.l.b16 %v649
      %v714 = vunpack.c.l.b16 %v650
      %v715 = vunpack.c.l.b16 %v651
      %v716 = vunpack.c.l.b16 %v652
      %v717 = vunpack.c.l.b16 %v653
      %v718 = vunpack.c.l.b16 %v654
      %v719 = vunpack.c.l.b16 %v655
      %v720 = vunpack.c.l.b16 %v656
      %v721 = vunpack.c.l.b16 %v657
      %v722 = vunpack.c.l.b16 %v658
      %v723 = vunpack.c.l.b16 %v659
      %v724 = vunpack.c.l.b16 %v660
      %v725 = vunpack.c.l.b16 %v661
      %v726 = vunpack.c.l.b16 %v662
      %v727 = vunpack.c.l.b16 %v663
      %v728 = vpack.c.b16 %v697, %v696
      %v729 = vpack.c.b16 %v699, %v698
      %v730 = vpack.c.b16 %v701, %v700
      %v731 = vpack.c.b16 %v703, %v702
      %v732 = vpack.c.b16 %v705, %v704
      %v733 = vpack.c.b16 %v707, %v706
      %v734 = vpack.c.b16 %v709, %v708
      %v735 = vpack.c.b16 %v711, %v710
      %v736 = vpack.c.b16 %v713, %v712
      %v737 = vpack.c.b16 %v715, %v714
      %v738 = vpack.c.b16 %v717, %v716
      %v739 = vpack.c.b16 %v719, %v718
      %v740 = vpack.c.b16 %v721, %v720
      %v741 = vpack.c.b16 %v723, %v722
      %v742 = vpack.c.b16 %v725, %v724
      %v743 = vpack.c.b16 %v727, %v726
      %760 = vmatprep.subr.bf16.mxu0 0
      %761 = vmatpush1.bf16.msra.mxu0 %v728
      %762 = vmatprep.subr.bf16.mxu0 0
      %763 = vmatpush1.bf16.msra.mxu0 %v729
      %764 = vmatprep.subr.bf16.mxu0 0
      %765 = vmatpush1.bf16.msra.mxu0 %v730
      %766 = vmatprep.subr.bf16.mxu0 0
      %767 = vmatpush1.bf16.msra.mxu0 %v731
      %768 = vmatprep.subr.bf16.mxu0 0
      %769 = vmatpush1.bf16.msra.mxu0 %v732
      %770 = vmatprep.subr.bf16.mxu0 0
      %771 = vmatpush1.bf16.msra.mxu0 %v733
      %772 = vmatprep.subr.bf16.mxu0 0
      %773 = vmatpush1.bf16.msra.mxu0 %v734
      %774 = vmatprep.subr.bf16.mxu0 0
      %775 = vmatpush1.bf16.msra.mxu0 %v735
      %776 = vmatprep.subr.bf16.mxu0 0
      %777 = vmatpush1.bf16.msra.mxu0 %v736
      %778 = vmatprep.subr.bf16.mxu0 0
      %779 = vmatpush1.bf16.msra.mxu0 %v737
      %780 = vmatprep.subr.bf16.mxu0 0
      %781 = vmatpush1.bf16.msra.mxu0 %v738
      %782 = vmatprep.subr.bf16.mxu0 0
      %783 = vmatpush1.bf16.msra.mxu0 %v739
      %784 = vmatprep.subr.bf16.mxu0 0
      %785 = vmatpush1.bf16.msra.mxu0 %v740
      %786 = vmatprep.subr.bf16.mxu0 0
      %787 = vmatpush1.bf16.msra.mxu0 %v741
      %788 = vmatprep.subr.bf16.mxu0 0
      %789 = vmatpush1.bf16.msra.mxu0 %v742
      %790 = vmatprep.subr.bf16.mxu0 0
      %791 = vmatpush1.bf16.msra.mxu0 %v743
      %792 = vmatprep.mubr.bf16.mxu0 %v601
      %793 = vmatmul.mubr.bf16.gmra.mrb[0].mxu0 %v600
      %v794 = vpop.f32.mrb[0].mxu0
      %v795 = vadd.f32 0.0, %v794
      %v796 = vpop.f32.mrb[0].mxu0
      %v797 = vpop.f32.mrb[0].mxu0
      %v798 = vadd.f32 0.0, %v797
      %v799 = vpop.f32.mrb[0].mxu0
      %800 = vmatprep.mubr.bf16.mxu0 %v603
      %801 = vmatmul.mubr.bf16.gmra.mrb[0].mxu0 %v602
      %v802 = vpop.f32.mrb[0].mxu0
      %v803 = vadd.f32 0.0, %v802
      %v804 = vpop.f32.mrb[0].mxu0
      %v805 = vpop.f32.mrb[0].mxu0
      %v806 = vadd.f32 0.0, %v805
      %v807 = vpop.f32.mrb[0].mxu0
      %808 = vmatprep.mubr.bf16.mxu0 %v605
      %809 = vmatmul.mubr.bf16.gmra.mrb[0].mxu0 %v604
      %v810 = vpop.f32.mrb[0].mxu0
      %v811 = vadd.f32 0.0, %v810
      %v812 = vpop.f32.mrb[0].mxu0
      %v813 = vpop.f32.mrb[0].mxu0
      %v814 = vadd.f32 0.0, %v813
      %v815 = vpop.f32.mrb[0].mxu0
      %816 = vmatprep.mubr.bf16.mxu0 %v607
      %817 = vmatmul.mubr.bf16.gmra.mrb[0].mxu0 %v606
      %v818 = vpop.f32.mrb[0].mxu0
      %v819 = vadd.f32 0.0, %v818
      %v820 = vpop.f32.mrb[0].mxu0
      %v821 = vpop.f32.mrb[0].mxu0
      %v822 = vadd.f32 0.0, %v821
      %v823 = vpop.f32.mrb[0].mxu0
      %824 = vmatprep.mubr.bf16.mxu0 %v609
      %825 = vmatmul.mubr.bf16.gmra.mrb[0].mxu0 %v608
      %v826 = vpop.f32.mrb[0].mxu0
      %v827 = vadd.f32 0.0, %v826
      %v828 = vpop.f32.mrb[0].mxu0
      %v829 = vpop.f32.mrb[0].mxu0
      %v830 = vadd.f32 0.0, %v829
      %v831 = vpop.f32.mrb[0].mxu0
      %832 = vmatprep.mubr.bf16.mxu0 %v611
      %833 = vmatmul.mubr.bf16.gmra.mrb[0].mxu0 %v610
      %v834 = vpop.f32.mrb[0].mxu0
      %v835 = vadd.f32 0.0, %v834
      %v836 = vpop.f32.mrb[0].mxu0
      %v837 = vpop.f32.mrb[0].mxu0
      %v838 = vadd.f32 0.0, %v837
      %v839 = vpop.f32.mrb[0].mxu0
      %840 = vmatprep.mubr.bf16.mxu0 %v613
      %841 = vmatmul.mubr.bf16.gmra.mrb[0].mxu0 %v612
      %v842 = vpop.f32.mrb[0].mxu0
      %v843 = vadd.f32 0.0, %v842
      %v844 = vpop.f32.mrb[0].mxu0
      %v845 = vpop.f32.mrb[0].mxu0
      %v846 = vadd.f32 0.0, %v845
      %v847 = vpop.f32.mrb[0].mxu0
      %848 = vmatprep.mubr.bf16.mxu0 %v615
      %849 = vmatmul.mubr.bf16.gmra.mrb[0].mxu0 %v614
      %v850 = vpop.f32.mrb[0].mxu0
      %v851 = vadd.f32 0.0, %v850
      %v852 = vpop.f32.mrb[0].mxu0
      %v853 = vpop.f32.mrb[0].mxu0
      %v854 = vadd.f32 0.0, %v853
      %v855 = vpop.f32.mrb[0].mxu0
      %856 = vmatprep.mubr.bf16.mxu0 %v617
      %857 = vmatmul.mubr.bf16.gmra.mrb[0].mxu0 %v616
      %v858 = vpop.f32.mrb[0].mxu0
      %v859 = vadd.f32 0.0, %v858
      %v860 = vpop.f32.mrb[0].mxu0
      %v861 = vpop.f32.mrb[0].mxu0
      %v862 = vadd.f32 0.0, %v861
      %v863 = vpop.f32.mrb[0].mxu0
      %864 = vmatprep.mubr.bf16.mxu0 %v619
      %865 = vmatmul.mubr.bf16.gmra.mrb[0].mxu0 %v618
      %v866 = vpop.f32.mrb[0].mxu0
      %v867 = vadd.f32 0.0, %v866
      %v868 = vpop.f32.mrb[0].mxu0
      %v869 = vpop.f32.mrb[0].mxu0
      %v870 = vadd.f32 0.0, %v869
      %v871 = vpop.f32.mrb[0].mxu0
      %872 = vmatprep.mubr.bf16.mxu0 %v621
      %873 = vmatmul.mubr.bf16.gmra.mrb[0].mxu0 %v620
      %v874 = vpop.f32.mrb[0].mxu0
      %v875 = vadd.f32 0.0, %v874
      %v876 = vpop.f32.mrb[0].mxu0
      %v877 = vpop.f32.mrb[0].mxu0
      %v878 = vadd.f32 0.0, %v877
      %v879 = vpop.f32.mrb[0].mxu0
      %880 = vmatprep.mubr.bf16.mxu0 %v623
      %881 = vmatmul.mubr.bf16.gmra.mrb[0].mxu0 %v622
      %v882 = vpop.f32.mrb[0].mxu0
      %v883 = vadd.f32 0.0, %v882
      %v884 = vpop.f32.mrb[0].mxu0
      %v885 = vpop.f32.mrb[0].mxu0
      %v886 = vadd.f32 0.0, %v885
      %v887 = vpop.f32.mrb[0].mxu0
      %888 = vmatprep.mubr.bf16.mxu0 %v625
      %889 = vmatmul.mubr.bf16.gmra.mrb[0].mxu0 %v624
      %v890 = vpop.f32.mrb[0].mxu0
      %v891 = vadd.f32 0.0, %v890
      %v892 = vpop.f32.mrb[0].mxu0
      %v893 = vpop.f32.mrb[0].mxu0
      %v894 = vadd.f32 0.0, %v893
      %v895 = vpop.f32.mrb[0].mxu0
      %896 = vmatprep.mubr.bf16.mxu0 %v627
      %897 = vmatmul.mubr.bf16.gmra.mrb[0].mxu0 %v626
      %v898 = vpop.f32.mrb[0].mxu0
      %v899 = vadd.f32 0.0, %v898
      %v900 = vpop.f32.mrb[0].mxu0
      %v901 = vpop.f32.mrb[0].mxu0
      %v902 = vadd.f32 0.0, %v901
      %v903 = vpop.f32.mrb[0].mxu0
      %904 = vmatprep.mubr.bf16.mxu0 %v629
      %905 = vmatmul.mubr.bf16.gmra.mrb[0].mxu0 %v628
      %v906 = vpop.f32.mrb[0].mxu0
      %v907 = vadd.f32 0.0, %v906
      %v908 = vpop.f32.mrb[0].mxu0
      %v909 = vpop.f32.mrb[0].mxu0
      %v910 = vadd.f32 0.0, %v909
      %v911 = vpop.f32.mrb[0].mxu0
      %912 = vmatprep.mubr.bf16.mxu0 %v631
      %913 = vmatmul.mubr.bf16.gmra.mrb[0].mxu0 %v630
      %v914 = vpop.f32.mrb[0].mxu0
      %v915 = vadd.f32 0.0, %v914
      %v916 = vpop.f32.mrb[0].mxu0
      %v917 = vpop.f32.mrb[0].mxu0
      %v918 = vadd.f32 0.0, %v917
      %v919 = vpop.f32.mrb[0].mxu0
      %920 = vdwg.mxu0
      %s921 = smul.u32 %s22, 256
      %v922 = vlaneseq
      %v923 = vshrl.u32 %v922, 7
      %v924 = vadd.s32 %v923, 8
      %v925 = vadd.s32 %v923, 16
      %v926 = vadd.s32 %v923, 24
      %v927 = vadd.s32 %v923, 32
      %v928 = vadd.s32 %v923, 40
      %v929 = vadd.s32 %v923, 48
      %v930 = vadd.s32 %v923, 56
      %v931 = vadd.s32 %v923, 64
      %v932 = vadd.s32 %v923, 72
      %v933 = vadd.s32 %v923, 80
      %v934 = vadd.s32 %v923, 88
      %v935 = vadd.s32 %v923, 96
      %v936 = vadd.s32 %v923, 104
      %v937 = vadd.s32 %v923, 112
      %v938 = vadd.s32 %v923, 120
      %v939 = vadd.s32 %v923, 128
      %v940 = vadd.s32 %v923, 136
      %v941 = vadd.s32 %v923, 144
      %v942 = vadd.s32 %v923, 152
      %v943 = vadd.s32 %v923, 160
      %v944 = vadd.s32 %v923, 168
      %v945 = vadd.s32 %v923, 176
      %v946 = vadd.s32 %v923, 184
      %v947 = vadd.s32 %v923, 192
      %v948 = vadd.s32 %v923, 200
      %v949 = vadd.s32 %v923, 208
      %v950 = vadd.s32 %v923, 216
      %v951 = vadd.s32 %v923, 224
      %v952 = vadd.s32 %v923, 232
      %v953 = vadd.s32 %v923, 240
      %v954 = vadd.s32 %v923, 248
      %v955 = vstv %s921
      %v956 = vadd.s32 %v955, %v923
      %v957 = vadd.s32 %v955, %v924
      %v958 = vadd.s32 %v955, %v925
      %v959 = vadd.s32 %v955, %v926
      %v960 = vadd.s32 %v955, %v927
      %v961 = vadd.s32 %v955, %v928
      %v962 = vadd.s32 %v955, %v929
      %v963 = vadd.s32 %v955, %v930
      %v964 = vadd.s32 %v955, %v931
      %v965 = vadd.s32 %v955, %v932
      %v966 = vadd.s32 %v955, %v933
      %v967 = vadd.s32 %v955, %v934
      %v968 = vadd.s32 %v955, %v935
      %v969 = vadd.s32 %v955, %v936
      %v970 = vadd.s32 %v955, %v937
      %v971 = vadd.s32 %v955, %v938
      %v972 = vadd.s32 %v955, %v939
      %v973 = vadd.s32 %v955, %v940
      %v974 = vadd.s32 %v955, %v941
      %v975 = vadd.s32 %v955, %v942
      %v976 = vadd.s32 %v955, %v943
      %v977 = vadd.s32 %v955, %v944
      %v978 = vadd.s32 %v955, %v945
      %v979 = vadd.s32 %v955, %v946
      %v980 = vadd.s32 %v955, %v947
      %v981 = vadd.s32 %v955, %v948
      %v982 = vadd.s32 %v955, %v949
      %v983 = vadd.s32 %v955, %v950
      %v984 = vadd.s32 %v955, %v951
      %v985 = vadd.s32 %v955, %v952
      %v986 = vadd.s32 %v955, %v953
      %v987 = vadd.s32 %v955, %v954
      %vm988 = vcmp.lt.s32.totalorder %v956, 1024
      %vm989 = vcmp.lt.s32.totalorder %v957, 1024
      %vm990 = vcmp.lt.s32.totalorder %v958, 1024
      %vm991 = vcmp.lt.s32.totalorder %v959, 1024
      %vm992 = vcmp.lt.s32.totalorder %v960, 1024
      %vm993 = vcmp.lt.s32.totalorder %v961, 1024
      %vm994 = vcmp.lt.s32.totalorder %v962, 1024
      %vm995 = vcmp.lt.s32.totalorder %v963, 1024
      %vm996 = vcmp.lt.s32.totalorder %v964, 1024
      %vm997 = vcmp.lt.s32.totalorder %v965, 1024
      %vm998 = vcmp.lt.s32.totalorder %v966, 1024
      %vm999 = vcmp.lt.s32.totalorder %v967, 1024
      %vm1000 = vcmp.lt.s32.totalorder %v968, 1024
      %vm1001 = vcmp.lt.s32.totalorder %v969, 1024
      %vm1002 = vcmp.lt.s32.totalorder %v970, 1024
      %vm1003 = vcmp.lt.s32.totalorder %v971, 1024
      %vm1004 = vcmp.lt.s32.totalorder %v972, 1024
      %vm1005 = vcmp.lt.s32.totalorder %v973, 1024
      %vm1006 = vcmp.lt.s32.totalorder %v974, 1024
      %vm1007 = vcmp.lt.s32.totalorder %v975, 1024
      %vm1008 = vcmp.lt.s32.totalorder %v976, 1024
      %vm1009 = vcmp.lt.s32.totalorder %v977, 1024
      %vm1010 = vcmp.lt.s32.totalorder %v978, 1024
      %vm1011 = vcmp.lt.s32.totalorder %v979, 1024
      %vm1012 = vcmp.lt.s32.totalorder %v980, 1024
      %vm1013 = vcmp.lt.s32.totalorder %v981, 1024
      %vm1014 = vcmp.lt.s32.totalorder %v982, 1024
      %vm1015 = vcmp.lt.s32.totalorder %v983, 1024
      %vm1016 = vcmp.lt.s32.totalorder %v984, 1024
      %vm1017 = vcmp.lt.s32.totalorder %v985, 1024
      %vm1018 = vcmp.lt.s32.totalorder %v986, 1024
      %vm1019 = vcmp.lt.s32.totalorder %v987, 1024
      %v1020 = vsel %vm988, %v795, 0.0
      %v1021 = vsel %vm989, %v798, 0.0
      %v1022 = vsel %vm990, %v803, 0.0
      %v1023 = vsel %vm991, %v806, 0.0
      %v1024 = vsel %vm992, %v811, 0.0
      %v1025 = vsel %vm993, %v814, 0.0
      %v1026 = vsel %vm994, %v819, 0.0
      %v1027 = vsel %vm995, %v822, 0.0
      %v1028 = vsel %vm996, %v827, 0.0
      %v1029 = vsel %vm997, %v830, 0.0
      %v1030 = vsel %vm998, %v835, 0.0
      %v1031 = vsel %vm999, %v838, 0.0
      %v1032 = vsel %vm1000, %v843, 0.0
      %v1033 = vsel %vm1001, %v846, 0.0
      %v1034 = vsel %vm1002, %v851, 0.0
      %v1035 = vsel %vm1003, %v854, 0.0
      %v1036 = vsel %vm1004, %v859, 0.0
      %v1037 = vsel %vm1005, %v862, 0.0
      %v1038 = vsel %vm1006, %v867, 0.0
      %v1039 = vsel %vm1007, %v870, 0.0
      %v1040 = vsel %vm1008, %v875, 0.0
      %v1041 = vsel %vm1009, %v878, 0.0
      %v1042 = vsel %vm1010, %v883, 0.0
      %v1043 = vsel %vm1011, %v886, 0.0
      %v1044 = vsel %vm1012, %v891, 0.0
      %v1045 = vsel %vm1013, %v894, 0.0
      %v1046 = vsel %vm1014, %v899, 0.0
      %v1047 = vsel %vm1015, %v902, 0.0
      %v1048 = vsel %vm1016, %v907, 0.0
      %v1049 = vsel %vm1017, %v910, 0.0
      %v1050 = vsel %vm1018, %v915, 0.0
      %v1051 = vsel %vm1019, %v918, 0.0
      %v1052 = vpack.c.bf16 %v1021, %v1020
      %v1053 = vpack.c.bf16 %v1023, %v1022
      %v1054 = vpack.c.bf16 %v1025, %v1024
      %v1055 = vpack.c.bf16 %v1027, %v1026
      %v1056 = vpack.c.bf16 %v1029, %v1028
      %v1057 = vpack.c.bf16 %v1031, %v1030
      %v1058 = vpack.c.bf16 %v1033, %v1032
      %v1059 = vpack.c.bf16 %v1035, %v1034
      %v1060 = vpack.c.bf16 %v1037, %v1036
      %v1061 = vpack.c.bf16 %v1039, %v1038
      %v1062 = vpack.c.bf16 %v1041, %v1040
      %v1063 = vpack.c.bf16 %v1043, %v1042
      %v1064 = vpack.c.bf16 %v1045, %v1044
      %v1065 = vpack.c.bf16 %v1047, %v1046
      %v1066 = vpack.c.bf16 %v1049, %v1048
      %v1067 = vpack.c.bf16 %v1051, %v1050
      %v1084 = vunpack.c.l.b16 %v1052
      %v1085 = vunpack.c.h.b16 %v1052
      %v1086 = vunpack.c.l.b16 %v1053
      %v1087 = vunpack.c.h.b16 %v1053
      %v1088 = vunpack.c.l.b16 %v1054
      %v1089 = vunpack.c.h.b16 %v1054
      %v1090 = vunpack.c.l.b16 %v1055
      %v1091 = vunpack.c.h.b16 %v1055
      %v1092 = vunpack.c.l.b16 %v1056
      %v1093 = vunpack.c.h.b16 %v1056
      %v1094 = vunpack.c.l.b16 %v1057
      %v1095 = vunpack.c.h.b16 %v1057
      %v1096 = vunpack.c.l.b16 %v1058
      %v1097 = vunpack.c.h.b16 %v1058
      %v1098 = vunpack.c.l.b16 %v1059
      %v1099 = vunpack.c.h.b16 %v1059
      %v1100 = vunpack.c.l.b16 %v1060
      %v1101 = vunpack.c.h.b16 %v1060
      %v1102 = vunpack.c.l.b16 %v1061
      %v1103 = vunpack.c.h.b16 %v1061
      %v1104 = vunpack.c.l.b16 %v1062
      %v1105 = vunpack.c.h.b16 %v1062
      %v1106 = vunpack.c.l.b16 %v1063
      %v1107 = vunpack.c.h.b16 %v1063
      %v1108 = vunpack.c.l.b16 %v1064
      %v1109 = vunpack.c.h.b16 %v1064
      %v1110 = vunpack.c.l.b16 %v1065
      %v1111 = vunpack.c.h.b16 %v1065
      %v1112 = vunpack.c.l.b16 %v1066
      %v1113 = vunpack.c.h.b16 %v1066
      %v1114 = vunpack.c.l.b16 %v1067
      %v1115 = vunpack.c.h.b16 %v1067
      %v1116 = vpack.c.b16 %v1084, %v1084
      %v1117 = vpack.c.b16 %v1085, %v1085
      %v1118 = vpack.c.b16 %v1086, %v1086
      %v1119 = vpack.c.b16 %v1087, %v1087
      %v1120 = vpack.c.b16 %v1088, %v1088
      %v1121 = vpack.c.b16 %v1089, %v1089
      %v1122 = vpack.c.b16 %v1090, %v1090
      %v1123 = vpack.c.b16 %v1091, %v1091
      %v1124 = vpack.c.b16 %v1092, %v1092
      %v1125 = vpack.c.b16 %v1093, %v1093
      %v1126 = vpack.c.b16 %v1094, %v1094
      %v1127 = vpack.c.b16 %v1095, %v1095
      %v1128 = vpack.c.b16 %v1096, %v1096
      %v1129 = vpack.c.b16 %v1097, %v1097
      %v1130 = vpack.c.b16 %v1098, %v1098
      %v1131 = vpack.c.b16 %v1099, %v1099
      %v1132 = vpack.c.b16 %v1100, %v1100
      %v1133 = vpack.c.b16 %v1101, %v1101
      %v1134 = vpack.c.b16 %v1102, %v1102
      %v1135 = vpack.c.b16 %v1103, %v1103
      %v1136 = vpack.c.b16 %v1104, %v1104
      %v1137 = vpack.c.b16 %v1105, %v1105
      %v1138 = vpack.c.b16 %v1106, %v1106
      %v1139 = vpack.c.b16 %v1107, %v1107
      %v1140 = vpack.c.b16 %v1108, %v1108
      %v1141 = vpack.c.b16 %v1109, %v1109
      %v1142 = vpack.c.b16 %v1110, %v1110
      %v1143 = vpack.c.b16 %v1111, %v1111
      %v1144 = vpack.c.b16 %v1112, %v1112
      %v1145 = vpack.c.b16 %v1113, %v1113
      %v1146 = vpack.c.b16 %v1114, %v1114
      %v1147 = vpack.c.b16 %v1115, %v1115
      %1180 = vst [vmem:[%s278] sm:$0xf] %v1116
      %1181 = vst [vmem:[%s278 + $0x4] sm:$0xf] %v1117
      %1182 = vst [vmem:[%s278 + $0x8] sm:$0xf] %v1118
      %1183 = vst [vmem:[%s278 + $0xc] sm:$0xf] %v1119
      %1184 = vst [vmem:[%s278 + $0x10] sm:$0xf] %v1120
      %1185 = vst [vmem:[%s278 + $0x14] sm:$0xf] %v1121
      %1186 = vst [vmem:[%s278 + $0x18] sm:$0xf] %v1122
      %1187 = vst [vmem:[%s278 + $0x1c] sm:$0xf] %v1123
      %1188 = vst [vmem:[%s278 + $0x20] sm:$0xf] %v1124
      %1189 = vst [vmem:[%s278 + $0x24] sm:$0xf] %v1125
      %1190 = vst [vmem:[%s278 + $0x28] sm:$0xf] %v1126
      %1191 = vst [vmem:[%s278 + $0x2c] sm:$0xf] %v1127
      %1192 = vst [vmem:[%s278 + $0x30] sm:$0xf] %v1128
      %1193 = vst [vmem:[%s278 + $0x34] sm:$0xf] %v1129
      %1194 = vst [vmem:[%s278 + $0x38] sm:$0xf] %v1130
      %1195 = vst [vmem:[%s278 + $0x3c] sm:$0xf] %v1131
      %1196 = vst [vmem:[%s278 + $0x40] sm:$0xf] %v1132
      %1197 = vst [vmem:[%s278 + $0x44] sm:$0xf] %v1133
      %1198 = vst [vmem:[%s278 + $0x48] sm:$0xf] %v1134
      %1199 = vst [vmem:[%s278 + $0x4c] sm:$0xf] %v1135
      %1200 = vst [vmem:[%s278 + $0x50] sm:$0xf] %v1136
      %1201 = vst [vmem:[%s278 + $0x54] sm:$0xf] %v1137
      %1202 = vst [vmem:[%s278 + $0x58] sm:$0xf] %v1138
      %1203 = vst [vmem:[%s278 + $0x5c] sm:$0xf] %v1139
      %1204 = vst [vmem:[%s278 + $0x60] sm:$0xf] %v1140
      %1205 = vst [vmem:[%s278 + $0x64] sm:$0xf] %v1141
      %1206 = vst [vmem:[%s278 + $0x68] sm:$0xf] %v1142
      %1207 = vst [vmem:[%s278 + $0x6c] sm:$0xf] %v1143
      %1208 = vst [vmem:[%s278 + $0x70] sm:$0xf] %v1144
      %1209 = vst [vmem:[%s278 + $0x74] sm:$0xf] %v1145
      %1210 = vst [vmem:[%s278 + $0x78] sm:$0xf] %v1146
      %1211 = vst [vmem:[%s278 + $0x7c] sm:$0xf] %v1147
      %v1212 = vadd.f32 %v1020, %v1021
      %v1213 = vadd.f32 %v1212, %v1022
      %v1214 = vadd.f32 %v1213, %v1023
      %v1215 = vadd.f32 %v1214, %v1024
      %v1216 = vadd.f32 %v1215, %v1025
      %v1217 = vadd.f32 %v1216, %v1026
      %v1218 = vadd.f32 %v1217, %v1027
      %v1219 = vadd.f32 %v1218, %v1028
      %v1220 = vadd.f32 %v1219, %v1029
      %v1221 = vadd.f32 %v1220, %v1030
      %v1222 = vadd.f32 %v1221, %v1031
      %v1223 = vadd.f32 %v1222, %v1032
      %v1224 = vadd.f32 %v1223, %v1033
      %v1225 = vadd.f32 %v1224, %v1034
      %v1226 = vadd.f32 %v1225, %v1035
      %v1227 = vadd.f32 %v1226, %v1036
      %v1228 = vadd.f32 %v1227, %v1037
      %v1229 = vadd.f32 %v1228, %v1038
      %v1230 = vadd.f32 %v1229, %v1039
      %v1231 = vadd.f32 %v1230, %v1040
      %v1232 = vadd.f32 %v1231, %v1041
      %v1233 = vadd.f32 %v1232, %v1042
      %v1234 = vadd.f32 %v1233, %v1043
      %v1235 = vadd.f32 %v1234, %v1044
      %v1236 = vadd.f32 %v1235, %v1045
      %v1237 = vadd.f32 %v1236, %v1046
      %v1238 = vadd.f32 %v1237, %v1047
      %v1239 = vadd.f32 %v1238, %v1048
      %v1240 = vadd.f32 %v1239, %v1049
      %v1241 = vadd.f32 %v1240, %v1050
      %v1242 = vadd.f32 %v1241, %v1051
      %v1243 = vrot.slane %v1242, 4
      %v1244 = vadd.f32 %v1242, %v1243
      %v1245 = vrot.slane %v1244, 2
      %v1246 = vadd.f32 %v1244, %v1245
      %v1247 = vrot.slane %v1246, 1
      %v1248 = vadd.f32 %v1246, %v1247
      %1249 = vst [vmem:[%s286] sm:$0x1] %v1248
      %v1250 = vmul.f32 %v1020, %v1020
      %v1251 = vmul.f32 %v1021, %v1021
      %v1252 = vmul.f32 %v1022, %v1022
      %v1253 = vmul.f32 %v1023, %v1023
      %v1254 = vmul.f32 %v1024, %v1024
      %v1255 = vmul.f32 %v1025, %v1025
      %v1256 = vmul.f32 %v1026, %v1026
      %v1257 = vmul.f32 %v1027, %v1027
      %v1258 = vmul.f32 %v1028, %v1028
      %v1259 = vmul.f32 %v1029, %v1029
      %v1260 = vmul.f32 %v1030, %v1030
      %v1261 = vmul.f32 %v1031, %v1031
      %v1262 = vmul.f32 %v1032, %v1032
      %v1263 = vmul.f32 %v1033, %v1033
      %v1264 = vmul.f32 %v1034, %v1034
      %v1265 = vmul.f32 %v1035, %v1035
      %v1266 = vmul.f32 %v1036, %v1036
      %v1267 = vmul.f32 %v1037, %v1037
      %v1268 = vmul.f32 %v1038, %v1038
      %v1269 = vmul.f32 %v1039, %v1039
      %v1270 = vmul.f32 %v1040, %v1040
      %v1271 = vmul.f32 %v1041, %v1041
      %v1272 = vmul.f32 %v1042, %v1042
      %v1273 = vmul.f32 %v1043, %v1043
      %v1274 = vmul.f32 %v1044, %v1044
      %v1275 = vmul.f32 %v1045, %v1045
      %v1276 = vmul.f32 %v1046, %v1046
      %v1277 = vmul.f32 %v1047, %v1047
      %v1278 = vmul.f32 %v1048, %v1048
      %v1279 = vmul.f32 %v1049, %v1049
      %v1280 = vmul.f32 %v1050, %v1050
      %v1281 = vmul.f32 %v1051, %v1051
      %v1282 = vadd.f32 %v1250, %v1251
      %v1283 = vadd.f32 %v1282, %v1252
      %v1284 = vadd.f32 %v1283, %v1253
      %v1285 = vadd.f32 %v1284, %v1254
      %v1286 = vadd.f32 %v1285, %v1255
      %v1287 = vadd.f32 %v1286, %v1256
      %v1288 = vadd.f32 %v1287, %v1257
      %v1289 = vadd.f32 %v1288, %v1258
      %v1290 = vadd.f32 %v1289, %v1259
      %v1291 = vadd.f32 %v1290, %v1260
      %v1292 = vadd.f32 %v1291, %v1261
      %v1293 = vadd.f32 %v1292, %v1262
      %v1294 = vadd.f32 %v1293, %v1263
      %v1295 = vadd.f32 %v1294, %v1264
      %v1296 = vadd.f32 %v1295, %v1265
      %v1297 = vadd.f32 %v1296, %v1266
      %v1298 = vadd.f32 %v1297, %v1267
      %v1299 = vadd.f32 %v1298, %v1268
      %v1300 = vadd.f32 %v1299, %v1269
      %v1301 = vadd.f32 %v1300, %v1270
      %v1302 = vadd.f32 %v1301, %v1271
      %v1303 = vadd.f32 %v1302, %v1272
      %v1304 = vadd.f32 %v1303, %v1273
      %v1305 = vadd.f32 %v1304, %v1274
      %v1306 = vadd.f32 %v1305, %v1275
      %v1307 = vadd.f32 %v1306, %v1276
      %v1308 = vadd.f32 %v1307, %v1277
      %v1309 = vadd.f32 %v1308, %v1278
      %v1310 = vadd.f32 %v1309, %v1279
      %v1311 = vadd.f32 %v1310, %v1280
      %v1312 = vadd.f32 %v1311, %v1281
      %v1313 = vrot.slane %v1312, 4
      %v1314 = vadd.f32 %v1312, %v1313
      %v1315 = vrot.slane %v1314, 2
      %v1316 = vadd.f32 %v1314, %v1315
      %v1317 = vrot.slane %v1316, 1
      %v1318 = vadd.f32 %v1316, %v1317
      %1319 = vst [vmem:[%s286 + $0x1] sm:$0x1] %v1318
      %s1320 = smul.u32 32, %s22
      %p1321 = scmp.lt.s32.totalorder %s1320, 127
      %s1322 = scalar_select %p1321, %s1320, 127
      %p1323 = scmp.lt.s32.totalorder %s21, 0
      %s1324 = scalar_select %p1323, %s21, 0
      %s1325 = sadd.s32 %s1324, %s1322
      %s1326 = smul.addr %s1325, 4
      %s1327 = scalar_lea.vmem %s4, %s1326
      %p1328 = scmp.lt.s32.totalorder %s22, 3
      %s1329 = scalar_select %p1328, %s22, 3
      %p1330 = scmp.lt.s32.totalorder %s21, 0
      %s1331 = scalar_select %p1330, %s21, 0
      %s1332 = sadd.s32 %s1331, %s1329
      %s1333 = smul.addr %s1332, 8
      %s1334 = scalar_lea.vmem %s5, %s1333
      // Predicated region
      $region37: #{down_block_forward.5} parent=35 // pred_check
        %p1335 = pneg %p143
      $region38: #{down_block_forward.5} parent=35 // pred_check_branch
        %1337 = sbr.rel (%p1335) target = $region40
      $region39: #{down_block_forward.5} parent=35 // pred_region
        %s1338 = smul.u32 32, %s22
      $region40: #{down_block_forward.5} parent=35 // pred_fallthru
        _
      // Predicated region
      $region41: #{down_block_forward.5} parent=35 // pred_check
        %p1339 = pneg %p171
      $region42: #{down_block_forward.5} parent=35 // pred_check_branch
        %1341 = sbr.rel (%p1339) target = $region44
      $region43: #{down_block_forward.5} parent=35 // pred_region
        _
      $region44: #{down_block_forward.5} parent=35 // pred_fallthru
        _
    $region36: #{down_block_forward.5} parent=5 // pred_fallthru
      _
    %p1342 = scmp.le.s32.totalorder 2, %s12
    // Predicated region
    $region45: #{down_block_forward.5} parent=5 // pred_check
      %p1343 = pneg %p1342
    $region46: #{down_block_forward.5} parent=5 // pred_check_branch
      %1345 = sbr.rel (%p1343) target = $region48
    $region47: #{down_block_forward.5} parent=5 // pred_region
      %s1346 = ssub.s32 %s12, 2
      // Predicated region
      $region49: #{down_block_forward.5} parent=47 // pred_check
        %p1347 = pneg %p149
      $region50: #{down_block_forward.5} parent=47 // pred_check_branch
        %1349 = sbr.rel (%p1347) target = $region52
      $region51: #{down_block_forward.5} parent=47 // pred_region
        %s1350 = smul.u32 32, %s24
        %p1351 = scmp.lt.s32.totalorder %s1350, 127
        %s1352 = scalar_select %p1351, %s1350, 127
        %p1353 = scmp.lt.s32.totalorder %s23, 0
        %s1354 = scalar_select %p1353, %s23, 0
        %s1355 = sadd.s32 %s1354, %s1352
        %s1356 = smul.addr %s1355, 4
        %s1357 = scalar_lea.vmem %s4, %s1356
      $region52: #{down_block_forward.5} parent=47 // pred_fallthru
        _
      // Predicated region
      $region53: #{down_block_forward.5} parent=47 // pred_check
        %p1358 = pneg %p177
      $region54: #{down_block_forward.5} parent=47 // pred_check_branch
        %1360 = sbr.rel (%p1358) target = $region56
      $region55: #{down_block_forward.5} parent=47 // pred_region
        %p1361 = scmp.lt.s32.totalorder %s24, 3
        %s1362 = scalar_select %p1361, %s24, 3
        %p1363 = scmp.lt.s32.totalorder %s23, 0
        %s1364 = scalar_select %p1363, %s23, 0
        %s1365 = sadd.s32 %s1364, %s1362
        %s1366 = smul.addr %s1365, 8
        %s1367 = scalar_lea.vmem %s5, %s1366
      $region56: #{down_block_forward.5} parent=47 // pred_fallthru
        _
    $region48: #{down_block_forward.5} parent=5 // pred_fallthru
      _
  $region6: #{down_block_forward.5} parent=0 // loop_footer
    %s16 = sadd.s32 1, %s12
  $region7: #{down_block_forward.5} parent=0 // loop_footer_branch
    %11 = sbr.rel target = $region3
  $region8: #{down_block_forward.5} parent=0 // loop_exit
    _

</llo_original>
